<compile_context>
chip_gen: v7x
topology: tpu7x:2x2x1
jax: 0.10.0
libtpu: 0.0.40
codegen_flags: <defaults>
</compile_context>

<pallas_src>
import functools

import jax
import jax.numpy as jnp
from jax import lax
from jax.experimental import pallas as pl
from jax.experimental.pallas import tpu as pltpu

# torchvision vgg16 "features" configuration
VGG16_CFG = [64, 64, "M", 128, 128, "M", 256, 256, 256, "M",
             512, 512, 512, "M", 512, 512, 512, "M"]

VMEM_LIMIT = 48 * 1024 * 1024    # <= 64 MiB physical VMEM on v7x, fine on v5e/v6e
ACC_BUDGET = 4 * 1024 * 1024     # target bytes for the per-step f32 accumulator


def _pick_row_tile(h, w, tn):
    """Output rows computed per grid step (always divides h)."""
    if h * w * tn * 4 <= ACC_BUDGET:
        return h
    for th in range(h - 1, 0, -1):
        if h % th == 0 and (th * w) % 8 == 0 and th * w * tn * 4 <= ACC_BUDGET:
            return th
    return h


# ---------------------------------------------------------------------------
# Conv 3x3 (pad 1, stride 1) + bias + ReLU
# ---------------------------------------------------------------------------
def _conv3x3_relu_kernel(x_ref, w_ref, b_ref, o_ref, pad_ref, *, h, w, th,
                         n_row_tiles):
    # x_ref:   (1, H*W, Cin)  bf16 dense image (resident across cout/row tiles)
    # w_ref:   (9, Cin, TN)   bf16
    # b_ref:   (1, TN)        f32
    # o_ref:   (1, TH*W, TN)  bf16 dense output rows of this tile
    # pad_ref: ((H+4)*W, Cin) bf16 scratch: image with 2 zero rows top & bottom
    cin = x_ref.shape[-1]
    m = th * w

    # (Re)build the row-padded copy of the image once per (n, cout-tile).  The
    # row-tile axis is innermost and "arbitrary", so every core starts it at 0.
    @pl.when(pl.program_id(2) == 0)
    def _():
        zeros = jnp.zeros((2 * w, cin), dtype=pad_ref.dtype)
        pad_ref[pl.ds(0, 2 * w), :] = zeros                 # rows -2, -1
        pad_ref[pl.ds((h + 2) * w, 2 * w), :] = zeros       # rows H, H+1
        pad_ref[pl.ds(2 * w, h * w), :] = x_ref[0]          # valid rows 0..H-1

    p0 = 0 if n_row_tiles == 1 else pl.program_id(2) * m    # flat output offset

    # Column wrap masks for the flat-row layout: tap kx=0 is invalid at output
    # column 0, tap kx=2 at output column W-1 (they would read the neighbouring
    # row).  Hoisted out of the tap loop.
    col = lax.broadcasted_iota(jnp.int32, (m, 1), 0) % w
    keep_l = col != 0
    keep_r = col != (w - 1)

    acc = None
    for ky in range(3):
        for kx in range(3):
            # tap (ky, kx) of output flat pixel p reads pad_ref[p + (ky+1)*W + kx-1]
            start = p0 + (ky + 1) * w + (kx - 1)
            lhs = pad_ref[pl.ds(start, m), :]                # (M, Cin) bf16
            if kx == 0:
                lhs = jnp.where(keep_l, lhs, 0)
            elif kx == 2:
                lhs = jnp.where(keep_r, lhs, 0)
            part = jnp.dot(lhs, w_ref[ky * 3 + kx],
                           preferred_element_type=jnp.float32)  # MXU, f32 acc
            acc = part if acc is None else acc + part
    out = jnp.maximum(acc + b_ref[...], 0.0)                 # bias + ReLU in f32
    o_ref[0] = out.astype(o_ref.dtype)


def conv3x3_relu(x, w, b):
    """x: (N,H,W,Cin) bf16, w: (3,3,Cin,Cout) HWIO, b: (Cout,). -> (N,H,W,Cout)."""
    N, H, W, Cin = x.shape
    Cout = w.shape[-1]
    TN = min(Cout, 256)                   # Cout tile (multiple of 128 or == Cout)
    TH = _pick_row_tile(H, W, TN)
    n_row_tiles = H // TH

    xf = x.reshape(N, H * W, Cin)                         # free metadata reshape
    w9 = w.reshape(9, Cin, Cout).astype(x.dtype)          # bf16 weights for MXU
    b2 = b.reshape(1, Cout).astype(jnp.float32)

    kernel = functools.partial(_conv3x3_relu_kernel, h=H, w=W, th=TH,
                               n_row_tiles=n_row_tiles)
    out = pl.pallas_call(
        kernel,
        out_shape=jax.ShapeDtypeStruct((N, H * W, Cout), x.dtype),
        grid_spec=pltpu.PrefetchScalarGridSpec(
            num_scalar_prefetch=0,
            grid=(N, Cout // TN, n_row_tiles),            # (n, cout tile j, row tile i)
            in_specs=[
                # dense image: block index depends only on n -> one DMA per
                # batch element, resident across all (j, i) steps.
                pl.BlockSpec((1, H * W, Cin), lambda n, j, i: (n, 0, 0)),
                # weights: resident across the (fast) row-tile axis.
                pl.BlockSpec((9, Cin, TN), lambda n, j, i: (0, 0, j)),
                pl.BlockSpec((1, TN), lambda n, j, i: (0, j)),
            ],
            out_specs=pl.BlockSpec((1, TH * W, TN), lambda n, j, i: (n, i, j)),
            scratch_shapes=[pltpu.VMEM(((H + 4) * W, Cin), x.dtype)],
        ),
        compiler_params=pltpu.CompilerParams(
            dimension_semantics=("parallel", "parallel", "arbitrary"),
            vmem_limit_bytes=VMEM_LIMIT,
        ),
    )(xf, w9, b2)
    return out.reshape(N, H, W, Cout)                     # free metadata reshape


# ---------------------------------------------------------------------------
# MaxPool2d(kernel=2, stride=2)
# ---------------------------------------------------------------------------
def _maxpool2x2_kernel(x_ref, o_ref):
    # x_ref: (RB, 2, Wo, 2C)   o_ref: (RB, Wo, C)
    c = o_ref.shape[-1]
    m = jnp.maximum(x_ref[:, 0], x_ref[:, 1])               # pool over the H pair
    o_ref[...] = jnp.maximum(m[:, :, :c], m[:, :, c:])      # pool over the W pair


def maxpool2x2(x):
    """x: (N,H,W,C) with even H, W.  Returns (N, H//2, W//2, C)."""
    N, H, W, C = x.shape
    assert H % 2 == 0 and W % 2 == 0
    Ho, Wo = H // 2, W // 2
    NR = N * Ho
    # Free row-major metadata reshape: size-2 axis = H pair, lane halves = W pair.
    x4 = x.reshape(NR, 2, Wo, 2 * C)
    row_bytes = 4 * Wo * C * x.dtype.itemsize
    RB = max(1, min(NR, (2 * 1024 * 1024) // max(row_bytes, 1)))
    out = pl.pallas_call(
        _maxpool2x2_kernel,
        out_shape=jax.ShapeDtypeStruct((NR, Wo, C), x.dtype),
        grid_spec=pltpu.PrefetchScalarGridSpec(
            num_scalar_prefetch=0,
            grid=(pl.cdiv(NR, RB),),
            in_specs=[pl.BlockSpec((RB, 2, Wo, 2 * C), lambda i: (i, 0, 0, 0))],
            out_specs=pl.BlockSpec((RB, Wo, C), lambda i: (i, 0, 0)),
        ),
        compiler_params=pltpu.CompilerParams(
            dimension_semantics=("parallel",),
            vmem_limit_bytes=VMEM_LIMIT,
        ),
    )(x4)
    return out.reshape(N, Ho, Wo, C)


# ---------------------------------------------------------------------------
# VGG16 "features" forward pass
# ---------------------------------------------------------------------------
def init_params(key):
    params = []
    cin = 3
    for v in VGG16_CFG:
        if v == "M":
            continue
        key, kw, kb = jax.random.split(key, 3)
        fan_in = 9 * cin
        w = jax.random.normal(kw, (3, 3, cin, v), jnp.float32) * jnp.sqrt(2.0 / fan_in)
        b = 0.01 * jax.random.normal(kb, (v,), jnp.float32)
        params.append((w, b))
        cin = v
    return params


def vgg16_features(x_nchw, params):
    # NCHW -> NHWC; bf16 activations, f32 accumulation inside the kernels.
    x = jnp.transpose(x_nchw, (0, 2, 3, 1)).astype(jnp.bfloat16)
    pi = 0
    for v in VGG16_CFG:
        if v == "M":
            x = maxpool2x2(x)
        else:
            w, b = params[pi]
            pi += 1
            x = conv3x3_relu(x, w, b)
    # Back to NCHW / f32; the torch module returns a single-element list [x].
    return [jnp.transpose(x, (0, 3, 1, 2)).astype(jnp.float32)]


# ---------------------------------------------------------------------------
# References for unit checks (glue / verification only)
# ---------------------------------------------------------------------------
def _conv_reference(x, w, b):
    y = lax.conv_general_dilated(
        x, w.astype(x.dtype), window_strides=(1, 1), padding="SAME",
        dimension_numbers=("NHWC", "HWIO", "NHWC"),
        preferred_element_type=jnp.float32)
    return jnp.maximum(y + b.reshape(1, 1, 1, -1), 0.0).astype(x.dtype)


def _pool_reference(x):
    N, H, W, C = x.shape
    return x.reshape(N, H // 2, 2, W // 2, 2, C).max(axis=(2, 4))


if __name__ == "__main__":
    key = jax.random.PRNGKey(0)
    kx, kp, k1, k2, k3, k4 = jax.random.split(key, 6)

    # --- unit checks: conv kernel vs lax.conv (same bf16 inputs), pool vs jnp ---
    xa = jax.random.normal(k1, (2, 16, 16, 3), jnp.float32).astype(jnp.bfloat16)
    wa = jax.random.normal(k2, (3, 3, 3, 64), jnp.float32) * 0.05
    ba = jnp.linspace(-0.1, 0.1, 64, dtype=jnp.float32)
    assert jnp.allclose(conv3x3_relu(xa, wa, ba).astype(jnp.float32),
                        _conv_reference(xa, wa, ba).astype(jnp.float32),
                        rtol=5e-2, atol=5e-2), "conv kernel mismatch (Cin=3)"

    xb = jax.random.normal(k3, (2, 8, 8, 256), jnp.float32).astype(jnp.bfloat16)
    wb = jax.random.normal(k4, (3, 3, 256, 512), jnp.float32) * 0.05
    bb = jnp.linspace(-0.1, 0.1, 512, dtype=jnp.float32)
    assert jnp.allclose(conv3x3_relu(xb, wb, bb).astype(jnp.float32),
                        _conv_reference(xb, wb, bb).astype(jnp.float32),
                        rtol=5e-2, atol=5e-2), "conv kernel mismatch (Cout tiling)"

    xp = jax.random.normal(k1, (2, 16, 16, 64), jnp.float32).astype(jnp.bfloat16)
    assert jnp.array_equal(maxpool2x2(xp), _pool_reference(xp)), "maxpool mismatch"

    # --- full VGG16 features forward: RGB 32x32 -> 1x1 spatial after 5 pools ---
    x = jax.random.normal(kx, (2, 3, 32, 32), jnp.float32)
    params = init_params(kp)

    fwd = jax.jit(vgg16_features)
    out = fwd(x, params)
    jax.block_until_ready(out[0])

    assert out[0].shape == (2, 512, 1, 1), out[0].shape
    assert out[0].dtype == jnp.float32
    print("KERNEL_OK")
</pallas_src>

<mosaic_0001>
module attributes {stable_mosaic.version = 11 : i64} {
  func.func @_conv3x3_relu_kernel(%arg0: i32, %arg1: i32, %arg2: i32, %arg3: memref<1x256x3xbf16, #tpu.memory_space<vmem>>, %arg4: memref<9x3x64xbf16, #tpu.memory_space<vmem>>, %arg5: memref<1x64xf32, #tpu.memory_space<vmem>>, %arg6: memref<1x256x64xbf16, #tpu.memory_space<vmem>>, %arg7: memref<320x3xbf16, #tpu.memory_space<vmem>>) attributes {dimension_semantics = [#tpu.dimension_semantics<parallel>, #tpu.dimension_semantics<parallel>, #tpu.dimension_semantics<arbitrary>], iteration_bounds = array<i64: 2, 1, 1>, scalar_prefetch = 0 : i64, scratch_operands = 1 : i64, tpu.core_type = #tpu.core_type<tc>, window_params = [{transform_indices = @transform_0, window_bounds = array<i64: 1, 256, 3>}, {transform_indices = @transform_1, window_bounds = array<i64: 9, 3, 64>}, {transform_indices = @transform_2, window_bounds = array<i64: 1, 64>}, {transform_indices = @transform_3, window_bounds = array<i64: 1, 256, 64>}]} {
    %c0_i32 = arith.constant 0 : i32
    %0 = arith.cmpi eq, %arg2, %c0_i32 : i32
    %1 = arith.extui %0 : i1 to i32
    %c0_i32_0 = arith.constant 0 : i32
    %2 = arith.cmpi ne, %1, %c0_i32_0 : i32
    scf.if %2 {
      %cst_53 = arith.constant 0.000000e+00 : bf16
      %107 = vector.broadcast %cst_53 : bf16 to vector<32x3xbf16>
      %c0_54 = arith.constant 0 : index
      %c0_55 = arith.constant 0 : index
      %108 = vector.load %arg7[%c0_54, %c0_55] : memref<320x3xbf16, #tpu.memory_space<vmem>>, vector<32x3xbf16>
      tpu.vector_store %arg7[%c0_54, %c0_55], %107 {strides = array<i32>} : memref<320x3xbf16, #tpu.memory_space<vmem>>, vector<32x3xbf16>,
      %c288 = arith.constant 288 : index
      %c0_56 = arith.constant 0 : index
      %109 = vector.load %arg7[%c288, %c0_56] : memref<320x3xbf16, #tpu.memory_space<vmem>>, vector<32x3xbf16>
      tpu.vector_store %arg7[%c288, %c0_56], %107 {strides = array<i32>} : memref<320x3xbf16, #tpu.memory_space<vmem>>, vector<32x3xbf16>,
      %c0_57 = arith.constant 0 : index
      %c0_58 = arith.constant 0 : index
      %c0_59 = arith.constant 0 : index
      %110 = vector.load %arg3[%c0_57, %c0_58, %c0_59] : memref<1x256x3xbf16, #tpu.memory_space<vmem>>, vector<1x256x3xbf16>
      %111 = vector.shape_cast %110 : vector<1x256x3xbf16> to vector<256x3xbf16>
      %c32_60 = arith.constant 32 : index
      %c0_61 = arith.constant 0 : index
      %112 = vector.load %arg7[%c32_60, %c0_61] : memref<320x3xbf16, #tpu.memory_space<vmem>>, vector<256x3xbf16>
      tpu.vector_store %arg7[%c32_60, %c0_61], %111 {strides = array<i32>} : memref<320x3xbf16, #tpu.memory_space<vmem>>, vector<256x3xbf16>,
    } else {
    }
    %3 = tpu.iota {dimensions = array<i32: 0>} : vector<256x1xi32>
    %c16_i32 = arith.constant 16 : i32
    %c0_i32_1 = arith.constant 0 : i32
    %4 = arith.cmpi eq, %c16_i32, %c0_i32_1 : i32
    %c1_i32 = arith.constant 1 : i32
    %5 = arith.select %4, %c1_i32, %c16_i32 : i32
    %6 = vector.broadcast %5 : i32 to vector<256x1xi32>
    %7 = arith.remsi %3, %6 : vector<256x1xi32>
    %c0_i32_2 = arith.constant 0 : i32
    %8 = vector.broadcast %c0_i32_2 : i32 to vector<256x1xi32>
    %9 = arith.cmpi ne, %7, %8 : vector<256x1xi32>
    %c0_i32_3 = arith.constant 0 : i32
    %10 = vector.broadcast %c0_i32_3 : i32 to vector<256x1xi32>
    %11 = arith.cmpi slt, %7, %10 : vector<256x1xi32>
    %c0_i32_4 = arith.constant 0 : i32
    %12 = arith.cmpi slt, %5, %c0_i32_4 : i32
    %13 = vector.broadcast %12 : i1 to vector<256x1xi1>
    %14 = vector.broadcast %13 : vector<256x1xi1> to vector<256x1xi1>
    %15 = arith.xori %11, %14 : vector<256x1xi1>
    %16 = arith.andi %15, %9 : vector<256x1xi1>
    %17 = vector.broadcast %5 : i32 to vector<256x1xi32>
    %18 = arith.addi %7, %17 : vector<256x1xi32>
    %19 = arith.select %16, %18, %7 : vector<256x1xi1>, vector<256x1xi32>
    %c0_i32_5 = arith.constant 0 : i32
    %20 = vector.broadcast %c0_i32_5 : i32 to vector<256x1xi32>
    %21 = arith.cmpi ne, %19, %20 : vector<256x1xi32>
    %c15_i32 = arith.constant 15 : i32
    %22 = vector.broadcast %c15_i32 : i32 to vector<256x1xi32>
    %23 = arith.cmpi ne, %19, %22 : vector<256x1xi32>
    %c15 = arith.constant 15 : index
    %c0 = arith.constant 0 : index
    %24 = vector.load %arg7[%c15, %c0] : memref<320x3xbf16, #tpu.memory_space<vmem>>, vector<256x3xbf16>
    %c0_i32_6 = arith.constant 0 : i32
    %25 = arith.sitofp %c0_i32_6 : i32 to bf16
    %26 = vector.shape_cast %21 : vector<256x1xi1> to vector<256x1xi1>
    %27 = vector.broadcast %26 : vector<256x1xi1> to vector<256x3xi1>
    %28 = vector.broadcast %25 : bf16 to vector<256x3xbf16>
    %29 = arith.select %27, %24, %28 : vector<256x3xi1>, vector<256x3xbf16>
    %c0_7 = arith.constant 0 : index
    %c0_8 = arith.constant 0 : index
    %c0_9 = arith.constant 0 : index
    %30 = vector.load %arg4[%c0_7, %c0_8, %c0_9] : memref<9x3x64xbf16, #tpu.memory_space<vmem>>, vector<1x3x64xbf16>
    %31 = vector.shape_cast %30 : vector<1x3x64xbf16> to vector<3x64xbf16>
    %cst = arith.constant dense<0.000000e+00> : vector<256x64xf32>
    %32 = tpu.matmul %29, %31, %cst {dimension_numbers = #tpu.dot_dimension_numbers<[1], [0], [0], [1], [0, 0, 1, 1], [], []>} : vector<256x3xbf16>, vector<3x64xbf16>, vector<256x64xf32> -> vector<256x64xf32>
    %c16 = arith.constant 16 : index
    %c0_10 = arith.constant 0 : index
    %33 = vector.load %arg7[%c16, %c0_10] : memref<320x3xbf16, #tpu.memory_space<vmem>>, vector<256x3xbf16>
    %c1 = arith.constant 1 : index
    %c0_11 = arith.constant 0 : index
    %c0_12 = arith.constant 0 : index
    %34 = vector.load %arg4[%c1, %c0_11, %c0_12] : memref<9x3x64xbf16, #tpu.memory_space<vmem>>, vector<1x3x64xbf16>
    %35 = vector.shape_cast %34 : vector<1x3x64xbf16> to vector<3x64xbf16>
    %cst_13 = arith.constant dense<0.000000e+00> : vector<256x64xf32>
    %36 = tpu.matmul %33, %35, %cst_13 {dimension_numbers = #tpu.dot_dimension_numbers<[1], [0], [0], [1], [0, 0, 1, 1], [], []>} : vector<256x3xbf16>, vector<3x64xbf16>, vector<256x64xf32> -> vector<256x64xf32>
    %37 = arith.addf %32, %36 : vector<256x64xf32>
    %c17 = arith.constant 17 : index
    %c0_14 = arith.constant 0 : index
    %38 = vector.load %arg7[%c17, %c0_14] : memref<320x3xbf16, #tpu.memory_space<vmem>>, vector<256x3xbf16>
    %c0_i32_15 = arith.constant 0 : i32
    %39 = arith.sitofp %c0_i32_15 : i32 to bf16
    %40 = vector.shape_cast %23 : vector<256x1xi1> to vector<256x1xi1>
    %41 = vector.broadcast %40 : vector<256x1xi1> to vector<256x3xi1>
    %42 = vector.broadcast %39 : bf16 to vector<256x3xbf16>
    %43 = arith.select %41, %38, %42 : vector<256x3xi1>, vector<256x3xbf16>
    %c2 = arith.constant 2 : index
    %c0_16 = arith.constant 0 : index
    %c0_17 = arith.constant 0 : index
    %44 = vector.load %arg4[%c2, %c0_16, %c0_17] : memref<9x3x64xbf16, #tpu.memory_space<vmem>>, vector<1x3x64xbf16>
    %45 = vector.shape_cast %44 : vector<1x3x64xbf16> to vector<3x64xbf16>
    %cst_18 = arith.constant dense<0.000000e+00> : vector<256x64xf32>
    %46 = tpu.matmul %43, %45, %cst_18 {dimension_numbers = #tpu.dot_dimension_numbers<[1], [0], [0], [1], [0, 0, 1, 1], [], []>} : vector<256x3xbf16>, vector<3x64xbf16>, vector<256x64xf32> -> vector<256x64xf32>
    %47 = arith.addf %37, %46 : vector<256x64xf32>
    %c31 = arith.constant 31 : index
    %c0_19 = arith.constant 0 : index
    %48 = vector.load %arg7[%c31, %c0_19] : memref<320x3xbf16, #tpu.memory_space<vmem>>, vector<256x3xbf16>
    %c0_i32_20 = arith.constant 0 : i32
    %49 = arith.sitofp %c0_i32_20 : i32 to bf16
    %50 = vector.shape_cast %21 : vector<256x1xi1> to vector<256x1xi1>
    %51 = vector.broadcast %50 : vector<256x1xi1> to vector<256x3xi1>
    %52 = vector.broadcast %49 : bf16 to vector<256x3xbf16>
    %53 = arith.select %51, %48, %52 : vector<256x3xi1>, vector<256x3xbf16>
    %c3 = arith.constant 3 : index
    %c0_21 = arith.constant 0 : index
    %c0_22 = arith.constant 0 : index
    %54 = vector.load %arg4[%c3, %c0_21, %c0_22] : memref<9x3x64xbf16, #tpu.memory_space<vmem>>, vector<1x3x64xbf16>
    %55 = vector.shape_cast %54 : vector<1x3x64xbf16> to vector<3x64xbf16>
    %cst_23 = arith.constant dense<0.000000e+00> : vector<256x64xf32>
    %56 = tpu.matmul %53, %55, %cst_23 {dimension_numbers = #tpu.dot_dimension_numbers<[1], [0], [0], [1], [0, 0, 1, 1], [], []>} : vector<256x3xbf16>, vector<3x64xbf16>, vector<256x64xf32> -> vector<256x64xf32>
    %57 = arith.addf %47, %56 : vector<256x64xf32>
    %c32 = arith.constant 32 : index
    %c0_24 = arith.constant 0 : index
    %58 = vector.load %arg7[%c32, %c0_24] : memref<320x3xbf16, #tpu.memory_space<vmem>>, vector<256x3xbf16>
    %c4 = arith.constant 4 : index
    %c0_25 = arith.constant 0 : index
    %c0_26 = arith.constant 0 : index
    %59 = vector.load %arg4[%c4, %c0_25, %c0_26] : memref<9x3x64xbf16, #tpu.memory_space<vmem>>, vector<1x3x64xbf16>
    %60 = vector.shape_cast %59 : vector<1x3x64xbf16> to vector<3x64xbf16>
    %cst_27 = arith.constant dense<0.000000e+00> : vector<256x64xf32>
    %61 = tpu.matmul %58, %60, %cst_27 {dimension_numbers = #tpu.dot_dimension_numbers<[1], [0], [0], [1], [0, 0, 1, 1], [], []>} : vector<256x3xbf16>, vector<3x64xbf16>, vector<256x64xf32> -> vector<256x64xf32>
    %62 = arith.addf %57, %61 : vector<256x64xf32>
    %c33 = arith.constant 33 : index
    %c0_28 = arith.constant 0 : index
    %63 = vector.load %arg7[%c33, %c0_28] : memref<320x3xbf16, #tpu.memory_space<vmem>>, vector<256x3xbf16>
    %c0_i32_29 = arith.constant 0 : i32
    %64 = arith.sitofp %c0_i32_29 : i32 to bf16
    %65 = vector.shape_cast %23 : vector<256x1xi1> to vector<256x1xi1>
    %66 = vector.broadcast %65 : vector<256x1xi1> to vector<256x3xi1>
    %67 = vector.broadcast %64 : bf16 to vector<256x3xbf16>
    %68 = arith.select %66, %63, %67 : vector<256x3xi1>, vector<256x3xbf16>
    %c5 = arith.constant 5 : index
    %c0_30 = arith.constant 0 : index
    %c0_31 = arith.constant 0 : index
    %69 = vector.load %arg4[%c5, %c0_30, %c0_31] : memref<9x3x64xbf16, #tpu.memory_space<vmem>>, vector<1x3x64xbf16>
    %70 = vector.shape_cast %69 : vector<1x3x64xbf16> to vector<3x64xbf16>
    %cst_32 = arith.constant dense<0.000000e+00> : vector<256x64xf32>
    %71 = tpu.matmul %68, %70, %cst_32 {dimension_numbers = #tpu.dot_dimension_numbers<[1], [0], [0], [1], [0, 0, 1, 1], [], []>} : vector<256x3xbf16>, vector<3x64xbf16>, vector<256x64xf32> -> vector<256x64xf32>
    %72 = arith.addf %62, %71 : vector<256x64xf32>
    %c47 = arith.constant 47 : index
    %c0_33 = arith.constant 0 : index
    %73 = vector.load %arg7[%c47, %c0_33] : memref<320x3xbf16, #tpu.memory_space<vmem>>, vector<256x3xbf16>
    %c0_i32_34 = arith.constant 0 : i32
    %74 = arith.sitofp %c0_i32_34 : i32 to bf16
    %75 = vector.shape_cast %21 : vector<256x1xi1> to vector<256x1xi1>
    %76 = vector.broadcast %75 : vector<256x1xi1> to vector<256x3xi1>
    %77 = vector.broadcast %74 : bf16 to vector<256x3xbf16>
    %78 = arith.select %76, %73, %77 : vector<256x3xi1>, vector<256x3xbf16>
    %c6 = arith.constant 6 : index
    %c0_35 = arith.constant 0 : index
    %c0_36 = arith.constant 0 : index
    %79 = vector.load %arg4[%c6, %c0_35, %c0_36] : memref<9x3x64xbf16, #tpu.memory_space<vmem>>, vector<1x3x64xbf16>
    %80 = vector.shape_cast %79 : vector<1x3x64xbf16> to vector<3x64xbf16>
    %cst_37 = arith.constant dense<0.000000e+00> : vector<256x64xf32>
    %81 = tpu.matmul %78, %80, %cst_37 {dimension_numbers = #tpu.dot_dimension_numbers<[1], [0], [0], [1], [0, 0, 1, 1], [], []>} : vector<256x3xbf16>, vector<3x64xbf16>, vector<256x64xf32> -> vector<256x64xf32>
    %82 = arith.addf %72, %81 : vector<256x64xf32>
    %c48 = arith.constant 48 : index
    %c0_38 = arith.constant 0 : index
    %83 = vector.load %arg7[%c48, %c0_38] : memref<320x3xbf16, #tpu.memory_space<vmem>>, vector<256x3xbf16>
    %c7 = arith.constant 7 : index
    %c0_39 = arith.constant 0 : index
    %c0_40 = arith.constant 0 : index
    %84 = vector.load %arg4[%c7, %c0_39, %c0_40] : memref<9x3x64xbf16, #tpu.memory_space<vmem>>, vector<1x3x64xbf16>
    %85 = vector.shape_cast %84 : vector<1x3x64xbf16> to vector<3x64xbf16>
    %cst_41 = arith.constant dense<0.000000e+00> : vector<256x64xf32>
    %86 = tpu.matmul %83, %85, %cst_41 {dimension_numbers = #tpu.dot_dimension_numbers<[1], [0], [0], [1], [0, 0, 1, 1], [], []>} : vector<256x3xbf16>, vector<3x64xbf16>, vector<256x64xf32> -> vector<256x64xf32>
    %87 = arith.addf %82, %86 : vector<256x64xf32>
    %c49 = arith.constant 49 : index
    %c0_42 = arith.constant 0 : index
    %88 = vector.load %arg7[%c49, %c0_42] : memref<320x3xbf16, #tpu.memory_space<vmem>>, vector<256x3xbf16>
    %c0_i32_43 = arith.constant 0 : i32
    %89 = arith.sitofp %c0_i32_43 : i32 to bf16
    %90 = vector.shape_cast %23 : vector<256x1xi1> to vector<256x1xi1>
    %91 = vector.broadcast %90 : vector<256x1xi1> to vector<256x3xi1>
    %92 = vector.broadcast %89 : bf16 to vector<256x3xbf16>
    %93 = arith.select %91, %88, %92 : vector<256x3xi1>, vector<256x3xbf16>
    %c8 = arith.constant 8 : index
    %c0_44 = arith.constant 0 : index
    %c0_45 = arith.constant 0 : index
    %94 = vector.load %arg4[%c8, %c0_44, %c0_45] : memref<9x3x64xbf16, #tpu.memory_space<vmem>>, vector<1x3x64xbf16>
    %95 = vector.shape_cast %94 : vector<1x3x64xbf16> to vector<3x64xbf16>
    %cst_46 = arith.constant dense<0.000000e+00> : vector<256x64xf32>
    %96 = tpu.matmul %93, %95, %cst_46 {dimension_numbers = #tpu.dot_dimension_numbers<[1], [0], [0], [1], [0, 0, 1, 1], [], []>} : vector<256x3xbf16>, vector<3x64xbf16>, vector<256x64xf32> -> vector<256x64xf32>
    %97 = arith.addf %87, %96 : vector<256x64xf32>
    %c0_47 = arith.constant 0 : index
    %c0_48 = arith.constant 0 : index
    %98 = vector.load %arg5[%c0_47, %c0_48] : memref<1x64xf32, #tpu.memory_space<vmem>>, vector<1x64xf32>
    %99 = vector.broadcast %98 : vector<1x64xf32> to vector<256x64xf32>
    %100 = arith.addf %97, %99 : vector<256x64xf32>
    %cst_49 = arith.constant 0.000000e+00 : f32
    %101 = vector.broadcast %cst_49 : f32 to vector<256x64xf32>
    %102 = arith.maximumf %100, %101 : vector<256x64xf32>
    %103 = arith.truncf %102 : vector<256x64xf32> to vector<256x64xbf16>
    %c0_50 = arith.constant 0 : index
    %c0_51 = arith.constant 0 : index
    %c0_52 = arith.constant 0 : index
    %104 = vector.load %arg6[%c0_50, %c0_51, %c0_52] : memref<1x256x64xbf16, #tpu.memory_space<vmem>>, vector<1x256x64xbf16>
    %105 = vector.shape_cast %104 : vector<1x256x64xbf16> to vector<256x64xbf16>
    %106 = vector.shape_cast %103 : vector<256x64xbf16> to vector<1x256x64xbf16>
    tpu.vector_store %arg6[%c0_50, %c0_51, %c0_52], %106 {strides = array<i32>} : memref<1x256x64xbf16, #tpu.memory_space<vmem>>, vector<1x256x64xbf16>,
    return
  }
  func.func @transform_0(%arg0: i32, %arg1: i32, %arg2: i32) -> (i32, i32, i32) {
    %c0_i32 = arith.constant 0 : i32
    %c0_i32_0 = arith.constant 0 : i32
    %c0_i32_1 = arith.constant 0 : i32
    return %arg0, %c0_i32, %c0_i32_0 : i32, i32, i32
  }
  func.func @transform_1(%arg0: i32, %arg1: i32, %arg2: i32) -> (i32, i32, i32) {
    %c0_i32 = arith.constant 0 : i32
    %c0_i32_0 = arith.constant 0 : i32
    %c0_i32_1 = arith.constant 0 : i32
    return %c0_i32, %c0_i32_0, %arg1 : i32, i32, i32
  }
  func.func @transform_2(%arg0: i32, %arg1: i32, %arg2: i32) -> (i32, i32) {
    %c0_i32 = arith.constant 0 : i32
    %c0_i32_0 = arith.constant 0 : i32
    return %c0_i32, %arg1 : i32, i32
  }
  func.func @transform_3(%arg0: i32, %arg1: i32, %arg2: i32) -> (i32, i32, i32) {
    %c0_i32 = arith.constant 0 : i32
    return %arg0, %arg2, %arg1 : i32, i32, i32
  }
}

</mosaic_0001>

<llo_original>
// kernel: tpu_custom_call.1
$region0: #{tpu_custom_call.1}
  #allocation0 [shape = 'u32[]', space=smem, size = 0x4, offset = 0x4, fixed_abs, tag = 'smem constant byte address 0x4 - core index']
  #allocation1 [shape = 'u32[144,128]{1,0:T(1,128)}', space=vmem, size = 0x12000, scoped, tag = 'internal scratch']
  #allocation2 [shape = 'bf16[320,3]{1,0:T(16,128)(2,1)}', space=vmem, size = 0x14000, scoped, tag = 'scratch operand']
  %s0 = inlined_call_operand.vmem [shape: bf16[2,256,3], index: 0, kind: input, shape index: {}]
  %s1 = inlined_call_operand.vmem [shape: bf16[9,3,64], index: 1, kind: input, shape index: {}]
  %s2 = inlined_call_operand.vmem [shape: f32[1,64], index: 2, kind: input, shape index: {}]
  %s3 = inlined_call_operand.vmem [shape: bf16[2,256,64], index: 3, kind: output, shape index: {}]
  %s4 = sld [smem:[#allocation0]]
  $region49: #{tpu_custom_call.1} parent=0
    _
  %s6 = ssub.s32 1, %s4
  %s7 = scalar_select 0, %s6, %s4
  loop: start=0, step=1, limit=4
  $region2: #{tpu_custom_call.1} parent=0 // loop_pre_header
    _
  $region3: #{tpu_custom_call.1} parent=0 // loop_header
    %s9 = sphi 0, %s13
    %p10 = scmp.ge.s32.totalorder %s9, 4
    %s16 = sphi 0, %s35
    %s17 = sphi 0, %s31
    %s18 = sphi 0, %s27
    %s19 = sphi 0, %s16
    %s20 = sphi 0, %s17
    %s21 = sphi 0, %s18
    %s22 = sphi 0, %s19
    %s23 = sphi 0, %s20
    %s24 = sphi 0, %s21
    %s38 = sphi 0, %s40
    %s41 = sphi 0, %s38
    %s42 = sphi 0, %s41
    %s58 = sphi 0, %s42
    %s64 = sphi 0, %s66
    %s67 = sphi 0, %s64
    %s68 = sphi 0, %s67
    %s84 = sphi 0, %s68
    %s90 = sphi 0, %s92
    %s93 = sphi 0, %s90
    %s94 = sphi 0, %s93
    %s110 = sphi 0, %s94
    %s120 = sphi 0, %s122
    %s123 = sphi 0, %s120
    %s124 = sphi 0, %s123
    %s140 = sphi 0, %s124
  $region4: #{tpu_custom_call.1} parent=0 // loop_header_branch
    %12 = sbr.rel (%p10) target = $region8
  $region5: #{tpu_custom_call.1} parent=0 // loop_body
    %s14 = ssub.s32 %s9, 1
    %s15 = ssub.s32 %s9, 2
    %s25 = sadd.s32 1, %s18
    %p26 = scmp.ge.s32.totalorder %s25, 1
    %s27 = scalar_select %p26, 0, %s25
    %s28 = sadd.s32 1, %s17
    %s29 = scalar_select %p26, %s28, %s17
    %p30 = scmp.ge.s32.totalorder %s29, 1
    %s31 = scalar_select %p30, 0, %s29
    %s32 = sadd.s32 1, %s16
    %s33 = scalar_select %p30, %s32, %s16
    %p34 = scmp.ge.s32.totalorder %s33, 2
    %s35 = scalar_select %p34, 0, %s33
    %s36 = ssub.s32 %s16, %s35
    %p37 = scmp.eq.s32.totalorder %s36, 0
    %s39 = sadd.s32 %s38, 1
    %s40 = scalar_select %p37, %s38, %s39
    %p43 = pneg %p37
    %p44 = scmp.eq.s32.totalorder %s9, 1
    %p45 = por %p43, %p44
    %p46 = scmp.ne.s32.totalorder %s38, %s41
    %p47 = scmp.eq.s32.totalorder %s9, 0
    %p48 = por %p46, %p47
    %p49 = scmp.ne.s32.totalorder %s38, %s41
    %p50 = scmp.eq.s32.totalorder %s14, 1
    %p51 = por %p49, %p50
    %p52 = scmp.ne.s32.totalorder %s41, %s42
    %p53 = scmp.eq.s32.totalorder %s14, 0
    %p54 = por %p52, %p53
    %p55 = scmp.ne.s32.totalorder %s41, %s42
    %p56 = scmp.eq.s32.totalorder %s15, 1
    %p57 = por %p55, %p56
    %p59 = scmp.ne.s32.totalorder %s42, %s58
    %p60 = scmp.eq.s32.totalorder %s15, 0
    %p61 = por %p59, %p60
    %s62 = ssub.s32 %s17, %s31
    %p63 = scmp.eq.s32.totalorder %s62, 0
    %s65 = sadd.s32 %s64, 1
    %s66 = scalar_select %p63, %s64, %s65
    %p69 = pneg %p63
    %p70 = scmp.eq.s32.totalorder %s9, 1
    %p71 = por %p69, %p70
    %p72 = scmp.ne.s32.totalorder %s64, %s67
    %p73 = scmp.eq.s32.totalorder %s9, 0
    %p74 = por %p72, %p73
    %p75 = scmp.ne.s32.totalorder %s64, %s67
    %p76 = scmp.eq.s32.totalorder %s14, 1
    %p77 = por %p75, %p76
    %p78 = scmp.ne.s32.totalorder %s67, %s68
    %p79 = scmp.eq.s32.totalorder %s14, 0
    %p80 = por %p78, %p79
    %p81 = scmp.ne.s32.totalorder %s67, %s68
    %p82 = scmp.eq.s32.totalorder %s15, 1
    %p83 = por %p81, %p82
    %p85 = scmp.ne.s32.totalorder %s68, %s84
    %p86 = scmp.eq.s32.totalorder %s15, 0
    %p87 = por %p85, %p86
    %s88 = ssub.s32 %s17, %s31
    %p89 = scmp.eq.s32.totalorder %s88, 0
    %s91 = sadd.s32 %s90, 1
    %s92 = scalar_select %p89, %s90, %s91
    %p95 = pneg %p89
    %p96 = scmp.eq.s32.totalorder %s9, 1
    %p97 = por %p95, %p96
    %p98 = scmp.ne.s32.totalorder %s90, %s93
    %p99 = scmp.eq.s32.totalorder %s9, 0
    %p100 = por %p98, %p99
    %p101 = scmp.ne.s32.totalorder %s90, %s93
    %p102 = scmp.eq.s32.totalorder %s14, 1
    %p103 = por %p101, %p102
    %p104 = scmp.ne.s32.totalorder %s93, %s94
    %p105 = scmp.eq.s32.totalorder %s14, 0
    %p106 = por %p104, %p105
    %p107 = scmp.ne.s32.totalorder %s93, %s94
    %p108 = scmp.eq.s32.totalorder %s15, 1
    %p109 = por %p107, %p108
    %p111 = scmp.ne.s32.totalorder %s94, %s110
    %p112 = scmp.eq.s32.totalorder %s15, 0
    %p113 = por %p111, %p112
    %s114 = ssub.s32 %s16, %s35
    %s115 = ssub.s32 %s18, %s27
    %s116 = sor.u32 %s114, %s115
    %s117 = ssub.s32 %s17, %s31
    %s118 = sor.u32 %s116, %s117
    %p119 = scmp.eq.s32.totalorder %s118, 0
    %s121 = sadd.s32 %s120, 1
    %s122 = scalar_select %p119, %s120, %s121
    %p125 = pneg %p119
    %p126 = scmp.eq.s32.totalorder %s9, 1
    %p127 = por %p125, %p126
    %p128 = scmp.ne.s32.totalorder %s120, %s123
    %p129 = scmp.eq.s32.totalorder %s9, 0
    %p130 = por %p128, %p129
    %p131 = scmp.ne.s32.totalorder %s120, %s123
    %p132 = scmp.eq.s32.totalorder %s14, 1
    %p133 = por %p131, %p132
    %p134 = scmp.ne.s32.totalorder %s123, %s124
    %p135 = scmp.eq.s32.totalorder %s14, 0
    %p136 = por %p134, %p135
    %p137 = scmp.ne.s32.totalorder %s123, %s124
    %p138 = scmp.eq.s32.totalorder %s15, 1
    %p139 = por %p137, %p138
    %p141 = scmp.ne.s32.totalorder %s124, %s140
    %p142 = scmp.eq.s32.totalorder %s15, 0
    %p143 = por %p141, %p142
    %p144 = scmp.le.s32.totalorder 1, %s9
    %p145 = scmp.lt.s32.totalorder %s9, 3
    %p146 = pnand %p144, %p145
    %p147 = pneg %p146
    // Predicated region
    $region9: #{tpu_custom_call.1} parent=5 // pred_check
      _
    $region10: #{tpu_custom_call.1} parent=5 // pred_check_branch
      %149 = sbr.rel (%p146) target = $region12
    $region11: #{tpu_custom_call.1} parent=5 // pred_region
      %s150 = ssub.s32 %s9, 1
      // Predicated region
      $region13: #{tpu_custom_call.1} parent=11 // pred_check
        %p151 = pneg %p80
      $region14: #{tpu_custom_call.1} parent=11 // pred_check_branch
        %153 = sbr.rel (%p151) target = $region16
      $region15: #{tpu_custom_call.1} parent=11 // pred_region
        %p154 = scmp.lt.s32.totalorder %s20, 0
        %s155 = scalar_select %p154, %s20, 0
        %s156 = smul.addr %s155, 2
        %s157 = scalar_lea.vmem %s1, %s156
      $region16: #{tpu_custom_call.1} parent=11 // pred_fallthru
        _
      // Predicated region
      $region17: #{tpu_custom_call.1} parent=11 // pred_check
        %p158 = pneg %p106
      $region18: #{tpu_custom_call.1} parent=11 // pred_check_branch
        %160 = sbr.rel (%p158) target = $region20
      $region19: #{tpu_custom_call.1} parent=11 // pred_region
        %p161 = scmp.lt.s32.totalorder %s20, 0
        %s162 = scalar_select %p161, %s20, 0
        %s163 = scalar_lea.vmem %s2, %s162
      $region20: #{tpu_custom_call.1} parent=11 // pred_fallthru
        _
    $region12: #{tpu_custom_call.1} parent=5 // pred_fallthru
      _
    %p164 = scmp.lt.s32.totalorder %s9, 2
    // Predicated region
    $region21: #{tpu_custom_call.1} parent=5 // pred_check
      %p165 = pneg %p164
    $region22: #{tpu_custom_call.1} parent=5 // pred_check_branch
      %167 = sbr.rel (%p165) target = $region24
    $region23: #{tpu_custom_call.1} parent=5 // pred_region
      // Predicated region
      $region25: #{tpu_custom_call.1} parent=23 // pred_check
        %p168 = pneg %p48
      $region26: #{tpu_custom_call.1} parent=23 // pred_check_branch
        %170 = sbr.rel (%p168) target = $region28
      $region27: #{tpu_custom_call.1} parent=23 // pred_region
        %p171 = scmp.lt.s32.totalorder %s16, 1
        %s172 = scalar_select %p171, %s16, 1
        %s173 = smul.addr %s172, 32
        %s174 = smul.addr %s173, 4
        %s175 = scalar_lea.vmem %s0, %s174
      $region28: #{tpu_custom_call.1} parent=23 // pred_fallthru
        _
    $region24: #{tpu_custom_call.1} parent=5 // pred_fallthru
      _
    %p176 = scmp.le.s32.totalorder 1, %s9
    %p177 = scmp.lt.s32.totalorder %s9, 3
    %p178 = pnand %p176, %p177
    %p179 = pneg %p178
    // Predicated region
    $region29: #{tpu_custom_call.1} parent=5 // pred_check
      _
    $region30: #{tpu_custom_call.1} parent=5 // pred_check_branch
      %181 = sbr.rel (%p178) target = $region32
    $region31: #{tpu_custom_call.1} parent=5 // pred_region
      %s182 = ssub.s32 %s9, 1
      %p183 = scmp.lt.s32.totalorder %s19, 1
      %s184 = scalar_select %p183, %s19, 1
      %s185 = smul.addr %s184, 32
      %s186 = smul.addr %s185, 4
      %s187 = scalar_lea.vmem %s0, %s186
      %p188 = pneg %p54
      %p189 = pneg %p51
      %p190 = scmp.lt.s32.totalorder %s20, 0
      %s191 = scalar_select %p190, %s20, 0
      %s192 = smul.addr %s191, 2
      %s193 = scalar_lea.vmem %s1, %s192
      %p194 = pneg %p80
      %p195 = pneg %p77
      %p196 = scmp.lt.s32.totalorder %s20, 0
      %s197 = scalar_select %p196, %s20, 0
      %s198 = scalar_lea.vmem %s2, %s197
      %p199 = pneg %p106
      %p200 = pneg %p103
      %p201 = pneg %p136
      %p202 = pneg %p133
      %s203 = smul.u32 32, %s21
      %p204 = scmp.lt.s32.totalorder %s19, 1
      %s205 = scalar_select %p204, %s19, 1
      %p206 = scmp.lt.s32.totalorder %s203, 31
      %s207 = scalar_select %p206, %s203, 31
      %p208 = scmp.lt.s32.totalorder %s20, 0
      %s209 = scalar_select %p208, %s20, 0
      %s210 = sadd.s32 %s209, %s207
      %s211 = smul.addr %s205, 32
      %s212 = sadd.s32 %s210, %s211
      %s213 = smul.addr %s212, 4
      %s214 = scalar_lea.vmem %s3, %s213
      %p215 = scmp.lt.s32.totalorder %s19, 1
      %s216 = scalar_select %p215, %s19, 1
      %s217 = smul.addr %s216, 32
      %s218 = smul.addr %s217, 4
      %s219 = scalar_lea.vmem %s0, %s218
      %p220 = scmp.lt.s32.totalorder %s20, 0
      %s221 = scalar_select %p220, %s20, 0
      %s222 = smul.addr %s221, 2
      %s223 = scalar_lea.vmem %s1, %s222
      %p224 = scmp.lt.s32.totalorder %s20, 0
      %s225 = scalar_select %p224, %s20, 0
      %s226 = scalar_lea.vmem %s2, %s225
      %s227 = smul.u32 32, %s21
      %p228 = scmp.lt.s32.totalorder %s19, 1
      %s229 = scalar_select %p228, %s19, 1
      %p230 = scmp.lt.s32.totalorder %s227, 31
      %s231 = scalar_select %p230, %s227, 31
      %p232 = scmp.lt.s32.totalorder %s20, 0
      %s233 = scalar_select %p232, %s20, 0
      %s234 = sadd.s32 %s233, %s231
      %s235 = smul.addr %s229, 32
      %s236 = sadd.s32 %s234, %s235
      %s237 = smul.addr %s236, 4
      %s238 = scalar_lea.vmem %s3, %s237
      %s239 = smul.u32 32, %s21
      %p243 = scmp.eq.s32.totalorder %s21, 0
      // Predicated region
      $region33: #{tpu_custom_call.1} parent=31 // pred_check
        %p244 = pneg %p243
      $region34: #{tpu_custom_call.1} parent=31 // pred_check_branch
        %246 = sbr.rel (%p244) target = $region36
      $region35: #{tpu_custom_call.1} parent=31 // pred_region
        %vm247 = vcmask 23552
        %248 = vst.msk [vmem:[#allocation2] sm:$0xff] %vm247, 0
        %249 = vst.msk [vmem:[#allocation2 + $0x8] sm:$0xff] %vm247, 0
        %250 = vst.msk [vmem:[#allocation2 + $0x90] sm:$0xff] %vm247, 0
        %251 = vst.msk [vmem:[#allocation2 + $0x98] sm:$0xff] %vm247, 0
        %v252 = vld [vmem:[%s219] sm:$0xf]
        %v253 = vld [vmem:[%s219 + $0x4] sm:$0xf]
        %v254 = vld [vmem:[%s219 + $0x8] sm:$0xf]
        %v255 = vld [vmem:[%s219 + $0xc] sm:$0xf]
        %v256 = vld [vmem:[%s219 + $0x10] sm:$0xf]
        %v257 = vld [vmem:[%s219 + $0x14] sm:$0xf]
        %v258 = vld [vmem:[%s219 + $0x18] sm:$0xf]
        %v259 = vld [vmem:[%s219 + $0x1c] sm:$0xf]
        %v260 = vld [vmem:[%s219 + $0x20] sm:$0xf]
        %v261 = vld [vmem:[%s219 + $0x24] sm:$0xf]
        %v262 = vld [vmem:[%s219 + $0x28] sm:$0xf]
        %v263 = vld [vmem:[%s219 + $0x2c] sm:$0xf]
        %v264 = vld [vmem:[%s219 + $0x30] sm:$0xf]
        %v265 = vld [vmem:[%s219 + $0x34] sm:$0xf]
        %v266 = vld [vmem:[%s219 + $0x38] sm:$0xf]
        %v267 = vld [vmem:[%s219 + $0x3c] sm:$0xf]
        %v268 = vld [vmem:[%s219 + $0x40] sm:$0xf]
        %v269 = vld [vmem:[%s219 + $0x44] sm:$0xf]
        %v270 = vld [vmem:[%s219 + $0x48] sm:$0xf]
        %v271 = vld [vmem:[%s219 + $0x4c] sm:$0xf]
        %v272 = vld [vmem:[%s219 + $0x50] sm:$0xf]
        %v273 = vld [vmem:[%s219 + $0x54] sm:$0xf]
        %v274 = vld [vmem:[%s219 + $0x58] sm:$0xf]
        %v275 = vld [vmem:[%s219 + $0x5c] sm:$0xf]
        %v276 = vld [vmem:[%s219 + $0x60] sm:$0xf]
        %v277 = vld [vmem:[%s219 + $0x64] sm:$0xf]
        %v278 = vld [vmem:[%s219 + $0x68] sm:$0xf]
        %v279 = vld [vmem:[%s219 + $0x6c] sm:$0xf]
        %v280 = vld [vmem:[%s219 + $0x70] sm:$0xf]
        %v281 = vld [vmem:[%s219 + $0x74] sm:$0xf]
        %v282 = vld [vmem:[%s219 + $0x78] sm:$0xf]
        %v283 = vld [vmem:[%s219 + $0x7c] sm:$0xf]
        %v316 = vunpack.c.l.b16 %v252
        %v317 = vunpack.c.l.b16 %v253
        %v318 = vunpack.c.l.b16 %v254
        %v319 = vunpack.c.l.b16 %v255
        %v320 = vunpack.c.l.b16 %v256
        %v321 = vunpack.c.l.b16 %v257
        %v322 = vunpack.c.l.b16 %v258
        %v323 = vunpack.c.l.b16 %v259
        %v324 = vunpack.c.l.b16 %v260
        %v325 = vunpack.c.l.b16 %v261
        %v326 = vunpack.c.l.b16 %v262
        %v327 = vunpack.c.l.b16 %v263
        %v328 = vunpack.c.l.b16 %v264
        %v329 = vunpack.c.l.b16 %v265
        %v330 = vunpack.c.l.b16 %v266
        %v331 = vunpack.c.l.b16 %v267
        %v332 = vunpack.c.l.b16 %v268
        %v333 = vunpack.c.l.b16 %v269
        %v334 = vunpack.c.l.b16 %v270
        %v335 = vunpack.c.l.b16 %v271
        %v336 = vunpack.c.l.b16 %v272
        %v337 = vunpack.c.l.b16 %v273
        %v338 = vunpack.c.l.b16 %v274
        %v339 = vunpack.c.l.b16 %v275
        %v340 = vunpack.c.l.b16 %v276
        %v341 = vunpack.c.l.b16 %v277
        %v342 = vunpack.c.l.b16 %v278
        %v343 = vunpack.c.l.b16 %v279
        %v344 = vunpack.c.l.b16 %v280
        %v345 = vunpack.c.l.b16 %v281
        %v346 = vunpack.c.l.b16 %v282
        %v347 = vunpack.c.l.b16 %v283
        %v348 = vpack.c.b16 %v317, %v316
        %v349 = vpack.c.b16 %v319, %v318
        %v350 = vpack.c.b16 %v321, %v320
        %v351 = vpack.c.b16 %v323, %v322
        %v352 = vpack.c.b16 %v325, %v324
        %v353 = vpack.c.b16 %v327, %v326
        %v354 = vpack.c.b16 %v329, %v328
        %v355 = vpack.c.b16 %v331, %v330
        %v356 = vpack.c.b16 %v333, %v332
        %v357 = vpack.c.b16 %v335, %v334
        %v358 = vpack.c.b16 %v337, %v336
        %v359 = vpack.c.b16 %v339, %v338
        %v360 = vpack.c.b16 %v341, %v340
        %v361 = vpack.c.b16 %v343, %v342
        %v362 = vpack.c.b16 %v345, %v344
        %v363 = vpack.c.b16 %v347, %v346
        %380 = vst.msk [vmem:[#allocation2 + $0x10] sm:$0xff] %vm247, %v348
        %381 = vst.msk [vmem:[#allocation2 + $0x18] sm:$0xff] %vm247, %v349
        %382 = vst.msk [vmem:[#allocation2 + $0x20] sm:$0xff] %vm247, %v350
        %383 = vst.msk [vmem:[#allocation2 + $0x28] sm:$0xff] %vm247, %v351
        %384 = vst.msk [vmem:[#allocation2 + $0x30] sm:$0xff] %vm247, %v352
        %385 = vst.msk [vmem:[#allocation2 + $0x38] sm:$0xff] %vm247, %v353
        %386 = vst.msk [vmem:[#allocation2 + $0x40] sm:$0xff] %vm247, %v354
        %387 = vst.msk [vmem:[#allocation2 + $0x48] sm:$0xff] %vm247, %v355
        %388 = vst.msk [vmem:[#allocation2 + $0x50] sm:$0xff] %vm247, %v356
        %389 = vst.msk [vmem:[#allocation2 + $0x58] sm:$0xff] %vm247, %v357
        %390 = vst.msk [vmem:[#allocation2 + $0x60] sm:$0xff] %vm247, %v358
        %391 = vst.msk [vmem:[#allocation2 + $0x68] sm:$0xff] %vm247, %v359
        %392 = vst.msk [vmem:[#allocation2 + $0x70] sm:$0xff] %vm247, %v360
        %393 = vst.msk [vmem:[#allocation2 + $0x78] sm:$0xff] %vm247, %v361
        %394 = vst.msk [vmem:[#allocation2 + $0x80] sm:$0xff] %vm247, %v362
        %395 = vst.msk [vmem:[#allocation2 + $0x88] sm:$0xff] %vm247, %v363
      $region36: #{tpu_custom_call.1} parent=31 // pred_fallthru
        _
      %v396 = vlaneseq
      %v397 = vshrl.u32 %v396, 7
      %v398 = vadd.s32 %v397, 8
      %v399 = vadd.s32 %v397, 16
      %v400 = vadd.s32 %v397, 24
      %v401 = vadd.s32 %v397, 32
      %v402 = vadd.s32 %v397, 40
      %v403 = vadd.s32 %v397, 48
      %v404 = vadd.s32 %v397, 56
      %v405 = vadd.s32 %v397, 64
      %v406 = vadd.s32 %v397, 72
      %v407 = vadd.s32 %v397, 80
      %v408 = vadd.s32 %v397, 88
      %v409 = vadd.s32 %v397, 96
      %v410 = vadd.s32 %v397, 104
      %v411 = vadd.s32 %v397, 112
      %v412 = vadd.s32 %v397, 120
      %v413 = vadd.s32 %v397, 128
      %v414 = vadd.s32 %v397, 136
      %v415 = vadd.s32 %v397, 144
      %v416 = vadd.s32 %v397, 152
      %v417 = vadd.s32 %v397, 160
      %v418 = vadd.s32 %v397, 168
      %v419 = vadd.s32 %v397, 176
      %v420 = vadd.s32 %v397, 184
      %v421 = vadd.s32 %v397, 192
      %v422 = vadd.s32 %v397, 200
      %v423 = vadd.s32 %v397, 208
      %v424 = vadd.s32 %v397, 216
      %v425 = vadd.s32 %v397, 224
      %v426 = vadd.s32 %v397, 232
      %v427 = vadd.s32 %v397, 240
      %v428 = vadd.s32 %v397, 248
      %vm429 = vcmp.lt.s32.totalorder %v397, 0
      %v430 = vsub.s32 0, %v397
      %v431 = vsel %vm429, %v430, %v397
      %v432 = vshrl.u32 %v431, 4
      %v433 = vand.u32 %v431, 15
      %v434 = vsub.s32 0, %v433
      %v435 = vsel %vm429, %v434, %v433
      %vm436 = vcmp.lt.s32.totalorder %v398, 0
      %v437 = vsub.s32 0, %v398
      %v438 = vsel %vm436, %v437, %v398
      %v439 = vshrl.u32 %v438, 4
      %v440 = vand.u32 %v438, 15
      %v441 = vsub.s32 0, %v440
      %v442 = vsel %vm436, %v441, %v440
      %vm443 = vcmp.lt.s32.totalorder %v399, 0
      %v444 = vsub.s32 0, %v399
      %v445 = vsel %vm443, %v444, %v399
      %v446 = vshrl.u32 %v445, 4
      %v447 = vand.u32 %v445, 15
      %v448 = vsub.s32 0, %v447
      %v449 = vsel %vm443, %v448, %v447
      %vm450 = vcmp.lt.s32.totalorder %v400, 0
      %v451 = vsub.s32 0, %v400
      %v452 = vsel %vm450, %v451, %v400
      %v453 = vshrl.u32 %v452, 4
      %v454 = vand.u32 %v452, 15
      %v455 = vsub.s32 0, %v454
      %v456 = vsel %vm450, %v455, %v454
      %vm457 = vcmp.lt.s32.totalorder %v401, 0
      %v458 = vsub.s32 0, %v401
      %v459 = vsel %vm457, %v458, %v401
      %v460 = vshrl.u32 %v459, 4
      %v461 = vand.u32 %v459, 15
      %v462 = vsub.s32 0, %v461
      %v463 = vsel %vm457, %v462, %v461
      %vm464 = vcmp.lt.s32.totalorder %v402, 0
      %v465 = vsub.s32 0, %v402
      %v466 = vsel %vm464, %v465, %v402
      %v467 = vshrl.u32 %v466, 4
      %v468 = vand.u32 %v466, 15
      %v469 = vsub.s32 0, %v468
      %v470 = vsel %vm464, %v469, %v468
      %vm471 = vcmp.lt.s32.totalorder %v403, 0
      %v472 = vsub.s32 0, %v403
      %v473 = vsel %vm471, %v472, %v403
      %v474 = vshrl.u32 %v473, 4
      %v475 = vand.u32 %v473, 15
      %v476 = vsub.s32 0, %v475
      %v477 = vsel %vm471, %v476, %v475
      %vm478 = vcmp.lt.s32.totalorder %v404, 0
      %v479 = vsub.s32 0, %v404
      %v480 = vsel %vm478, %v479, %v404
      %v481 = vshrl.u32 %v480, 4
      %v482 = vand.u32 %v480, 15
      %v483 = vsub.s32 0, %v482
      %v484 = vsel %vm478, %v483, %v482
      %vm485 = vcmp.lt.s32.totalorder %v405, 0
      %v486 = vsub.s32 0, %v405
      %v487 = vsel %vm485, %v486, %v405
      %v488 = vshrl.u32 %v487, 4
      %v489 = vand.u32 %v487, 15
      %v490 = vsub.s32 0, %v489
      %v491 = vsel %vm485, %v490, %v489
      %vm492 = vcmp.lt.s32.totalorder %v406, 0
      %v493 = vsub.s32 0, %v406
      %v494 = vsel %vm492, %v493, %v406
      %v495 = vshrl.u32 %v494, 4
      %v496 = vand.u32 %v494, 15
      %v497 = vsub.s32 0, %v496
      %v498 = vsel %vm492, %v497, %v496
      %vm499 = vcmp.lt.s32.totalorder %v407, 0
      %v500 = vsub.s32 0, %v407
      %v501 = vsel %vm499, %v500, %v407
      %v502 = vshrl.u32 %v501, 4
      %v503 = vand.u32 %v501, 15
      %v504 = vsub.s32 0, %v503
      %v505 = vsel %vm499, %v504, %v503
      %vm506 = vcmp.lt.s32.totalorder %v408, 0
      %v507 = vsub.s32 0, %v408
      %v508 = vsel %vm506, %v507, %v408
      %v509 = vshrl.u32 %v508, 4
      %v510 = vand.u32 %v508, 15
      %v511 = vsub.s32 0, %v510
      %v512 = vsel %vm506, %v511, %v510
      %vm513 = vcmp.lt.s32.totalorder %v409, 0
      %v514 = vsub.s32 0, %v409
      %v515 = vsel %vm513, %v514, %v409
      %v516 = vshrl.u32 %v515, 4
      %v517 = vand.u32 %v515, 15
      %v518 = vsub.s32 0, %v517
      %v519 = vsel %vm513, %v518, %v517
      %vm520 = vcmp.lt.s32.totalorder %v410, 0
      %v521 = vsub.s32 0, %v410
      %v522 = vsel %vm520, %v521, %v410
      %v523 = vshrl.u32 %v522, 4
      %v524 = vand.u32 %v522, 15
      %v525 = vsub.s32 0, %v524
      %v526 = vsel %vm520, %v525, %v524
      %vm527 = vcmp.lt.s32.totalorder %v411, 0
      %v528 = vsub.s32 0, %v411
      %v529 = vsel %vm527, %v528, %v411
      %v530 = vshrl.u32 %v529, 4
      %v531 = vand.u32 %v529, 15
      %v532 = vsub.s32 0, %v531
      %v533 = vsel %vm527, %v532, %v531
      %vm534 = vcmp.lt.s32.totalorder %v412, 0
      %v535 = vsub.s32 0, %v412
      %v536 = vsel %vm534, %v535, %v412
      %v537 = vshrl.u32 %v536, 4
      %v538 = vand.u32 %v536, 15
      %v539 = vsub.s32 0, %v538
      %v540 = vsel %vm534, %v539, %v538
      %vm541 = vcmp.lt.s32.totalorder %v413, 0
      %v542 = vsub.s32 0, %v413
      %v543 = vsel %vm541, %v542, %v413
      %v544 = vshrl.u32 %v543, 4
      %v545 = vand.u32 %v543, 15
      %v546 = vsub.s32 0, %v545
      %v547 = vsel %vm541, %v546, %v545
      %vm548 = vcmp.lt.s32.totalorder %v414, 0
      %v549 = vsub.s32 0, %v414
      %v550 = vsel %vm548, %v549, %v414
      %v551 = vshrl.u32 %v550, 4
      %v552 = vand.u32 %v550, 15
      %v553 = vsub.s32 0, %v552
      %v554 = vsel %vm548, %v553, %v552
      %vm555 = vcmp.lt.s32.totalorder %v415, 0
      %v556 = vsub.s32 0, %v415
      %v557 = vsel %vm555, %v556, %v415
      %v558 = vshrl.u32 %v557, 4
      %v559 = vand.u32 %v557, 15
      %v560 = vsub.s32 0, %v559
      %v561 = vsel %vm555, %v560, %v559
      %vm562 = vcmp.lt.s32.totalorder %v416, 0
      %v563 = vsub.s32 0, %v416
      %v564 = vsel %vm562, %v563, %v416
      %v565 = vshrl.u32 %v564, 4
      %v566 = vand.u32 %v564, 15
      %v567 = vsub.s32 0, %v566
      %v568 = vsel %vm562, %v567, %v566
      %vm569 = vcmp.lt.s32.totalorder %v417, 0
      %v570 = vsub.s32 0, %v417
      %v571 = vsel %vm569, %v570, %v417
      %v572 = vshrl.u32 %v571, 4
      %v573 = vand.u32 %v571, 15
      %v574 = vsub.s32 0, %v573
      %v575 = vsel %vm569, %v574, %v573
      %vm576 = vcmp.lt.s32.totalorder %v418, 0
      %v577 = vsub.s32 0, %v418
      %v578 = vsel %vm576, %v577, %v418
      %v579 = vshrl.u32 %v578, 4
      %v580 = vand.u32 %v578, 15
      %v581 = vsub.s32 0, %v580
      %v582 = vsel %vm576, %v581, %v580
      %vm583 = vcmp.lt.s32.totalorder %v419, 0
      %v584 = vsub.s32 0, %v419
      %v585 = vsel %vm583, %v584, %v419
      %v586 = vshrl.u32 %v585, 4
      %v587 = vand.u32 %v585, 15
      %v588 = vsub.s32 0, %v587
      %v589 = vsel %vm583, %v588, %v587
      %vm590 = vcmp.lt.s32.totalorder %v420, 0
      %v591 = vsub.s32 0, %v420
      %v592 = vsel %vm590, %v591, %v420
      %v593 = vshrl.u32 %v592, 4
      %v594 = vand.u32 %v592, 15
      %v595 = vsub.s32 0, %v594
      %v596 = vsel %vm590, %v595, %v594
      %vm597 = vcmp.lt.s32.totalorder %v421, 0
      %v598 = vsub.s32 0, %v421
      %v599 = vsel %vm597, %v598, %v421
      %v600 = vshrl.u32 %v599, 4
      %v601 = vand.u32 %v599, 15
      %v602 = vsub.s32 0, %v601
      %v603 = vsel %vm597, %v602, %v601
      %vm604 = vcmp.lt.s32.totalorder %v422, 0
      %v605 = vsub.s32 0, %v422
      %v606 = vsel %vm604, %v605, %v422
      %v607 = vshrl.u32 %v606, 4
      %v608 = vand.u32 %v606, 15
      %v609 = vsub.s32 0, %v608
      %v610 = vsel %vm604, %v609, %v608
      %vm611 = vcmp.lt.s32.totalorder %v423, 0
      %v612 = vsub.s32 0, %v423
      %v613 = vsel %vm611, %v612, %v423
      %v614 = vshrl.u32 %v613, 4
      %v615 = vand.u32 %v613, 15
      %v616 = vsub.s32 0, %v615
      %v617 = vsel %vm611, %v616, %v615
      %vm618 = vcmp.lt.s32.totalorder %v424, 0
      %v619 = vsub.s32 0, %v424
      %v620 = vsel %vm618, %v619, %v424
      %v621 = vshrl.u32 %v620, 4
      %v622 = vand.u32 %v620, 15
      %v623 = vsub.s32 0, %v622
      %v624 = vsel %vm618, %v623, %v622
      %vm625 = vcmp.lt.s32.totalorder %v425, 0
      %v626 = vsub.s32 0, %v425
      %v627 = vsel %vm625, %v626, %v425
      %v628 = vshrl.u32 %v627, 4
      %v629 = vand.u32 %v627, 15
      %v630 = vsub.s32 0, %v629
      %v631 = vsel %vm625, %v630, %v629
      %vm632 = vcmp.lt.s32.totalorder %v426, 0
      %v633 = vsub.s32 0, %v426
      %v634 = vsel %vm632, %v633, %v426
      %v635 = vshrl.u32 %v634, 4
      %v636 = vand.u32 %v634, 15
      %v637 = vsub.s32 0, %v636
      %v638 = vsel %vm632, %v637, %v636
      %vm639 = vcmp.lt.s32.totalorder %v427, 0
      %v640 = vsub.s32 0, %v427
      %v641 = vsel %vm639, %v640, %v427
      %v642 = vshrl.u32 %v641, 4
      %v643 = vand.u32 %v641, 15
      %v644 = vsub.s32 0, %v643
      %v645 = vsel %vm639, %v644, %v643
      %vm646 = vcmp.lt.s32.totalorder %v428, 0
      %v647 = vsub.s32 0, %v428
      %v648 = vsel %vm646, %v647, %v428
      %v649 = vshrl.u32 %v648, 4
      %v650 = vand.u32 %v648, 15
      %v651 = vsub.s32 0, %v650
      %v652 = vsel %vm646, %v651, %v650
      %vm653 = vcmp.ne.s32.totalorder %v435, 0
      %vm654 = vcmp.ne.s32.totalorder %v442, 0
      %vm655 = vcmp.ne.s32.totalorder %v449, 0
      %vm656 = vcmp.ne.s32.totalorder %v456, 0
      %vm657 = vcmp.ne.s32.totalorder %v463, 0
      %vm658 = vcmp.ne.s32.totalorder %v470, 0
      %vm659 = vcmp.ne.s32.totalorder %v477, 0
      %vm660 = vcmp.ne.s32.totalorder %v484, 0
      %vm661 = vcmp.ne.s32.totalorder %v491, 0
      %vm662 = vcmp.ne.s32.totalorder %v498, 0
      %vm663 = vcmp.ne.s32.totalorder %v505, 0
      %vm664 = vcmp.ne.s32.totalorder %v512, 0
      %vm665 = vcmp.ne.s32.totalorder %v519, 0
      %vm666 = vcmp.ne.s32.totalorder %v526, 0
      %vm667 = vcmp.ne.s32.totalorder %v533, 0
      %vm668 = vcmp.ne.s32.totalorder %v540, 0
      %vm669 = vcmp.ne.s32.totalorder %v547, 0
      %vm670 = vcmp.ne.s32.totalorder %v554, 0
      %vm671 = vcmp.ne.s32.totalorder %v561, 0
      %vm672 = vcmp.ne.s32.totalorder %v568, 0
      %vm673 = vcmp.ne.s32.totalorder %v575, 0
      %vm674 = vcmp.ne.s32.totalorder %v582, 0
      %vm675 = vcmp.ne.s32.totalorder %v589, 0
      %vm676 = vcmp.ne.s32.totalorder %v596, 0
      %vm677 = vcmp.ne.s32.totalorder %v603, 0
      %vm678 = vcmp.ne.s32.totalorder %v610, 0
      %vm679 = vcmp.ne.s32.totalorder %v617, 0
      %vm680 = vcmp.ne.s32.totalorder %v624, 0
      %vm681 = vcmp.ne.s32.totalorder %v631, 0
      %vm682 = vcmp.ne.s32.totalorder %v638, 0
      %vm683 = vcmp.ne.s32.totalorder %v645, 0
      %vm684 = vcmp.ne.s32.totalorder %v652, 0
      %vm685 = vcmp.lt.s32.totalorder %v435, 0
      %vm686 = vcmp.lt.s32.totalorder %v442, 0
      %vm687 = vcmp.lt.s32.totalorder %v449, 0
      %vm688 = vcmp.lt.s32.totalorder %v456, 0
      %vm689 = vcmp.lt.s32.totalorder %v463, 0
      %vm690 = vcmp.lt.s32.totalorder %v470, 0
      %vm691 = vcmp.lt.s32.totalorder %v477, 0
      %vm692 = vcmp.lt.s32.totalorder %v484, 0
      %vm693 = vcmp.lt.s32.totalorder %v491, 0
      %vm694 = vcmp.lt.s32.totalorder %v498, 0
      %vm695 = vcmp.lt.s32.totalorder %v505, 0
      %vm696 = vcmp.lt.s32.totalorder %v512, 0
      %vm697 = vcmp.lt.s32.totalorder %v519, 0
      %vm698 = vcmp.lt.s32.totalorder %v526, 0
      %vm699 = vcmp.lt.s32.totalorder %v533, 0
      %vm700 = vcmp.lt.s32.totalorder %v540, 0
      %vm701 = vcmp.lt.s32.totalorder %v547, 0
      %vm702 = vcmp.lt.s32.totalorder %v554, 0
      %vm703 = vcmp.lt.s32.totalorder %v561, 0
      %vm704 = vcmp.lt.s32.totalorder %v568, 0
      %vm705 = vcmp.lt.s32.totalorder %v575, 0
      %vm706 = vcmp.lt.s32.totalorder %v582, 0
      %vm707 = vcmp.lt.s32.totalorder %v589, 0
      %vm708 = vcmp.lt.s32.totalorder %v596, 0
      %vm709 = vcmp.lt.s32.totalorder %v603, 0
      %vm710 = vcmp.lt.s32.totalorder %v610, 0
      %vm711 = vcmp.lt.s32.totalorder %v617, 0
      %vm712 = vcmp.lt.s32.totalorder %v624, 0
      %vm713 = vcmp.lt.s32.totalorder %v631, 0
      %vm714 = vcmp.lt.s32.totalorder %v638, 0
      %vm715 = vcmp.lt.s32.totalorder %v645, 0
      %vm716 = vcmp.lt.s32.totalorder %v652, 0
      %vm717 = vmand %vm685, %vm653
      %vm718 = vmand %vm686, %vm654
      %vm719 = vmand %vm687, %vm655
      %vm720 = vmand %vm688, %vm656
      %vm721 = vmand %vm689, %vm657
      %vm722 = vmand %vm690, %vm658
      %vm723 = vmand %vm691, %vm659
      %vm724 = vmand %vm692, %vm660
      %vm725 = vmand %vm693, %vm661
      %vm726 = vmand %vm694, %vm662
      %vm727 = vmand %vm695, %vm663
      %vm728 = vmand %vm696, %vm664
      %vm729 = vmand %vm697, %vm665
      %vm730 = vmand %vm698, %vm666
      %vm731 = vmand %vm699, %vm667
      %vm732 = vmand %vm700, %vm668
      %vm733 = vmand %vm701, %vm669
      %vm734 = vmand %vm702, %vm670
      %vm735 = vmand %vm703, %vm671
      %vm736 = vmand %vm704, %vm672
      %vm737 = vmand %vm705, %vm673
      %vm738 = vmand %vm706, %vm674
      %vm739 = vmand %vm707, %vm675
      %vm740 = vmand %vm708, %vm676
      %vm741 = vmand %vm709, %vm677
      %vm742 = vmand %vm710, %vm678
      %vm743 = vmand %vm711, %vm679
      %vm744 = vmand %vm712, %vm680
      %vm745 = vmand %vm713, %vm681
      %vm746 = vmand %vm714, %vm682
      %vm747 = vmand %vm715, %vm683
      %vm748 = vmand %vm716, %vm684
      %v749 = vadd.s32 %v435, 16
      %v750 = vadd.s32 %v442, 16
      %v751 = vadd.s32 %v449, 16
      %v752 = vadd.s32 %v456, 16
      %v753 = vadd.s32 %v463, 16
      %v754 = vadd.s32 %v470, 16
      %v755 = vadd.s32 %v477, 16
      %v756 = vadd.s32 %v484, 16
      %v757 = vadd.s32 %v491, 16
      %v758 = vadd.s32 %v498, 16
      %v759 = vadd.s32 %v505, 16
      %v760 = vadd.s32 %v512, 16
      %v761 = vadd.s32 %v519, 16
      %v762 = vadd.s32 %v526, 16
      %v763 = vadd.s32 %v533, 16
      %v764 = vadd.s32 %v540, 16
      %v765 = vadd.s32 %v547, 16
      %v766 = vadd.s32 %v554, 16
      %v767 = vadd.s32 %v561, 16
      %v768 = vadd.s32 %v568, 16
      %v769 = vadd.s32 %v575, 16
      %v770 = vadd.s32 %v582, 16
      %v771 = vadd.s32 %v589, 16
      %v772 = vadd.s32 %v596, 16
      %v773 = vadd.s32 %v603, 16
      %v774 = vadd.s32 %v610, 16
      %v775 = vadd.s32 %v617, 16
      %v776 = vadd.s32 %v624, 16
      %v777 = vadd.s32 %v631, 16
      %v778 = vadd.s32 %v638, 16
      %v779 = vadd.s32 %v645, 16
      %v780 = vadd.s32 %v652, 16
      %v781 = vsel %vm717, %v749, %v435
      %v782 = vsel %vm718, %v750, %v442
      %v783 = vsel %vm719, %v751, %v449
      %v784 = vsel %vm720, %v752, %v456
      %v785 = vsel %vm721, %v753, %v463
      %v786 = vsel %vm722, %v754, %v470
      %v787 = vsel %vm723, %v755, %v477
      %v788 = vsel %vm724, %v756, %v484
      %v789 = vsel %vm725, %v757, %v491
      %v790 = vsel %vm726, %v758, %v498
      %v791 = vsel %vm727, %v759, %v505
      %v792 = vsel %vm728, %v760, %v512
      %v793 = vsel %vm729, %v761, %v519
      %v794 = vsel %vm730, %v762, %v526
      %v795 = vsel %vm731, %v763, %v533
      %v796 = vsel %vm732, %v764, %v540
      %v797 = vsel %vm733, %v765, %v547
      %v798 = vsel %vm734, %v766, %v554
      %v799 = vsel %vm735, %v767, %v561
      %v800 = vsel %vm736, %v768, %v568
      %v801 = vsel %vm737, %v769, %v575
      %v802 = vsel %vm738, %v770, %v582
      %v803 = vsel %vm739, %v771, %v589
      %v804 = vsel %vm740, %v772, %v596
      %v805 = vsel %vm741, %v773, %v603
      %v806 = vsel %vm742, %v774, %v610
      %v807 = vsel %vm743, %v775, %v617
      %v808 = vsel %vm744, %v776, %v624
      %v809 = vsel %vm745, %v777, %v631
      %v810 = vsel %vm746, %v778, %v638
      %v811 = vsel %vm747, %v779, %v645
      %v812 = vsel %vm748, %v780, %v652
      %vm813 = vcmp.ne.s32.totalorder %v781, 0
      %vm814 = vcmp.ne.s32.totalorder %v782, 0
      %vm815 = vcmp.ne.s32.totalorder %v783, 0
      %vm816 = vcmp.ne.s32.totalorder %v784, 0
      %vm817 = vcmp.ne.s32.totalorder %v785, 0
      %vm818 = vcmp.ne.s32.totalorder %v786, 0
      %vm819 = vcmp.ne.s32.totalorder %v787, 0
      %vm820 = vcmp.ne.s32.totalorder %v788, 0
      %vm821 = vcmp.ne.s32.totalorder %v789, 0
      %vm822 = vcmp.ne.s32.totalorder %v790, 0
      %vm823 = vcmp.ne.s32.totalorder %v791, 0
      %vm824 = vcmp.ne.s32.totalorder %v792, 0
      %vm825 = vcmp.ne.s32.totalorder %v793, 0
      %vm826 = vcmp.ne.s32.totalorder %v794, 0
      %vm827 = vcmp.ne.s32.totalorder %v795, 0
      %vm828 = vcmp.ne.s32.totalorder %v796, 0
      %vm829 = vcmp.ne.s32.totalorder %v797, 0
      %vm830 = vcmp.ne.s32.totalorder %v798, 0
      %vm831 = vcmp.ne.s32.totalorder %v799, 0
      %vm832 = vcmp.ne.s32.totalorder %v800, 0
      %vm833 = vcmp.ne.s32.totalorder %v801, 0
      %vm834 = vcmp.ne.s32.totalorder %v802, 0
      %vm835 = vcmp.ne.s32.totalorder %v803, 0
      %vm836 = vcmp.ne.s32.totalorder %v804, 0
      %vm837 = vcmp.ne.s32.totalorder %v805, 0
      %vm838 = vcmp.ne.s32.totalorder %v806, 0
      %vm839 = vcmp.ne.s32.totalorder %v807, 0
      %vm840 = vcmp.ne.s32.totalorder %v808, 0
      %vm841 = vcmp.ne.s32.totalorder %v809, 0
      %vm842 = vcmp.ne.s32.totalorder %v810, 0
      %vm843 = vcmp.ne.s32.totalorder %v811, 0
      %vm844 = vcmp.ne.s32.totalorder %v812, 0
      %vm845 = vcmp.ne.s32.totalorder %v781, 15
      %vm846 = vcmp.ne.s32.totalorder %v782, 15
      %vm847 = vcmp.ne.s32.totalorder %v783, 15
      %vm848 = vcmp.ne.s32.totalorder %v784, 15
      %vm849 = vcmp.ne.s32.totalorder %v785, 15
      %vm850 = vcmp.ne.s32.totalorder %v786, 15
      %vm851 = vcmp.ne.s32.totalorder %v787, 15
      %vm852 = vcmp.ne.s32.totalorder %v788, 15
      %vm853 = vcmp.ne.s32.totalorder %v789, 15
      %vm854 = vcmp.ne.s32.totalorder %v790, 15
      %vm855 = vcmp.ne.s32.totalorder %v791, 15
      %vm856 = vcmp.ne.s32.totalorder %v792, 15
      %vm857 = vcmp.ne.s32.totalorder %v793, 15
      %vm858 = vcmp.ne.s32.totalorder %v794, 15
      %vm859 = vcmp.ne.s32.totalorder %v795, 15
      %vm860 = vcmp.ne.s32.totalorder %v796, 15
      %vm861 = vcmp.ne.s32.totalorder %v797, 15
      %vm862 = vcmp.ne.s32.totalorder %v798, 15
      %vm863 = vcmp.ne.s32.totalorder %v799, 15
      %vm864 = vcmp.ne.s32.totalorder %v800, 15
      %vm865 = vcmp.ne.s32.totalorder %v801, 15
      %vm866 = vcmp.ne.s32.totalorder %v802, 15
      %vm867 = vcmp.ne.s32.totalorder %v803, 15
      %vm868 = vcmp.ne.s32.totalorder %v804, 15
      %vm869 = vcmp.ne.s32.totalorder %v805, 15
      %vm870 = vcmp.ne.s32.totalorder %v806, 15
      %vm871 = vcmp.ne.s32.totalorder %v807, 15
      %vm872 = vcmp.ne.s32.totalorder %v808, 15
      %vm873 = vcmp.ne.s32.totalorder %v809, 15
      %vm874 = vcmp.ne.s32.totalorder %v810, 15
      %vm875 = vcmp.ne.s32.totalorder %v811, 15
      %vm876 = vcmp.ne.s32.totalorder %v812, 15
      %v877 = vld [vmem:[#allocation2] sm:$0x80]
      %v878 = vld [vmem:[#allocation2 + $0x8] sm:$0xff]
      %v879 = vld [vmem:[#allocation2 + $0x10] sm:$0xff]
      %v880 = vld [vmem:[#allocation2 + $0x18] sm:$0xff]
      %v881 = vld [vmem:[#allocation2 + $0x20] sm:$0xff]
      %v882 = vld [vmem:[#allocation2 + $0x28] sm:$0xff]
      %v883 = vld [vmem:[#allocation2 + $0x30] sm:$0xff]
      %v884 = vld [vmem:[#allocation2 + $0x38] sm:$0xff]
      %v885 = vld [vmem:[#allocation2 + $0x40] sm:$0xff]
      %v886 = vld [vmem:[#allocation2 + $0x48] sm:$0xff]
      %v887 = vld [vmem:[#allocation2 + $0x50] sm:$0xff]
      %v888 = vld [vmem:[#allocation2 + $0x58] sm:$0xff]
      %v889 = vld [vmem:[#allocation2 + $0x60] sm:$0xff]
      %v890 = vld [vmem:[#allocation2 + $0x68] sm:$0xff]
      %v891 = vld [vmem:[#allocation2 + $0x70] sm:$0xff]
      %v892 = vld [vmem:[#allocation2 + $0x78] sm:$0xff]
      %v893 = vld [vmem:[#allocation2 + $0x80] sm:$0xff]
      %v894 = vsel %vm813, 1, 0
      %v895 = vsel %vm814, 1, 0
      %v896 = vsel %vm815, 1, 0
      %v897 = vsel %vm816, 1, 0
      %v898 = vsel %vm817, 1, 0
      %v899 = vsel %vm818, 1, 0
      %v900 = vsel %vm819, 1, 0
      %v901 = vsel %vm820, 1, 0
      %v902 = vsel %vm821, 1, 0
      %v903 = vsel %vm822, 1, 0
      %v904 = vsel %vm823, 1, 0
      %v905 = vsel %vm824, 1, 0
      %v906 = vsel %vm825, 1, 0
      %v907 = vsel %vm826, 1, 0
      %v908 = vsel %vm827, 1, 0
      %v909 = vsel %vm828, 1, 0
      %v910 = vsel %vm829, 1, 0
      %v911 = vsel %vm830, 1, 0
      %v912 = vsel %vm831, 1, 0
      %v913 = vsel %vm832, 1, 0
      %v914 = vsel %vm833, 1, 0
      %v915 = vsel %vm834, 1, 0
      %v916 = vsel %vm835, 1, 0
      %v917 = vsel %vm836, 1, 0
      %v918 = vsel %vm837, 1, 0
      %v919 = vsel %vm838, 1, 0
      %v920 = vsel %vm839, 1, 0
      %v921 = vsel %vm840, 1, 0
      %v922 = vsel %vm841, 1, 0
      %v923 = vsel %vm842, 1, 0
      %v924 = vsel %vm843, 1, 0
      %v925 = vsel %vm844, 1, 0
      %vm926 = vcmp.eq.s32.totalorder %v894, 1
      %vm927 = vcmp.eq.s32.totalorder %v895, 1
      %vm928 = vcmp.eq.s32.totalorder %v896, 1
      %vm929 = vcmp.eq.s32.totalorder %v897, 1
      %vm930 = vcmp.eq.s32.totalorder %v898, 1
      %vm931 = vcmp.eq.s32.totalorder %v899, 1
      %vm932 = vcmp.eq.s32.totalorder %v900, 1
      %vm933 = vcmp.eq.s32.totalorder %v901, 1
      %vm934 = vcmp.eq.s32.totalorder %v902, 1
      %vm935 = vcmp.eq.s32.totalorder %v903, 1
      %vm936 = vcmp.eq.s32.totalorder %v904, 1
      %vm937 = vcmp.eq.s32.totalorder %v905, 1
      %vm938 = vcmp.eq.s32.totalorder %v906, 1
      %vm939 = vcmp.eq.s32.totalorder %v907, 1
      %vm940 = vcmp.eq.s32.totalorder %v908, 1
      %vm941 = vcmp.eq.s32.totalorder %v909, 1
      %vm942 = vcmp.eq.s32.totalorder %v910, 1
      %vm943 = vcmp.eq.s32.totalorder %v911, 1
      %vm944 = vcmp.eq.s32.totalorder %v912, 1
      %vm945 = vcmp.eq.s32.totalorder %v913, 1
      %vm946 = vcmp.eq.s32.totalorder %v914, 1
      %vm947 = vcmp.eq.s32.totalorder %v915, 1
      %vm948 = vcmp.eq.s32.totalorder %v916, 1
      %vm949 = vcmp.eq.s32.totalorder %v917, 1
      %vm950 = vcmp.eq.s32.totalorder %v918, 1
      %vm951 = vcmp.eq.s32.totalorder %v919, 1
      %vm952 = vcmp.eq.s32.totalorder %v920, 1
      %vm953 = vcmp.eq.s32.totalorder %v921, 1
      %vm954 = vcmp.eq.s32.totalorder %v922, 1
      %vm955 = vcmp.eq.s32.totalorder %v923, 1
      %vm956 = vcmp.eq.s32.totalorder %v924, 1
      %vm957 = vcmp.eq.s32.totalorder %v925, 1
      %vm958 = vmpackc.low %vm926, %vm926
      %vm959 = vmpackc.low %vm927, %vm927
      %vm960 = vmpackc.low %vm928, %vm928
      %vm961 = vmpackc.low %vm929, %vm929
      %vm962 = vmpackc.low %vm930, %vm930
      %vm963 = vmpackc.low %vm931, %vm931
      %vm964 = vmpackc.low %vm932, %vm932
      %vm965 = vmpackc.low %vm933, %vm933
      %vm966 = vmpackc.low %vm934, %vm934
      %vm967 = vmpackc.low %vm935, %vm935
      %vm968 = vmpackc.low %vm936, %vm936
      %vm969 = vmpackc.low %vm937, %vm937
      %vm970 = vmpackc.low %vm938, %vm938
      %vm971 = vmpackc.low %vm939, %vm939
      %vm972 = vmpackc.low %vm940, %vm940
      %vm973 = vmpackc.low %vm941, %vm941
      %vm974 = vmpackc.low %vm942, %vm942
      %vm975 = vmpackc.low %vm943, %vm943
      %vm976 = vmpackc.low %vm944, %vm944
      %vm977 = vmpackc.low %vm945, %vm945
      %vm978 = vmpackc.low %vm946, %vm946
      %vm979 = vmpackc.low %vm947, %vm947
      %vm980 = vmpackc.low %vm948, %vm948
      %vm981 = vmpackc.low %vm949, %vm949
      %vm982 = vmpackc.low %vm950, %vm950
      %vm983 = vmpackc.low %vm951, %vm951
      %vm984 = vmpackc.low %vm952, %vm952
      %vm985 = vmpackc.low %vm953, %vm953
      %vm986 = vmpackc.low %vm954, %vm954
      %vm987 = vmpackc.low %vm955, %vm955
      %vm988 = vmpackc.low %vm956, %vm956
      %vm989 = vmpackc.low %vm957, %vm957
      %v990 = vsel %vm958, 65537, 0
      %v991 = vsel %vm959, 65537, 0
      %v992 = vsel %vm960, 65537, 0
      %v993 = vsel %vm961, 65537, 0
      %v994 = vsel %vm962, 65537, 0
      %v995 = vsel %vm963, 65537, 0
      %v996 = vsel %vm964, 65537, 0
      %v997 = vsel %vm965, 65537, 0
      %v998 = vsel %vm966, 65537, 0
      %v999 = vsel %vm967, 65537, 0
      %v1000 = vsel %vm968, 65537, 0
      %v1001 = vsel %vm969, 65537, 0
      %v1002 = vsel %vm970, 65537, 0
      %v1003 = vsel %vm971, 65537, 0
      %v1004 = vsel %vm972, 65537, 0
      %v1005 = vsel %vm973, 65537, 0
      %v1006 = vsel %vm974, 65537, 0
      %v1007 = vsel %vm975, 65537, 0
      %v1008 = vsel %vm976, 65537, 0
      %v1009 = vsel %vm977, 65537, 0
      %v1010 = vsel %vm978, 65537, 0
      %v1011 = vsel %vm979, 65537, 0
      %v1012 = vsel %vm980, 65537, 0
      %v1013 = vsel %vm981, 65537, 0
      %v1014 = vsel %vm982, 65537, 0
      %v1015 = vsel %vm983, 65537, 0
      %v1016 = vsel %vm984, 65537, 0
      %v1017 = vsel %vm985, 65537, 0
      %v1018 = vsel %vm986, 65537, 0
      %v1019 = vsel %vm987, 65537, 0
      %v1020 = vsel %vm988, 65537, 0
      %v1021 = vsel %vm989, 65537, 0
      %v1022 = vunpack.c.l.b16 %v990
      %v1023 = vunpack.c.l.b16 %v991
      %v1024 = vunpack.c.l.b16 %v992
      %v1025 = vunpack.c.l.b16 %v993
      %v1026 = vunpack.c.l.b16 %v994
      %v1027 = vunpack.c.l.b16 %v995
      %v1028 = vunpack.c.l.b16 %v996
      %v1029 = vunpack.c.l.b16 %v997
      %v1030 = vunpack.c.l.b16 %v998
      %v1031 = vunpack.c.l.b16 %v999
      %v1032 = vunpack.c.l.b16 %v1000
      %v1033 = vunpack.c.l.b16 %v1001
      %v1034 = vunpack.c.l.b16 %v1002
      %v1035 = vunpack.c.l.b16 %v1003
      %v1036 = vunpack.c.l.b16 %v1004
      %v1037 = vunpack.c.l.b16 %v1005
      %v1038 = vunpack.c.l.b16 %v1006
      %v1039 = vunpack.c.l.b16 %v1007
      %v1040 = vunpack.c.l.b16 %v1008
      %v1041 = vunpack.c.l.b16 %v1009
      %v1042 = vunpack.c.l.b16 %v1010
      %v1043 = vunpack.c.l.b16 %v1011
      %v1044 = vunpack.c.l.b16 %v1012
      %v1045 = vunpack.c.l.b16 %v1013
      %v1046 = vunpack.c.l.b16 %v1014
      %v1047 = vunpack.c.l.b16 %v1015
      %v1048 = vunpack.c.l.b16 %v1016
      %v1049 = vunpack.c.l.b16 %v1017
      %v1050 = vunpack.c.l.b16 %v1018
      %v1051 = vunpack.c.l.b16 %v1019
      %v1052 = vunpack.c.l.b16 %v1020
      %v1053 = vunpack.c.l.b16 %v1021
      %v1054 = vpack.c.b16 %v1023, %v1022
      %v1055 = vpack.c.b16 %v1025, %v1024
      %v1056 = vpack.c.b16 %v1027, %v1026
      %v1057 = vpack.c.b16 %v1029, %v1028
      %v1058 = vpack.c.b16 %v1031, %v1030
      %v1059 = vpack.c.b16 %v1033, %v1032
      %v1060 = vpack.c.b16 %v1035, %v1034
      %v1061 = vpack.c.b16 %v1037, %v1036
      %v1062 = vpack.c.b16 %v1039, %v1038
      %v1063 = vpack.c.b16 %v1041, %v1040
      %v1064 = vpack.c.b16 %v1043, %v1042
      %v1065 = vpack.c.b16 %v1045, %v1044
      %v1066 = vpack.c.b16 %v1047, %v1046
      %v1067 = vpack.c.b16 %v1049, %v1048
      %v1068 = vpack.c.b16 %v1051, %v1050
      %v1069 = vpack.c.b16 %v1053, %v1052
      %vm1070 = vsmask.f32 7424
      %v1072 = vshll.u32 %v1054, 16
      %v1074 = vrot.slane %v1072, 1
      %v1075 = vshrl.u32 %v1054, 16
      %v1077 = vor.u32 %v1075, %v1074
      %v1079 = vshll.u32 %v1055, 16
      %v1081 = vrot.slane %v1079, 1
      %v1082 = vsel %vm1070, %v1077, %v1081
      %v1083 = vshrl.u32 %v1055, 16
      %v1085 = vor.u32 %v1083, %v1081
      %v1087 = vshll.u32 %v1056, 16
      %v1089 = vrot.slane %v1087, 1
      %v1090 = vsel %vm1070, %v1085, %v1089
      %v1091 = vshrl.u32 %v1056, 16
      %v1093 = vor.u32 %v1091, %v1089
      %v1095 = vshll.u32 %v1057, 16
      %v1097 = vrot.slane %v1095, 1
      %v1098 = vsel %vm1070, %v1093, %v1097
      %v1099 = vshrl.u32 %v1057, 16
      %v1101 = vor.u32 %v1099, %v1097
      %v1103 = vshll.u32 %v1058, 16
      %v1105 = vrot.slane %v1103, 1
      %v1106 = vsel %vm1070, %v1101, %v1105
      %v1107 = vshrl.u32 %v1058, 16
      %v1109 = vor.u32 %v1107, %v1105
      %v1111 = vshll.u32 %v1059, 16
      %v1113 = vrot.slane %v1111, 1
      %v1114 = vsel %vm1070, %v1109, %v1113
      %v1115 = vshrl.u32 %v1059, 16
      %v1117 = vor.u32 %v1115, %v1113
      %v1119 = vshll.u32 %v1060, 16
      %v1121 = vrot.slane %v1119, 1
      %v1122 = vsel %vm1070, %v1117, %v1121
      %v1123 = vshrl.u32 %v1060, 16
      %v1125 = vor.u32 %v1123, %v1121
      %v1127 = vshll.u32 %v1061, 16
      %v1129 = vrot.slane %v1127, 1
      %v1130 = vsel %vm1070, %v1125, %v1129
      %v1131 = vshrl.u32 %v1061, 16
      %v1133 = vor.u32 %v1131, %v1129
      %v1135 = vshll.u32 %v1062, 16
      %v1137 = vrot.slane %v1135, 1
      %v1138 = vsel %vm1070, %v1133, %v1137
      %v1139 = vshrl.u32 %v1062, 16
      %v1141 = vor.u32 %v1139, %v1137
      %v1143 = vshll.u32 %v1063, 16
      %v1145 = vrot.slane %v1143, 1
      %v1146 = vsel %vm1070, %v1141, %v1145
      %v1147 = vshrl.u32 %v1063, 16
      %v1149 = vor.u32 %v1147, %v1145
      %v1151 = vshll.u32 %v1064, 16
      %v1153 = vrot.slane %v1151, 1
      %v1154 = vsel %vm1070, %v1149, %v1153
      %v1155 = vshrl.u32 %v1064, 16
      %v1157 = vor.u32 %v1155, %v1153
      %v1159 = vshll.u32 %v1065, 16
      %v1161 = vrot.slane %v1159, 1
      %v1162 = vsel %vm1070, %v1157, %v1161
      %v1163 = vshrl.u32 %v1065, 16
      %v1165 = vor.u32 %v1163, %v1161
      %v1167 = vshll.u32 %v1066, 16
      %v1169 = vrot.slane %v1167, 1
      %v1170 = vsel %vm1070, %v1165, %v1169
      %v1171 = vshrl.u32 %v1066, 16
      %v1173 = vor.u32 %v1171, %v1169
      %v1175 = vshll.u32 %v1067, 16
      %v1177 = vrot.slane %v1175, 1
      %v1178 = vsel %vm1070, %v1173, %v1177
      %v1179 = vshrl.u32 %v1067, 16
      %v1181 = vor.u32 %v1179, %v1177
      %v1183 = vshll.u32 %v1068, 16
      %v1185 = vrot.slane %v1183, 1
      %v1186 = vsel %vm1070, %v1181, %v1185
      %v1187 = vshrl.u32 %v1068, 16
      %v1189 = vor.u32 %v1187, %v1185
      %v1191 = vshll.u32 %v1069, 16
      %v1193 = vrot.slane %v1191, 1
      %v1194 = vsel %vm1070, %v1189, %v1193
      %v1195 = vshrl.u32 %v1069, 16
      %v1197 = vor.u32 %v1195, %v1193
      %vm1198 = vcmp.ne.s16.totalorder %v1074, 0
      %vm1199 = vcmp.ne.s16.totalorder %v1082, 0
      %vm1200 = vcmp.ne.s16.totalorder %v1090, 0
      %vm1201 = vcmp.ne.s16.totalorder %v1098, 0
      %vm1202 = vcmp.ne.s16.totalorder %v1106, 0
      %vm1203 = vcmp.ne.s16.totalorder %v1114, 0
      %vm1204 = vcmp.ne.s16.totalorder %v1122, 0
      %vm1205 = vcmp.ne.s16.totalorder %v1130, 0
      %vm1206 = vcmp.ne.s16.totalorder %v1138, 0
      %vm1207 = vcmp.ne.s16.totalorder %v1146, 0
      %vm1208 = vcmp.ne.s16.totalorder %v1154, 0
      %vm1209 = vcmp.ne.s16.totalorder %v1162, 0
      %vm1210 = vcmp.ne.s16.totalorder %v1170, 0
      %vm1211 = vcmp.ne.s16.totalorder %v1178, 0
      %vm1212 = vcmp.ne.s16.totalorder %v1186, 0
      %vm1213 = vcmp.ne.s16.totalorder %v1194, 0
      %vm1214 = vcmp.ne.s16.totalorder %v1197, 0
      %v1215 = vsel %vm1198, %v877, 0
      %v1216 = vsel %vm1199, %v878, 0
      %v1217 = vsel %vm1200, %v879, 0
      %v1218 = vsel %vm1201, %v880, 0
      %v1219 = vsel %vm1202, %v881, 0
      %v1220 = vsel %vm1203, %v882, 0
      %v1221 = vsel %vm1204, %v883, 0
      %v1222 = vsel %vm1205, %v884, 0
      %v1223 = vsel %vm1206, %v885, 0
      %v1224 = vsel %vm1207, %v886, 0
      %v1225 = vsel %vm1208, %v887, 0
      %v1226 = vsel %vm1209, %v888, 0
      %v1227 = vsel %vm1210, %v889, 0
      %v1228 = vsel %vm1211, %v890, 0
      %v1229 = vsel %vm1212, %v891, 0
      %v1230 = vsel %vm1213, %v892, 0
      %v1231 = vsel %vm1214, %v893, 0
      %v1232 = vld [vmem:[%s223] sm:$0x3]
      %s1233 = scalar_lea.vmem %s223, 2
      %v1234 = vld [vmem:[%s1233] sm:$0x3]
      %vm1235 = vcmask 23552
      %v1237 = vsel %vm1235, %v878, 0
      %v1240 = vsel %vm1235, %v879, 0
      %v1243 = vsel %vm1235, %v880, 0
      %v1246 = vsel %vm1235, %v881, 0
      %v1249 = vsel %vm1235, %v882, 0
      %v1252 = vsel %vm1235, %v883, 0
      %v1255 = vsel %vm1235, %v884, 0
      %v1258 = vsel %vm1235, %v885, 0
      %v1261 = vsel %vm1235, %v886, 0
      %v1264 = vsel %vm1235, %v887, 0
      %v1267 = vsel %vm1235, %v888, 0
      %v1270 = vsel %vm1235, %v889, 0
      %v1273 = vsel %vm1235, %v890, 0
      %v1276 = vsel %vm1235, %v891, 0
      %v1279 = vsel %vm1235, %v892, 0
      %v1282 = vsel %vm1235, %v893, 0
      %vm1284 = vcmask 1040384
      %vm1285 = vcmask 1041408
      %v1286 = vsel %vm1284, 4294967295, 65535
      %v1287 = vsel %vm1285, %v1286, 0
      %v1289 = vand.u32 %v1234, %v1287
      %1291 = vmatprep.subr.bf16.mxu0 0
      %1292 = vmatpush1.bf16.msra.mxu0 %v1289
      %1293 = vmatprep.subr.bf16.mxu0 0
      %1294 = vmatpush1.bf16.msra.mxu0 0
      %1295 = vmatprep.subr.bf16.mxu0 0
      %1296 = vmatpush1.bf16.msra.mxu0 0
      %1297 = vmatprep.subr.bf16.mxu0 0
      %1298 = vmatpush1.bf16.msra.mxu0 0
      %1299 = vmatprep.subr.bf16.mxu0 0
      %1300 = vmatpush1.bf16.msra.mxu0 0
      %1301 = vmatprep.subr.bf16.mxu0 0
      %1302 = vmatpush1.bf16.msra.mxu0 0
      %1303 = vmatprep.subr.bf16.mxu0 0
      %1304 = vmatpush1.bf16.msra.mxu0 0
      %1305 = vmatprep.subr.bf16.mxu0 0
      %1306 = vmatpush1.bf16.msra.mxu0 0
      %1307 = vmatprep.subr.bf16.mxu0 0
      %1308 = vmatpush1.bf16.msra.mxu0 0
      %1309 = vmatprep.subr.bf16.mxu0 0
      %1310 = vmatpush1.bf16.msra.mxu0 0
      %1311 = vmatprep.subr.bf16.mxu0 0
      %1312 = vmatpush1.bf16.msra.mxu0 0
      %1313 = vmatprep.subr.bf16.mxu0 0
      %1314 = vmatpush1.bf16.msra.mxu0 0
      %1315 = vmatprep.subr.bf16.mxu0 0
      %1316 = vmatpush1.bf16.msra.mxu0 0
      %1317 = vmatprep.subr.bf16.mxu0 0
      %1318 = vmatpush1.bf16.msra.mxu0 0
      %1319 = vmatprep.subr.bf16.mxu0 0
      %1320 = vmatpush1.bf16.msra.mxu0 0
      %1321 = vmatprep.subr.bf16.mxu0 0
      %1322 = vmatpush1.bf16.msra.mxu0 0
      %1323 = vmatprep.mubr.bf16.mxu0 0
      %1324 = vmatmul.mubr.bf16.gmra.mrb[0].mxu0 %v1237
      %v1325 = vpop.f32.mrb[0].mxu0
      %v1326 = vadd.f32 0.0, %v1325
      %v1327 = vpop.f32.mrb[0].mxu0
      %v1328 = vpop.f32.mrb[0].mxu0
      %v1329 = vadd.f32 0.0, %v1328
      %v1330 = vpop.f32.mrb[0].mxu0
      %1331 = vmatprep.mubr.bf16.mxu0 0
      %1332 = vmatmul.mubr.bf16.gmra.mrb[0].mxu0 %v1240
      %v1333 = vpop.f32.mrb[0].mxu0
      %v1334 = vadd.f32 0.0, %v1333
      %v1335 = vpop.f32.mrb[0].mxu0
      %v1336 = vpop.f32.mrb[0].mxu0
      %v1337 = vadd.f32 0.0, %v1336
      %v1338 = vpop.f32.mrb[0].mxu0
      %1339 = vmatprep.mubr.bf16.mxu0 0
      %1340 = vmatmul.mubr.bf16.gmra.mrb[0].mxu0 %v1243
      %v1341 = vpop.f32.mrb[0].mxu0
      %v1342 = vadd.f32 0.0, %v1341
      %v1343 = vpop.f32.mrb[0].mxu0
      %v1344 = vpop.f32.mrb[0].mxu0
      %v1345 = vadd.f32 0.0, %v1344
      %v1346 = vpop.f32.mrb[0].mxu0
      %1347 = vmatprep.mubr.bf16.mxu0 0
      %1348 = vmatmul.mubr.bf16.gmra.mrb[0].mxu0 %v1246
      %v1349 = vpop.f32.mrb[0].mxu0
      %v1350 = vadd.f32 0.0, %v1349
      %v1351 = vpop.f32.mrb[0].mxu0
      %v1352 = vpop.f32.mrb[0].mxu0
      %v1353 = vadd.f32 0.0, %v1352
      %v1354 = vpop.f32.mrb[0].mxu0
      %1355 = vmatprep.mubr.bf16.mxu0 0
      %1356 = vmatmul.mubr.bf16.gmra.mrb[0].mxu0 %v1249
      %v1357 = vpop.f32.mrb[0].mxu0
      %v1358 = vadd.f32 0.0, %v1357
      %v1359 = vpop.f32.mrb[0].mxu0
      %v1360 = vpop.f32.mrb[0].mxu0
      %v1361 = vadd.f32 0.0, %v1360
      %v1362 = vpop.f32.mrb[0].mxu0
      %1363 = vmatprep.mubr.bf16.mxu0 0
      %1364 = vmatmul.mubr.bf16.gmra.mrb[0].mxu0 %v1252
      %v1365 = vpop.f32.mrb[0].mxu0
      %v1366 = vadd.f32 0.0, %v1365
      %v1367 = vpop.f32.mrb[0].mxu0
      %v1368 = vpop.f32.mrb[0].mxu0
      %v1369 = vadd.f32 0.0, %v1368
      %v1370 = vpop.f32.mrb[0].mxu0
      %1371 = vmatprep.mubr.bf16.mxu0 0
      %1372 = vmatmul.mubr.bf16.gmra.mrb[0].mxu0 %v1255
      %v1373 = vpop.f32.mrb[0].mxu0
      %v1374 = vadd.f32 0.0, %v1373
      %v1375 = vpop.f32.mrb[0].mxu0
      %v1376 = vpop.f32.mrb[0].mxu0
      %v1377 = vadd.f32 0.0, %v1376
      %v1378 = vpop.f32.mrb[0].mxu0
      %1379 = vmatprep.mubr.bf16.mxu0 0
      %1380 = vmatmul.mubr.bf16.gmra.mrb[0].mxu0 %v1258
      %v1381 = vpop.f32.mrb[0].mxu0
      %v1382 = vadd.f32 0.0, %v1381
      %v1383 = vpop.f32.mrb[0].mxu0
      %v1384 = vpop.f32.mrb[0].mxu0
      %v1385 = vadd.f32 0.0, %v1384
      %v1386 = vpop.f32.mrb[0].mxu0
      %1387 = vmatprep.mubr.bf16.mxu0 0
      %1388 = vmatmul.mubr.bf16.gmra.mrb[0].mxu0 %v1261
      %v1389 = vpop.f32.mrb[0].mxu0
      %v1390 = vadd.f32 0.0, %v1389
      %v1391 = vpop.f32.mrb[0].mxu0
      %v1392 = vpop.f32.mrb[0].mxu0
      %v1393 = vadd.f32 0.0, %v1392
      %v1394 = vpop.f32.mrb[0].mxu0
      %1395 = vmatprep.mubr.bf16.mxu0 0
      %1396 = vmatmul.mubr.bf16.gmra.mrb[0].mxu0 %v1264
      %v1397 = vpop.f32.mrb[0].mxu0
      %v1398 = vadd.f32 0.0, %v1397
      %v1399 = vpop.f32.mrb[0].mxu0
      %v1400 = vpop.f32.mrb[0].mxu0
      %v1401 = vadd.f32 0.0, %v1400
      %v1402 = vpop.f32.mrb[0].mxu0
      %1403 = vmatprep.mubr.bf16.mxu0 0
      %1404 = vmatmul.mubr.bf16.gmra.mrb[0].mxu0 %v1267
      %v1405 = vpop.f32.mrb[0].mxu0
      %v1406 = vadd.f32 0.0, %v1405
      %v1407 = vpop.f32.mrb[0].mxu0
      %v1408 = vpop.f32.mrb[0].mxu0
      %v1409 = vadd.f32 0.0, %v1408
      %v1410 = vpop.f32.mrb[0].mxu0
      %1411 = vmatprep.mubr.bf16.mxu0 0
      %1412 = vmatmul.mubr.bf16.gmra.mrb[0].mxu0 %v1270
      %v1413 = vpop.f32.mrb[0].mxu0
      %v1414 = vadd.f32 0.0, %v1413
      %v1415 = vpop.f32.mrb[0].mxu0
      %v1416 = vpop.f32.mrb[0].mxu0
      %v1417 = vadd.f32 0.0, %v1416
      %v1418 = vpop.f32.mrb[0].mxu0
      %1419 = vmatprep.mubr.bf16.mxu0 0
      %1420 = vmatmul.mubr.bf16.gmra.mrb[0].mxu0 %v1273
      %v1421 = vpop.f32.mrb[0].mxu0
      %v1422 = vadd.f32 0.0, %v1421
      %v1423 = vpop.f32.mrb[0].mxu0
      %v1424 = vpop.f32.mrb[0].mxu0
      %v1425 = vadd.f32 0.0, %v1424
      %v1426 = vpop.f32.mrb[0].mxu0
      %1427 = vmatprep.mubr.bf16.mxu0 0
      %1428 = vmatmul.mubr.bf16.gmra.mrb[0].mxu0 %v1276
      %v1429 = vpop.f32.mrb[0].mxu0
      %v1430 = vadd.f32 0.0, %v1429
      %v1431 = vpop.f32.mrb[0].mxu0
      %v1432 = vpop.f32.mrb[0].mxu0
      %v1433 = vadd.f32 0.0, %v1432
      %v1434 = vpop.f32.mrb[0].mxu0
      %1435 = vmatprep.mubr.bf16.mxu0 0
      %1436 = vmatmul.mubr.bf16.gmra.mrb[0].mxu0 %v1279
      %v1437 = vpop.f32.mrb[0].mxu0
      %v1438 = vadd.f32 0.0, %v1437
      %v1439 = vpop.f32.mrb[0].mxu0
      %v1440 = vpop.f32.mrb[0].mxu0
      %v1441 = vadd.f32 0.0, %v1440
      %v1442 = vpop.f32.mrb[0].mxu0
      %1443 = vmatprep.mubr.bf16.mxu0 0
      %1444 = vmatmul.mubr.bf16.gmra.mrb[0].mxu0 %v1282
      %v1445 = vpop.f32.mrb[0].mxu0
      %v1446 = vadd.f32 0.0, %v1445
      %v1447 = vpop.f32.mrb[0].mxu0
      %v1448 = vpop.f32.mrb[0].mxu0
      %v1449 = vadd.f32 0.0, %v1448
      %v1450 = vpop.f32.mrb[0].mxu0
      %1451 = vdwg.mxu0
      %vm1452 = vsmask.f32 256
      %v1454 = vshrl.u32 %v1215, 16
      %v1456 = vrot.slane %v1454, 7
      %v1458 = vshrl.u32 %v1216, 16
      %v1460 = vrot.slane %v1458, 7
      %v1461 = vshll.u32 %v1216, 16
      %v1463 = vor.u32 %v1460, %v1461
      %v1464 = vsel %vm1452, %v1456, %v1463
      %v1466 = vshrl.u32 %v1217, 16
      %v1468 = vrot.slane %v1466, 7
      %v1469 = vshll.u32 %v1217, 16
      %v1471 = vor.u32 %v1468, %v1469
      %v1472 = vsel %vm1452, %v1460, %v1471
      %v1474 = vshrl.u32 %v1218, 16
      %v1476 = vrot.slane %v1474, 7
      %v1477 = vshll.u32 %v1218, 16
      %v1479 = vor.u32 %v1476, %v1477
      %v1480 = vsel %vm1452, %v1468, %v1479
      %v1482 = vshrl.u32 %v1219, 16
      %v1484 = vrot.slane %v1482, 7
      %v1485 = vshll.u32 %v1219, 16
      %v1487 = vor.u32 %v1484, %v1485
      %v1488 = vsel %vm1452, %v1476, %v1487
      %v1490 = vshrl.u32 %v1220, 16
      %v1492 = vrot.slane %v1490, 7
      %v1493 = vshll.u32 %v1220, 16
      %v1495 = vor.u32 %v1492, %v1493
      %v1496 = vsel %vm1452, %v1484, %v1495
      %v1498 = vshrl.u32 %v1221, 16
      %v1500 = vrot.slane %v1498, 7
      %v1501 = vshll.u32 %v1221, 16
      %v1503 = vor.u32 %v1500, %v1501
      %v1504 = vsel %vm1452, %v1492, %v1503
      %v1506 = vshrl.u32 %v1222, 16
      %v1508 = vrot.slane %v1506, 7
      %v1509 = vshll.u32 %v1222, 16
      %v1511 = vor.u32 %v1508, %v1509
      %v1512 = vsel %vm1452, %v1500, %v1511
      %v1514 = vshrl.u32 %v1223, 16
      %v1516 = vrot.slane %v1514, 7
      %v1517 = vshll.u32 %v1223, 16
      %v1519 = vor.u32 %v1516, %v1517
      %v1520 = vsel %vm1452, %v1508, %v1519
      %v1522 = vshrl.u32 %v1224, 16
      %v1524 = vrot.slane %v1522, 7
      %v1525 = vshll.u32 %v1224, 16
      %v1527 = vor.u32 %v1524, %v1525
      %v1528 = vsel %vm1452, %v1516, %v1527
      %v1530 = vshrl.u32 %v1225, 16
      %v1532 = vrot.slane %v1530, 7
      %v1533 = vshll.u32 %v1225, 16
      %v1535 = vor.u32 %v1532, %v1533
      %v1536 = vsel %vm1452, %v1524, %v1535
      %v1538 = vshrl.u32 %v1226, 16
      %v1540 = vrot.slane %v1538, 7
      %v1541 = vshll.u32 %v1226, 16
      %v1543 = vor.u32 %v1540, %v1541
      %v1544 = vsel %vm1452, %v1532, %v1543
      %v1546 = vshrl.u32 %v1227, 16
      %v1548 = vrot.slane %v1546, 7
      %v1549 = vshll.u32 %v1227, 16
      %v1551 = vor.u32 %v1548, %v1549
      %v1552 = vsel %vm1452, %v1540, %v1551
      %v1554 = vshrl.u32 %v1228, 16
      %v1556 = vrot.slane %v1554, 7
      %v1557 = vshll.u32 %v1228, 16
      %v1559 = vor.u32 %v1556, %v1557
      %v1560 = vsel %vm1452, %v1548, %v1559
      %v1562 = vshrl.u32 %v1229, 16
      %v1564 = vrot.slane %v1562, 7
      %v1565 = vshll.u32 %v1229, 16
      %v1567 = vor.u32 %v1564, %v1565
      %v1568 = vsel %vm1452, %v1556, %v1567
      %v1570 = vshrl.u32 %v1230, 16
      %v1572 = vrot.slane %v1570, 7
      %v1573 = vshll.u32 %v1230, 16
      %v1575 = vor.u32 %v1572, %v1573
      %v1576 = vsel %vm1452, %v1564, %v1575
      %v1578 = vshrl.u32 %v1231, 16
      %v1580 = vrot.slane %v1578, 7
      %v1581 = vshll.u32 %v1231, 16
      %v1583 = vor.u32 %v1580, %v1581
      %v1584 = vsel %vm1452, %v1572, %v1583
      %v1586 = vsel %vm1235, %v1464, 0
      %v1589 = vsel %vm1235, %v1472, 0
      %v1592 = vsel %vm1235, %v1480, 0
      %v1595 = vsel %vm1235, %v1488, 0
      %v1598 = vsel %vm1235, %v1496, 0
      %v1601 = vsel %vm1235, %v1504, 0
      %v1604 = vsel %vm1235, %v1512, 0
      %v1607 = vsel %vm1235, %v1520, 0
      %v1610 = vsel %vm1235, %v1528, 0
      %v1613 = vsel %vm1235, %v1536, 0
      %v1616 = vsel %vm1235, %v1544, 0
      %v1619 = vsel %vm1235, %v1552, 0
      %v1622 = vsel %vm1235, %v1560, 0
      %v1625 = vsel %vm1235, %v1568, 0
      %v1628 = vsel %vm1235, %v1576, 0
      %v1631 = vsel %vm1235, %v1584, 0
      %v1634 = vand.u32 %v1232, %v1287
      %1636 = vmatprep.subr.bf16.mxu0 0
      %1637 = vmatpush1.bf16.msra.mxu0 %v1634
      %1638 = vmatprep.subr.bf16.mxu0 0
      %1639 = vmatpush1.bf16.msra.mxu0 0
      %1640 = vmatprep.subr.bf16.mxu0 0
      %1641 = vmatpush1.bf16.msra.mxu0 0
      %1642 = vmatprep.subr.bf16.mxu0 0
      %1643 = vmatpush1.bf16.msra.mxu0 0
      %1644 = vmatprep.subr.bf16.mxu0 0
      %1645 = vmatpush1.bf16.msra.mxu0 0
      %1646 = vmatprep.subr.bf16.mxu0 0
      %1647 = vmatpush1.bf16.msra.mxu0 0
      %1648 = vmatprep.subr.bf16.mxu0 0
      %1649 = vmatpush1.bf16.msra.mxu0 0
      %1650 = vmatprep.subr.bf16.mxu0 0
      %1651 = vmatpush1.bf16.msra.mxu0 0
      %1652 = vmatprep.subr.bf16.mxu0 0
      %1653 = vmatpush1.bf16.msra.mxu0 0
      %1654 = vmatprep.subr.bf16.mxu0 0
      %1655 = vmatpush1.bf16.msra.mxu0 0
      %1656 = vmatprep.subr.bf16.mxu0 0
      %1657 = vmatpush1.bf16.msra.mxu0 0
      %1658 = vmatprep.subr.bf16.mxu0 0
      %1659 = vmatpush1.bf16.msra.mxu0 0
      %1660 = vmatprep.subr.bf16.mxu0 0
      %1661 = vmatpush1.bf16.msra.mxu0 0
      %1662 = vmatprep.subr.bf16.mxu0 0
      %1663 = vmatpush1.bf16.msra.mxu0 0
      %1664 = vmatprep.subr.bf16.mxu0 0
      %1665 = vmatpush1.bf16.msra.mxu0 0
      %1666 = vmatprep.subr.bf16.mxu0 0
      %1667 = vmatpush1.bf16.msra.mxu0 0
      %1668 = vmatprep.mubr.bf16.mxu0 0
      %1669 = vmatmul.mubr.bf16.gmra.mrb[0].mxu0 %v1586
      %v1670 = vpop.f32.mrb[0].mxu0
      %v1671 = vadd.f32 %v1326, %v1670
      %v1672 = vpop.f32.mrb[0].mxu0
      %v1673 = vpop.f32.mrb[0].mxu0
      %v1674 = vadd.f32 %v1329, %v1673
      %v1675 = vpop.f32.mrb[0].mxu0
      %1676 = vmatprep.mubr.bf16.mxu0 0
      %1677 = vmatmul.mubr.bf16.gmra.mrb[0].mxu0 %v1589
      %v1678 = vpop.f32.mrb[0].mxu0
      %v1679 = vadd.f32 %v1334, %v1678
      %v1680 = vpop.f32.mrb[0].mxu0
      %v1681 = vpop.f32.mrb[0].mxu0
      %v1682 = vadd.f32 %v1337, %v1681
      %v1683 = vpop.f32.mrb[0].mxu0
      %1684 = vmatprep.mubr.bf16.mxu0 0
      %1685 = vmatmul.mubr.bf16.gmra.mrb[0].mxu0 %v1592
      %v1686 = vpop.f32.mrb[0].mxu0
      %v1687 = vadd.f32 %v1342, %v1686
      %v1688 = vpop.f32.mrb[0].mxu0
      %v1689 = vpop.f32.mrb[0].mxu0
      %v1690 = vadd.f32 %v1345, %v1689
      %v1691 = vpop.f32.mrb[0].mxu0
      %1692 = vmatprep.mubr.bf16.mxu0 0
      %1693 = vmatmul.mubr.bf16.gmra.mrb[0].mxu0 %v1595
      %v1694 = vpop.f32.mrb[0].mxu0
      %v1695 = vadd.f32 %v1350, %v1694
      %v1696 = vpop.f32.mrb[0].mxu0
      %v1697 = vpop.f32.mrb[0].mxu0
      %v1698 = vadd.f32 %v1353, %v1697
      %v1699 = vpop.f32.mrb[0].mxu0
      %1700 = vmatprep.mubr.bf16.mxu0 0
      %1701 = vmatmul.mubr.bf16.gmra.mrb[0].mxu0 %v1598
      %v1702 = vpop.f32.mrb[0].mxu0
      %v1703 = vadd.f32 %v1358, %v1702
      %v1704 = vpop.f32.mrb[0].mxu0
      %v1705 = vpop.f32.mrb[0].mxu0
      %v1706 = vadd.f32 %v1361, %v1705
      %v1707 = vpop.f32.mrb[0].mxu0
      %1708 = vmatprep.mubr.bf16.mxu0 0
      %1709 = vmatmul.mubr.bf16.gmra.mrb[0].mxu0 %v1601
      %v1710 = vpop.f32.mrb[0].mxu0
      %v1711 = vadd.f32 %v1366, %v1710
      %v1712 = vpop.f32.mrb[0].mxu0
      %v1713 = vpop.f32.mrb[0].mxu0
      %v1714 = vadd.f32 %v1369, %v1713
      %v1715 = vpop.f32.mrb[0].mxu0
      %1716 = vmatprep.mubr.bf16.mxu0 0
      %1717 = vmatmul.mubr.bf16.gmra.mrb[0].mxu0 %v1604
      %v1718 = vpop.f32.mrb[0].mxu0
      %v1719 = vadd.f32 %v1374, %v1718
      %v1720 = vpop.f32.mrb[0].mxu0
      %v1721 = vpop.f32.mrb[0].mxu0
      %v1722 = vadd.f32 %v1377, %v1721
      %v1723 = vpop.f32.mrb[0].mxu0
      %1724 = vmatprep.mubr.bf16.mxu0 0
      %1725 = vmatmul.mubr.bf16.gmra.mrb[0].mxu0 %v1607
      %v1726 = vpop.f32.mrb[0].mxu0
      %v1727 = vadd.f32 %v1382, %v1726
      %v1728 = vpop.f32.mrb[0].mxu0
      %v1729 = vpop.f32.mrb[0].mxu0
      %v1730 = vadd.f32 %v1385, %v1729
      %v1731 = vpop.f32.mrb[0].mxu0
      %1732 = vmatprep.mubr.bf16.mxu0 0
      %1733 = vmatmul.mubr.bf16.gmra.mrb[0].mxu0 %v1610
      %v1734 = vpop.f32.mrb[0].mxu0
      %v1735 = vadd.f32 %v1390, %v1734
      %v1736 = vpop.f32.mrb[0].mxu0
      %v1737 = vpop.f32.mrb[0].mxu0
      %v1738 = vadd.f32 %v1393, %v1737
      %v1739 = vpop.f32.mrb[0].mxu0
      %1740 = vmatprep.mubr.bf16.mxu0 0
      %1741 = vmatmul.mubr.bf16.gmra.mrb[0].mxu0 %v1613
      %v1742 = vpop.f32.mrb[0].mxu0
      %v1743 = vadd.f32 %v1398, %v1742
      %v1744 = vpop.f32.mrb[0].mxu0
      %v1745 = vpop.f32.mrb[0].mxu0
      %v1746 = vadd.f32 %v1401, %v1745
      %v1747 = vpop.f32.mrb[0].mxu0
      %1748 = vmatprep.mubr.bf16.mxu0 0
      %1749 = vmatmul.mubr.bf16.gmra.mrb[0].mxu0 %v1616
      %v1750 = vpop.f32.mrb[0].mxu0
      %v1751 = vadd.f32 %v1406, %v1750
      %v1752 = vpop.f32.mrb[0].mxu0
      %v1753 = vpop.f32.mrb[0].mxu0
      %v1754 = vadd.f32 %v1409, %v1753
      %v1755 = vpop.f32.mrb[0].mxu0
      %1756 = vmatprep.mubr.bf16.mxu0 0
      %1757 = vmatmul.mubr.bf16.gmra.mrb[0].mxu0 %v1619
      %v1758 = vpop.f32.mrb[0].mxu0
      %v1759 = vadd.f32 %v1414, %v1758
      %v1760 = vpop.f32.mrb[0].mxu0
      %v1761 = vpop.f32.mrb[0].mxu0
      %v1762 = vadd.f32 %v1417, %v1761
      %v1763 = vpop.f32.mrb[0].mxu0
      %1764 = vmatprep.mubr.bf16.mxu0 0
      %1765 = vmatmul.mubr.bf16.gmra.mrb[0].mxu0 %v1622
      %v1766 = vpop.f32.mrb[0].mxu0
      %v1767 = vadd.f32 %v1422, %v1766
      %v1768 = vpop.f32.mrb[0].mxu0
      %v1769 = vpop.f32.mrb[0].mxu0
      %v1770 = vadd.f32 %v1425, %v1769
      %v1771 = vpop.f32.mrb[0].mxu0
      %1772 = vmatprep.mubr.bf16.mxu0 0
      %1773 = vmatmul.mubr.bf16.gmra.mrb[0].mxu0 %v1625
      %v1774 = vpop.f32.mrb[0].mxu0
      %v1775 = vadd.f32 %v1430, %v1774
      %v1776 = vpop.f32.mrb[0].mxu0
      %v1777 = vpop.f32.mrb[0].mxu0
      %v1778 = vadd.f32 %v1433, %v1777
      %v1779 = vpop.f32.mrb[0].mxu0
      %1780 = vmatprep.mubr.bf16.mxu0 0
      %1781 = vmatmul.mubr.bf16.gmra.mrb[0].mxu0 %v1628
      %v1782 = vpop.f32.mrb[0].mxu0
      %v1783 = vadd.f32 %v1438, %v1782
      %v1784 = vpop.f32.mrb[0].mxu0
      %v1785 = vpop.f32.mrb[0].mxu0
      %v1786 = vadd.f32 %v1441, %v1785
      %v1787 = vpop.f32.mrb[0].mxu0
      %1788 = vmatprep.mubr.bf16.mxu0 0
      %1789 = vmatmul.mubr.bf16.gmra.mrb[0].mxu0 %v1631
      %v1790 = vpop.f32.mrb[0].mxu0
      %v1791 = vadd.f32 %v1446, %v1790
      %v1792 = vpop.f32.mrb[0].mxu0
      %v1793 = vpop.f32.mrb[0].mxu0
      %v1794 = vadd.f32 %v1449, %v1793
      %v1795 = vpop.f32.mrb[0].mxu0
      %1796 = vdwg.mxu0
      %v1797 = vld [vmem:[#allocation2 + $0x8] sm:$0xff]
      %v1798 = vld [vmem:[#allocation2 + $0x10] sm:$0xff]
      %v1799 = vld [vmem:[#allocation2 + $0x18] sm:$0xff]
      %v1800 = vld [vmem:[#allocation2 + $0x20] sm:$0xff]
      %v1801 = vld [vmem:[#allocation2 + $0x28] sm:$0xff]
      %v1802 = vld [vmem:[#allocation2 + $0x30] sm:$0xff]
      %v1803 = vld [vmem:[#allocation2 + $0x38] sm:$0xff]
      %v1804 = vld [vmem:[#allocation2 + $0x40] sm:$0xff]
      %v1805 = vld [vmem:[#allocation2 + $0x48] sm:$0xff]
      %v1806 = vld [vmem:[#allocation2 + $0x50] sm:$0xff]
      %v1807 = vld [vmem:[#allocation2 + $0x58] sm:$0xff]
      %v1808 = vld [vmem:[#allocation2 + $0x60] sm:$0xff]
      %v1809 = vld [vmem:[#allocation2 + $0x68] sm:$0xff]
      %v1810 = vld [vmem:[#allocation2 + $0x70] sm:$0xff]
      %v1811 = vld [vmem:[#allocation2 + $0x78] sm:$0xff]
      %v1812 = vld [vmem:[#allocation2 + $0x80] sm:$0xff]
      %v1813 = vld [vmem:[#allocation2 + $0x88] sm:$0x1]
      %v1814 = vsel %vm845, 1, 0
      %v1815 = vsel %vm846, 1, 0
      %v1816 = vsel %vm847, 1, 0
      %v1817 = vsel %vm848, 1, 0
      %v1818 = vsel %vm849, 1, 0
      %v1819 = vsel %vm850, 1, 0
      %v1820 = vsel %vm851, 1, 0
      %v1821 = vsel %vm852, 1, 0
      %v1822 = vsel %vm853, 1, 0
      %v1823 = vsel %vm854, 1, 0
      %v1824 = vsel %vm855, 1, 0
      %v1825 = vsel %vm856, 1, 0
      %v1826 = vsel %vm857, 1, 0
      %v1827 = vsel %vm858, 1, 0
      %v1828 = vsel %vm859, 1, 0
      %v1829 = vsel %vm860, 1, 0
      %v1830 = vsel %vm861, 1, 0
      %v1831 = vsel %vm862, 1, 0
      %v1832 = vsel %vm863, 1, 0
      %v1833 = vsel %vm864, 1, 0
      %v1834 = vsel %vm865, 1, 0
      %v1835 = vsel %vm866, 1, 0
      %v1836 = vsel %vm867, 1, 0
      %v1837 = vsel %vm868, 1, 0
      %v1838 = vsel %vm869, 1, 0
      %v1839 = vsel %vm870, 1, 0
      %v1840 = vsel %vm871, 1, 0
      %v1841 = vsel %vm872, 1, 0
      %v1842 = vsel %vm873, 1, 0
      %v1843 = vsel %vm874, 1, 0
      %v1844 = vsel %vm875, 1, 0
      %v1845 = vsel %vm876, 1, 0
      %vm1846 = vcmp.eq.s32.totalorder %v1814, 1
      %vm1847 = vcmp.eq.s32.totalorder %v1815, 1
      %vm1848 = vcmp.eq.s32.totalorder %v1816, 1
      %vm1849 = vcmp.eq.s32.totalorder %v1817, 1
      %vm1850 = vcmp.eq.s32.totalorder %v1818, 1
      %vm1851 = vcmp.eq.s32.totalorder %v1819, 1
      %vm1852 = vcmp.eq.s32.totalorder %v1820, 1
      %vm1853 = vcmp.eq.s32.totalorder %v1821, 1
      %vm1854 = vcmp.eq.s32.totalorder %v1822, 1
      %vm1855 = vcmp.eq.s32.totalorder %v1823, 1
      %vm1856 = vcmp.eq.s32.totalorder %v1824, 1
      %vm1857 = vcmp.eq.s32.totalorder %v1825, 1
      %vm1858 = vcmp.eq.s32.totalorder %v1826, 1
      %vm1859 = vcmp.eq.s32.totalorder %v1827, 1
      %vm1860 = vcmp.eq.s32.totalorder %v1828, 1
      %vm1861 = vcmp.eq.s32.totalorder %v1829, 1
      %vm1862 = vcmp.eq.s32.totalorder %v1830, 1
      %vm1863 = vcmp.eq.s32.totalorder %v1831, 1
      %vm1864 = vcmp.eq.s32.totalorder %v1832, 1
      %vm1865 = vcmp.eq.s32.totalorder %v1833, 1
      %vm1866 = vcmp.eq.s32.totalorder %v1834, 1
      %vm1867 = vcmp.eq.s32.totalorder %v1835, 1
      %vm1868 = vcmp.eq.s32.totalorder %v1836, 1
      %vm1869 = vcmp.eq.s32.totalorder %v1837, 1
      %vm1870 = vcmp.eq.s32.totalorder %v1838, 1
      %vm1871 = vcmp.eq.s32.totalorder %v1839, 1
      %vm1872 = vcmp.eq.s32.totalorder %v1840, 1
      %vm1873 = vcmp.eq.s32.totalorder %v1841, 1
      %vm1874 = vcmp.eq.s32.totalorder %v1842, 1
      %vm1875 = vcmp.eq.s32.totalorder %v1843, 1
      %vm1876 = vcmp.eq.s32.totalorder %v1844, 1
      %vm1877 = vcmp.eq.s32.totalorder %v1845, 1
      %vm1878 = vmpackc.low %vm1846, %vm1846
      %vm1879 = vmpackc.low %vm1847, %vm1847
      %vm1880 = vmpackc.low %vm1848, %vm1848
      %vm1881 = vmpackc.low %vm1849, %vm1849
      %vm1882 = vmpackc.low %vm1850, %vm1850
      %vm1883 = vmpackc.low %vm1851, %vm1851
      %vm1884 = vmpackc.low %vm1852, %vm1852
      %vm1885 = vmpackc.low %vm1853, %vm1853
      %vm1886 = vmpackc.low %vm1854, %vm1854
      %vm1887 = vmpackc.low %vm1855, %vm1855
      %vm1888 = vmpackc.low %vm1856, %vm1856
      %vm1889 = vmpackc.low %vm1857, %vm1857
      %vm1890 = vmpackc.low %vm1858, %vm1858
      %vm1891 = vmpackc.low %vm1859, %vm1859
      %vm1892 = vmpackc.low %vm1860, %vm1860
      %vm1893 = vmpackc.low %vm1861, %vm1861
      %vm1894 = vmpackc.low %vm1862, %vm1862
      %vm1895 = vmpackc.low %vm1863, %vm1863
      %vm1896 = vmpackc.low %vm1864, %vm1864
      %vm1897 = vmpackc.low %vm1865, %vm1865
      %vm1898 = vmpackc.low %vm1866, %vm1866
      %vm1899 = vmpackc.low %vm1867, %vm1867
      %vm1900 = vmpackc.low %vm1868, %vm1868
      %vm1901 = vmpackc.low %vm1869, %vm1869
      %vm1902 = vmpackc.low %vm1870, %vm1870
      %vm1903 = vmpackc.low %vm1871, %vm1871
      %vm1904 = vmpackc.low %vm1872, %vm1872
      %vm1905 = vmpackc.low %vm1873, %vm1873
      %vm1906 = vmpackc.low %vm1874, %vm1874
      %vm1907 = vmpackc.low %vm1875, %vm1875
      %vm1908 = vmpackc.low %vm1876, %vm1876
      %vm1909 = vmpackc.low %vm1877, %vm1877
      %v1910 = vsel %vm1878, 65537, 0
      %v1911 = vsel %vm1879, 65537, 0
      %v1912 = vsel %vm1880, 65537, 0
      %v1913 = vsel %vm1881, 65537, 0
      %v1914 = vsel %vm1882, 65537, 0
      %v1915 = vsel %vm1883, 65537, 0
      %v1916 = vsel %vm1884, 65537, 0
      %v1917 = vsel %vm1885, 65537, 0
      %v1918 = vsel %vm1886, 65537, 0
      %v1919 = vsel %vm1887, 65537, 0
      %v1920 = vsel %vm1888, 65537, 0
      %v1921 = vsel %vm1889, 65537, 0
      %v1922 = vsel %vm1890, 65537, 0
      %v1923 = vsel %vm1891, 65537, 0
      %v1924 = vsel %vm1892, 65537, 0
      %v1925 = vsel %vm1893, 65537, 0
      %v1926 = vsel %vm1894, 65537, 0
      %v1927 = vsel %vm1895, 65537, 0
      %v1928 = vsel %vm1896, 65537, 0
      %v1929 = vsel %vm1897, 65537, 0
      %v1930 = vsel %vm1898, 65537, 0
      %v1931 = vsel %vm1899, 65537, 0
      %v1932 = vsel %vm1900, 65537, 0
      %v1933 = vsel %vm1901, 65537, 0
      %v1934 = vsel %vm1902, 65537, 0
      %v1935 = vsel %vm1903, 65537, 0
      %v1936 = vsel %vm1904, 65537, 0
      %v1937 = vsel %vm1905, 65537, 0
      %v1938 = vsel %vm1906, 65537, 0
      %v1939 = vsel %vm1907, 65537, 0
      %v1940 = vsel %vm1908, 65537, 0
      %v1941 = vsel %vm1909, 65537, 0
      %v1942 = vunpack.c.l.b16 %v1910
      %v1943 = vunpack.c.l.b16 %v1911
      %v1944 = vunpack.c.l.b16 %v1912
      %v1945 = vunpack.c.l.b16 %v1913
      %v1946 = vunpack.c.l.b16 %v1914
      %v1947 = vunpack.c.l.b16 %v1915
      %v1948 = vunpack.c.l.b16 %v1916
      %v1949 = vunpack.c.l.b16 %v1917
      %v1950 = vunpack.c.l.b16 %v1918
      %v1951 = vunpack.c.l.b16 %v1919
      %v1952 = vunpack.c.l.b16 %v1920
      %v1953 = vunpack.c.l.b16 %v1921
      %v1954 = vunpack.c.l.b16 %v1922
      %v1955 = vunpack.c.l.b16 %v1923
      %v1956 = vunpack.c.l.b16 %v1924
      %v1957 = vunpack.c.l.b16 %v1925
      %v1958 = vunpack.c.l.b16 %v1926
      %v1959 = vunpack.c.l.b16 %v1927
      %v1960 = vunpack.c.l.b16 %v1928
      %v1961 = vunpack.c.l.b16 %v1929
      %v1962 = vunpack.c.l.b16 %v1930
      %v1963 = vunpack.c.l.b16 %v1931
      %v1964 = vunpack.c.l.b16 %v1932
      %v1965 = vunpack.c.l.b16 %v1933
      %v1966 = vunpack.c.l.b16 %v1934
      %v1967 = vunpack.c.l.b16 %v1935
      %v1968 = vunpack.c.l.b16 %v1936
      %v1969 = vunpack.c.l.b16 %v1937
      %v1970 = vunpack.c.l.b16 %v1938
      %v1971 = vunpack.c.l.b16 %v1939
      %v1972 = vunpack.c.l.b16 %v1940
      %v1973 = vunpack.c.l.b16 %v1941
      %v1974 = vpack.c.b16 %v1943, %v1942
      %v1975 = vpack.c.b16 %v1945, %v1944
      %v1976 = vpack.c.b16 %v1947, %v1946
      %v1977 = vpack.c.b16 %v1949, %v1948
      %v1978 = vpack.c.b16 %v1951, %v1950
      %v1979 = vpack.c.b16 %v1953, %v1952
      %v1980 = vpack.c.b16 %v1955, %v1954
      %v1981 = vpack.c.b16 %v1957, %v1956
      %v1982 = vpack.c.b16 %v1959, %v1958
      %v1983 = vpack.c.b16 %v1961, %v1960
      %v1984 = vpack.c.b16 %v1963, %v1962
      %v1985 = vpack.c.b16 %v1965, %v1964
      %v1986 = vpack.c.b16 %v1967, %v1966
      %v1987 = vpack.c.b16 %v1969, %v1968
      %v1988 = vpack.c.b16 %v1971, %v1970
      %v1989 = vpack.c.b16 %v1973, %v1972
      %v1991 = vshrl.u32 %v1974, 16
      %v1993 = vrot.slane %v1991, 7
      %v1994 = vshll.u32 %v1974, 16
      %v1996 = vor.u32 %v1993, %v1994
      %v1998 = vshrl.u32 %v1975, 16
      %v2000 = vrot.slane %v1998, 7
      %v2001 = vshll.u32 %v1975, 16
      %v2003 = vor.u32 %v2000, %v2001
      %v2004 = vsel %vm1452, %v1993, %v2003
      %v2006 = vshrl.u32 %v1976, 16
      %v2008 = vrot.slane %v2006, 7
      %v2009 = vshll.u32 %v1976, 16
      %v2011 = vor.u32 %v2008, %v2009
      %v2012 = vsel %vm1452, %v2000, %v2011
      %v2014 = vshrl.u32 %v1977, 16
      %v2016 = vrot.slane %v2014, 7
      %v2017 = vshll.u32 %v1977, 16
      %v2019 = vor.u32 %v2016, %v2017
      %v2020 = vsel %vm1452, %v2008, %v2019
      %v2022 = vshrl.u32 %v1978, 16
      %v2024 = vrot.slane %v2022, 7
      %v2025 = vshll.u32 %v1978, 16
      %v2027 = vor.u32 %v2024, %v2025
      %v2028 = vsel %vm1452, %v2016, %v2027
      %v2030 = vshrl.u32 %v1979, 16
      %v2032 = vrot.slane %v2030, 7
      %v2033 = vshll.u32 %v1979, 16
      %v2035 = vor.u32 %v2032, %v2033
      %v2036 = vsel %vm1452, %v2024, %v2035
      %v2038 = vshrl.u32 %v1980, 16
      %v2040 = vrot.slane %v2038, 7
      %v2041 = vshll.u32 %v1980, 16
      %v2043 = vor.u32 %v2040, %v2041
      %v2044 = vsel %vm1452, %v2032, %v2043
      %v2046 = vshrl.u32 %v1981, 16
      %v2048 = vrot.slane %v2046, 7
      %v2049 = vshll.u32 %v1981, 16
      %v2051 = vor.u32 %v2048, %v2049
      %v2052 = vsel %vm1452, %v2040, %v2051
      %v2054 = vshrl.u32 %v1982, 16
      %v2056 = vrot.slane %v2054, 7
      %v2057 = vshll.u32 %v1982, 16
      %v2059 = vor.u32 %v2056, %v2057
      %v2060 = vsel %vm1452, %v2048, %v2059
      %v2062 = vshrl.u32 %v1983, 16
      %v2064 = vrot.slane %v2062, 7
      %v2065 = vshll.u32 %v1983, 16
      %v2067 = vor.u32 %v2064, %v2065
      %v2068 = vsel %vm1452, %v2056, %v2067
      %v2070 = vshrl.u32 %v1984, 16
      %v2072 = vrot.slane %v2070, 7
      %v2073 = vshll.u32 %v1984, 16
      %v2075 = vor.u32 %v2072, %v2073
      %v2076 = vsel %vm1452, %v2064, %v2075
      %v2078 = vshrl.u32 %v1985, 16
      %v2080 = vrot.slane %v2078, 7
      %v2081 = vshll.u32 %v1985, 16
      %v2083 = vor.u32 %v2080, %v2081
      %v2084 = vsel %vm1452, %v2072, %v2083
      %v2086 = vshrl.u32 %v1986, 16
      %v2088 = vrot.slane %v2086, 7
      %v2089 = vshll.u32 %v1986, 16
      %v2091 = vor.u32 %v2088, %v2089
      %v2092 = vsel %vm1452, %v2080, %v2091
      %v2094 = vshrl.u32 %v1987, 16
      %v2096 = vrot.slane %v2094, 7
      %v2097 = vshll.u32 %v1987, 16
      %v2099 = vor.u32 %v2096, %v2097
      %v2100 = vsel %vm1452, %v2088, %v2099
      %v2102 = vshrl.u32 %v1988, 16
      %v2104 = vrot.slane %v2102, 7
      %v2105 = vshll.u32 %v1988, 16
      %v2107 = vor.u32 %v2104, %v2105
      %v2108 = vsel %vm1452, %v2096, %v2107
      %v2110 = vshrl.u32 %v1989, 16
      %v2112 = vrot.slane %v2110, 7
      %v2113 = vshll.u32 %v1989, 16
      %v2115 = vor.u32 %v2112, %v2113
      %v2116 = vsel %vm1452, %v2104, %v2115
      %vm2117 = vcmp.ne.s16.totalorder %v1996, 0
      %vm2118 = vcmp.ne.s16.totalorder %v2004, 0
      %vm2119 = vcmp.ne.s16.totalorder %v2012, 0
      %vm2120 = vcmp.ne.s16.totalorder %v2020, 0
      %vm2121 = vcmp.ne.s16.totalorder %v2028, 0
      %vm2122 = vcmp.ne.s16.totalorder %v2036, 0
      %vm2123 = vcmp.ne.s16.totalorder %v2044, 0
      %vm2124 = vcmp.ne.s16.totalorder %v2052, 0
      %vm2125 = vcmp.ne.s16.totalorder %v2060, 0
      %vm2126 = vcmp.ne.s16.totalorder %v2068, 0
      %vm2127 = vcmp.ne.s16.totalorder %v2076, 0
      %vm2128 = vcmp.ne.s16.totalorder %v2084, 0
      %vm2129 = vcmp.ne.s16.totalorder %v2092, 0
      %vm2130 = vcmp.ne.s16.totalorder %v2100, 0
      %vm2131 = vcmp.ne.s16.totalorder %v2108, 0
      %vm2132 = vcmp.ne.s16.totalorder %v2116, 0
      %vm2133 = vcmp.ne.s16.totalorder %v2112, 0
      %v2134 = vsel %vm2117, %v1797, 0
      %v2135 = vsel %vm2118, %v1798, 0
      %v2136 = vsel %vm2119, %v1799, 0
      %v2137 = vsel %vm2120, %v1800, 0
      %v2138 = vsel %vm2121, %v1801, 0
      %v2139 = vsel %vm2122, %v1802, 0
      %v2140 = vsel %vm2123, %v1803, 0
      %v2141 = vsel %vm2124, %v1804, 0
      %v2142 = vsel %vm2125, %v1805, 0
      %v2143 = vsel %vm2126, %v1806, 0
      %v2144 = vsel %vm2127, %v1807, 0
      %v2145 = vsel %vm2128, %v1808, 0
      %v2146 = vsel %vm2129, %v1809, 0
      %v2147 = vsel %vm2130, %v1810, 0
      %v2148 = vsel %vm2131, %v1811, 0
      %v2149 = vsel %vm2132, %v1812, 0
      %v2150 = vsel %vm2133, %v1813, 0
      %s2151 = scalar_lea.vmem %s223, 4
      %v2152 = vld [vmem:[%s2151] sm:$0x3]
      %v2154 = vshrl.u32 %v2134, 16
      %v2156 = vshll.u32 %v2134, 16
      %v2158 = vrot.slane %v2156, 1
      %v2159 = vor.u32 %v2154, %v2158
      %v2161 = vshll.u32 %v2135, 16
      %v2163 = vrot.slane %v2161, 1
      %v2164 = vsel %vm1070, %v2159, %v2163
      %v2165 = vshrl.u32 %v2135, 16
      %v2167 = vor.u32 %v2165, %v2163
      %v2169 = vshll.u32 %v2136, 16
      %v2171 = vrot.slane %v2169, 1
      %v2172 = vsel %vm1070, %v2167, %v2171
      %v2173 = vshrl.u32 %v2136, 16
      %v2175 = vor.u32 %v2173, %v2171
      %v2177 = vshll.u32 %v2137, 16
      %v2179 = vrot.slane %v2177, 1
      %v2180 = vsel %vm1070, %v2175, %v2179
      %v2181 = vshrl.u32 %v2137, 16
      %v2183 = vor.u32 %v2181, %v2179
      %v2185 = vshll.u32 %v2138, 16
      %v2187 = vrot.slane %v2185, 1
      %v2188 = vsel %vm1070, %v2183, %v2187
      %v2189 = vshrl.u32 %v2138, 16
      %v2191 = vor.u32 %v2189, %v2187
      %v2193 = vshll.u32 %v2139, 16
      %v2195 = vrot.slane %v2193, 1
      %v2196 = vsel %vm1070, %v2191, %v2195
      %v2197 = vshrl.u32 %v2139, 16
      %v2199 = vor.u32 %v2197, %v2195
      %v2201 = vshll.u32 %v2140, 16
      %v2203 = vrot.slane %v2201, 1
      %v2204 = vsel %vm1070, %v2199, %v2203
      %v2205 = vshrl.u32 %v2140, 16
      %v2207 = vor.u32 %v2205, %v2203
      %v2209 = vshll.u32 %v2141, 16
      %v2211 = vrot.slane %v2209, 1
      %v2212 = vsel %vm1070, %v2207, %v2211
      %v2213 = vshrl.u32 %v2141, 16
      %v2215 = vor.u32 %v2213, %v2211
      %v2217 = vshll.u32 %v2142, 16
      %v2219 = vrot.slane %v2217, 1
      %v2220 = vsel %vm1070, %v2215, %v2219
      %v2221 = vshrl.u32 %v2142, 16
      %v2223 = vor.u32 %v2221, %v2219
      %v2225 = vshll.u32 %v2143, 16
      %v2227 = vrot.slane %v2225, 1
      %v2228 = vsel %vm1070, %v2223, %v2227
      %v2229 = vshrl.u32 %v2143, 16
      %v2231 = vor.u32 %v2229, %v2227
      %v2233 = vshll.u32 %v2144, 16
      %v2235 = vrot.slane %v2233, 1
      %v2236 = vsel %vm1070, %v2231, %v2235
      %v2237 = vshrl.u32 %v2144, 16
      %v2239 = vor.u32 %v2237, %v2235
      %v2241 = vshll.u32 %v2145, 16
      %v2243 = vrot.slane %v2241, 1
      %v2244 = vsel %vm1070, %v2239, %v2243
      %v2245 = vshrl.u32 %v2145, 16
      %v2247 = vor.u32 %v2245, %v2243
      %v2249 = vshll.u32 %v2146, 16
      %v2251 = vrot.slane %v2249, 1
      %v2252 = vsel %vm1070, %v2247, %v2251
      %v2253 = vshrl.u32 %v2146, 16
      %v2255 = vor.u32 %v2253, %v2251
      %v2257 = vshll.u32 %v2147, 16
      %v2259 = vrot.slane %v2257, 1
      %v2260 = vsel %vm1070, %v2255, %v2259
      %v2261 = vshrl.u32 %v2147, 16
      %v2263 = vor.u32 %v2261, %v2259
      %v2265 = vshll.u32 %v2148, 16
      %v2267 = vrot.slane %v2265, 1
      %v2268 = vsel %vm1070, %v2263, %v2267
      %v2269 = vshrl.u32 %v2148, 16
      %v2271 = vor.u32 %v2269, %v2267
      %v2273 = vshll.u32 %v2149, 16
      %v2275 = vrot.slane %v2273, 1
      %v2276 = vsel %vm1070, %v2271, %v2275
      %v2277 = vshrl.u32 %v2149, 16
      %v2279 = vor.u32 %v2277, %v2275
      %v2281 = vshll.u32 %v2150, 16
      %v2283 = vrot.slane %v2281, 1
      %v2284 = vsel %vm1070, %v2279, %v2283
      %v2286 = vsel %vm1235, %v2164, 0
      %v2289 = vsel %vm1235, %v2172, 0
      %v2292 = vsel %vm1235, %v2180, 0
      %v2295 = vsel %vm1235, %v2188, 0
      %v2298 = vsel %vm1235, %v2196, 0
      %v2301 = vsel %vm1235, %v2204, 0
      %v2304 = vsel %vm1235, %v2212, 0
      %v2307 = vsel %vm1235, %v2220, 0
      %v2310 = vsel %vm1235, %v2228, 0
      %v2313 = vsel %vm1235, %v2236, 0
      %v2316 = vsel %vm1235, %v2244, 0
      %v2319 = vsel %vm1235, %v2252, 0
      %v2322 = vsel %vm1235, %v2260, 0
      %v2325 = vsel %vm1235, %v2268, 0
      %v2328 = vsel %vm1235, %v2276, 0
      %v2331 = vsel %vm1235, %v2284, 0
      %v2334 = vand.u32 %v2152, %v1287
      %2336 = vmatprep.subr.bf16.mxu0 0
      %2337 = vmatpush1.bf16.msra.mxu0 %v2334
      %2338 = vmatprep.subr.bf16.mxu0 0
      %2339 = vmatpush1.bf16.msra.mxu0 0
      %2340 = vmatprep.subr.bf16.mxu0 0
      %2341 = vmatpush1.bf16.msra.mxu0 0
      %2342 = vmatprep.subr.bf16.mxu0 0
      %2343 = vmatpush1.bf16.msra.mxu0 0
      %2344 = vmatprep.subr.bf16.mxu0 0
      %2345 = vmatpush1.bf16.msra.mxu0 0
      %2346 = vmatprep.subr.bf16.mxu0 0
      %2347 = vmatpush1.bf16.msra.mxu0 0
      %2348 = vmatprep.subr.bf16.mxu0 0
      %2349 = vmatpush1.bf16.msra.mxu0 0
      %2350 = vmatprep.subr.bf16.mxu0 0
      %2351 = vmatpush1.bf16.msra.mxu0 0
      %2352 = vmatprep.subr.bf16.mxu0 0
      %2353 = vmatpush1.bf16.msra.mxu0 0
      %2354 = vmatprep.subr.bf16.mxu0 0
      %2355 = vmatpush1.bf16.msra.mxu0 0
      %2356 = vmatprep.subr.bf16.mxu0 0
      %2357 = vmatpush1.bf16.msra.mxu0 0
      %2358 = vmatprep.subr.bf16.mxu0 0
      %2359 = vmatpush1.bf16.msra.mxu0 0
      %2360 = vmatprep.subr.bf16.mxu0 0
      %2361 = vmatpush1.bf16.msra.mxu0 0
      %2362 = vmatprep.subr.bf16.mxu0 0
      %2363 = vmatpush1.bf16.msra.mxu0 0
      %2364 = vmatprep.subr.bf16.mxu0 0
      %2365 = vmatpush1.bf16.msra.mxu0 0
      %2366 = vmatprep.subr.bf16.mxu0 0
      %2367 = vmatpush1.bf16.msra.mxu0 0
      %2368 = vmatprep.mubr.bf16.mxu0 0
      %2369 = vmatmul.mubr.bf16.gmra.mrb[0].mxu0 %v2286
      %v2370 = vpop.f32.mrb[0].mxu0
      %v2371 = vadd.f32 0.0, %v2370
      %v2372 = vpop.f32.mrb[0].mxu0
      %v2373 = vpop.f32.mrb[0].mxu0
      %v2374 = vadd.f32 0.0, %v2373
      %v2375 = vpop.f32.mrb[0].mxu0
      %2376 = vmatprep.mubr.bf16.mxu0 0
      %2377 = vmatmul.mubr.bf16.gmra.mrb[0].mxu0 %v2289
      %v2378 = vpop.f32.mrb[0].mxu0
      %v2379 = vadd.f32 0.0, %v2378
      %v2380 = vpop.f32.mrb[0].mxu0
      %v2381 = vpop.f32.mrb[0].mxu0
      %v2382 = vadd.f32 0.0, %v2381
      %v2383 = vpop.f32.mrb[0].mxu0
      %2384 = vmatprep.mubr.bf16.mxu0 0
      %2385 = vmatmul.mubr.bf16.gmra.mrb[0].mxu0 %v2292
      %v2386 = vpop.f32.mrb[0].mxu0
      %v2387 = vadd.f32 0.0, %v2386
      %v2388 = vpop.f32.mrb[0].mxu0
      %v2389 = vpop.f32.mrb[0].mxu0
      %v2390 = vadd.f32 0.0, %v2389
      %v2391 = vpop.f32.mrb[0].mxu0
      %2392 = vmatprep.mubr.bf16.mxu0 0
      %2393 = vmatmul.mubr.bf16.gmra.mrb[0].mxu0 %v2295
      %v2394 = vpop.f32.mrb[0].mxu0
      %v2395 = vadd.f32 0.0, %v2394
      %v2396 = vpop.f32.mrb[0].mxu0
      %v2397 = vpop.f32.mrb[0].mxu0
      %v2398 = vadd.f32 0.0, %v2397
      %v2399 = vpop.f32.mrb[0].mxu0
      %2400 = vmatprep.mubr.bf16.mxu0 0
      %2401 = vmatmul.mubr.bf16.gmra.mrb[0].mxu0 %v2298
      %v2402 = vpop.f32.mrb[0].mxu0
      %v2403 = vadd.f32 0.0, %v2402
      %v2404 = vpop.f32.mrb[0].mxu0
      %v2405 = vpop.f32.mrb[0].mxu0
      %v2406 = vadd.f32 0.0, %v2405
      %v2407 = vpop.f32.mrb[0].mxu0
      %2408 = vmatprep.mubr.bf16.mxu0 0
      %2409 = vmatmul.mubr.bf16.gmra.mrb[0].mxu0 %v2301
      %v2410 = vpop.f32.mrb[0].mxu0
      %v2411 = vadd.f32 0.0, %v2410
      %v2412 = vpop.f32.mrb[0].mxu0
      %v2413 = vpop.f32.mrb[0].mxu0
      %v2414 = vadd.f32 0.0, %v2413
      %v2415 = vpop.f32.mrb[0].mxu0
      %2416 = vmatprep.mubr.bf16.mxu0 0
      %2417 = vmatmul.mubr.bf16.gmra.mrb[0].mxu0 %v2304
      %v2418 = vpop.f32.mrb[0].mxu0
      %v2419 = vadd.f32 0.0, %v2418
      %v2420 = vpop.f32.mrb[0].mxu0
      %v2421 = vpop.f32.mrb[0].mxu0
      %v2422 = vadd.f32 0.0, %v2421
      %v2423 = vpop.f32.mrb[0].mxu0
      %2424 = vmatprep.mubr.bf16.mxu0 0
      %2425 = vmatmul.mubr.bf16.gmra.mrb[0].mxu0 %v2307
      %v2426 = vpop.f32.mrb[0].mxu0
      %v2427 = vadd.f32 0.0, %v2426
      %v2428 = vpop.f32.mrb[0].mxu0
      %v2429 = vpop.f32.mrb[0].mxu0
      %v2430 = vadd.f32 0.0, %v2429
      %v2431 = vpop.f32.mrb[0].mxu0
      %2432 = vmatprep.mubr.bf16.mxu0 0
      %2433 = vmatmul.mubr.bf16.gmra.mrb[0].mxu0 %v2310
      %v2434 = vpop.f32.mrb[0].mxu0
      %v2435 = vadd.f32 0.0, %v2434
      %v2436 = vpop.f32.mrb[0].mxu0
      %v2437 = vpop.f32.mrb[0].mxu0
      %v2438 = vadd.f32 0.0, %v2437
      %v2439 = vpop.f32.mrb[0].mxu0
      %2440 = vmatprep.mubr.bf16.mxu0 0
      %2441 = vmatmul.mubr.bf16.gmra.mrb[0].mxu0 %v2313
      %v2442 = vpop.f32.mrb[0].mxu0
      %v2443 = vadd.f32 0.0, %v2442
      %v2444 = vpop.f32.mrb[0].mxu0
      %v2445 = vpop.f32.mrb[0].mxu0
      %v2446 = vadd.f32 0.0, %v2445
      %v2447 = vpop.f32.mrb[0].mxu0
      %2448 = vmatprep.mubr.bf16.mxu0 0
      %2449 = vmatmul.mubr.bf16.gmra.mrb[0].mxu0 %v2316
      %v2450 = vpop.f32.mrb[0].mxu0
      %v2451 = vadd.f32 0.0, %v2450
      %v2452 = vpop.f32.mrb[0].mxu0
      %v2453 = vpop.f32.mrb[0].mxu0
      %v2454 = vadd.f32 0.0, %v2453
      %v2455 = vpop.f32.mrb[0].mxu0
      %2456 = vmatprep.mubr.bf16.mxu0 0
      %2457 = vmatmul.mubr.bf16.gmra.mrb[0].mxu0 %v2319
      %v2458 = vpop.f32.mrb[0].mxu0
      %v2459 = vadd.f32 0.0, %v2458
      %v2460 = vpop.f32.mrb[0].mxu0
      %v2461 = vpop.f32.mrb[0].mxu0
      %v2462 = vadd.f32 0.0, %v2461
      %v2463 = vpop.f32.mrb[0].mxu0
      %2464 = vmatprep.mubr.bf16.mxu0 0
      %2465 = vmatmul.mubr.bf16.gmra.mrb[0].mxu0 %v2322
      %v2466 = vpop.f32.mrb[0].mxu0
      %v2467 = vadd.f32 0.0, %v2466
      %v2468 = vpop.f32.mrb[0].mxu0
      %v2469 = vpop.f32.mrb[0].mxu0
      %v2470 = vadd.f32 0.0, %v2469
      %v2471 = vpop.f32.mrb[0].mxu0
      %2472 = vmatprep.mubr.bf16.mxu0 0
      %2473 = vmatmul.mubr.bf16.gmra.mrb[0].mxu0 %v2325
      %v2474 = vpop.f32.mrb[0].mxu0
      %v2475 = vadd.f32 0.0, %v2474
      %v2476 = vpop.f32.mrb[0].mxu0
      %v2477 = vpop.f32.mrb[0].mxu0
      %v2478 = vadd.f32 0.0, %v2477
      %v2479 = vpop.f32.mrb[0].mxu0
      %2480 = vmatprep.mubr.bf16.mxu0 0
      %2481 = vmatmul.mubr.bf16.gmra.mrb[0].mxu0 %v2328
      %v2482 = vpop.f32.mrb[0].mxu0
      %v2483 = vadd.f32 0.0, %v2482
      %v2484 = vpop.f32.mrb[0].mxu0
      %v2485 = vpop.f32.mrb[0].mxu0
      %v2486 = vadd.f32 0.0, %v2485
      %v2487 = vpop.f32.mrb[0].mxu0
      %2488 = vmatprep.mubr.bf16.mxu0 0
      %2489 = vmatmul.mubr.bf16.gmra.mrb[0].mxu0 %v2331
      %v2490 = vpop.f32.mrb[0].mxu0
      %v2491 = vadd.f32 0.0, %v2490
      %v2492 = vpop.f32.mrb[0].mxu0
      %v2493 = vpop.f32.mrb[0].mxu0
      %v2494 = vadd.f32 0.0, %v2493
      %v2495 = vpop.f32.mrb[0].mxu0
      %2496 = vdwg.mxu0
      %v2497 = vadd.f32 %v1671, %v2371
      %v2498 = vadd.f32 %v1674, %v2374
      %v2499 = vadd.f32 %v1679, %v2379
      %v2500 = vadd.f32 %v1682, %v2382
      %v2501 = vadd.f32 %v1687, %v2387
      %v2502 = vadd.f32 %v1690, %v2390
      %v2503 = vadd.f32 %v1695, %v2395
      %v2504 = vadd.f32 %v1698, %v2398
      %v2505 = vadd.f32 %v1703, %v2403
      %v2506 = vadd.f32 %v1706, %v2406
      %v2507 = vadd.f32 %v1711, %v2411
      %v2508 = vadd.f32 %v1714, %v2414
      %v2509 = vadd.f32 %v1719, %v2419
      %v2510 = vadd.f32 %v1722, %v2422
      %v2511 = vadd.f32 %v1727, %v2427
      %v2512 = vadd.f32 %v1730, %v2430
      %v2513 = vadd.f32 %v1735, %v2435
      %v2514 = vadd.f32 %v1738, %v2438
      %v2515 = vadd.f32 %v1743, %v2443
      %v2516 = vadd.f32 %v1746, %v2446
      %v2517 = vadd.f32 %v1751, %v2451
      %v2518 = vadd.f32 %v1754, %v2454
      %v2519 = vadd.f32 %v1759, %v2459
      %v2520 = vadd.f32 %v1762, %v2462
      %v2521 = vadd.f32 %v1767, %v2467
      %v2522 = vadd.f32 %v1770, %v2470
      %v2523 = vadd.f32 %v1775, %v2475
      %v2524 = vadd.f32 %v1778, %v2478
      %v2525 = vadd.f32 %v1783, %v2483
      %v2526 = vadd.f32 %v1786, %v2486
      %v2527 = vadd.f32 %v1791, %v2491
      %v2528 = vadd.f32 %v1794, %v2494
      %v2529 = vld [vmem:[#allocation2 + $0x8] sm:$0x80]
      %v2530 = vld [vmem:[#allocation2 + $0x88] sm:$0xff]
      %v2531 = vsel %vm1198, %v2529, 0
      %v2532 = vsel %vm1199, %v1798, 0
      %v2533 = vsel %vm1200, %v1799, 0
      %v2534 = vsel %vm1201, %v1800, 0
      %v2535 = vsel %vm1202, %v1801, 0
      %v2536 = vsel %vm1203, %v1802, 0
      %v2537 = vsel %vm1204, %v1803, 0
      %v2538 = vsel %vm1205, %v1804, 0
      %v2539 = vsel %vm1206, %v1805, 0
      %v2540 = vsel %vm1207, %v1806, 0
      %v2541 = vsel %vm1208, %v1807, 0
      %v2542 = vsel %vm1209, %v1808, 0
      %v2543 = vsel %vm1210, %v1809, 0
      %v2544 = vsel %vm1211, %v1810, 0
      %v2545 = vsel %vm1212, %v1811, 0
      %v2546 = vsel %vm1213, %v1812, 0
      %v2547 = vsel %vm1214, %v2530, 0
      %s2548 = scalar_lea.vmem %s223, 6
      %v2549 = vld [vmem:[%s2548] sm:$0x3]
      %v2551 = vshrl.u32 %v2531, 16
      %v2553 = vrot.slane %v2551, 7
      %v2555 = vshrl.u32 %v2532, 16
      %v2557 = vrot.slane %v2555, 7
      %v2558 = vshll.u32 %v2532, 16
      %v2560 = vor.u32 %v2557, %v2558
      %v2561 = vsel %vm1452, %v2553, %v2560
      %v2563 = vshrl.u32 %v2533, 16
      %v2565 = vrot.slane %v2563, 7
      %v2566 = vshll.u32 %v2533, 16
      %v2568 = vor.u32 %v2565, %v2566
      %v2569 = vsel %vm1452, %v2557, %v2568
      %v2571 = vshrl.u32 %v2534, 16
      %v2573 = vrot.slane %v2571, 7
      %v2574 = vshll.u32 %v2534, 16
      %v2576 = vor.u32 %v2573, %v2574
      %v2577 = vsel %vm1452, %v2565, %v2576
      %v2579 = vshrl.u32 %v2535, 16
      %v2581 = vrot.slane %v2579, 7
      %v2582 = vshll.u32 %v2535, 16
      %v2584 = vor.u32 %v2581, %v2582
      %v2585 = vsel %vm1452, %v2573, %v2584
      %v2587 = vshrl.u32 %v2536, 16
      %v2589 = vrot.slane %v2587, 7
      %v2590 = vshll.u32 %v2536, 16
      %v2592 = vor.u32 %v2589, %v2590
      %v2593 = vsel %vm1452, %v2581, %v2592
      %v2595 = vshrl.u32 %v2537, 16
      %v2597 = vrot.slane %v2595, 7
      %v2598 = vshll.u32 %v2537, 16
      %v2600 = vor.u32 %v2597, %v2598
      %v2601 = vsel %vm1452, %v2589, %v2600
      %v2603 = vshrl.u32 %v2538, 16
      %v2605 = vrot.slane %v2603, 7
      %v2606 = vshll.u32 %v2538, 16
      %v2608 = vor.u32 %v2605, %v2606
      %v2609 = vsel %vm1452, %v2597, %v2608
      %v2611 = vshrl.u32 %v2539, 16
      %v2613 = vrot.slane %v2611, 7
      %v2614 = vshll.u32 %v2539, 16
      %v2616 = vor.u32 %v2613, %v2614
      %v2617 = vsel %vm1452, %v2605, %v2616
      %v2619 = vshrl.u32 %v2540, 16
      %v2621 = vrot.slane %v2619, 7
      %v2622 = vshll.u32 %v2540, 16
      %v2624 = vor.u32 %v2621, %v2622
      %v2625 = vsel %vm1452, %v2613, %v2624
      %v2627 = vshrl.u32 %v2541, 16
      %v2629 = vrot.slane %v2627, 7
      %v2630 = vshll.u32 %v2541, 16
      %v2632 = vor.u32 %v2629, %v2630
      %v2633 = vsel %vm1452, %v2621, %v2632
      %v2635 = vshrl.u32 %v2542, 16
      %v2637 = vrot.slane %v2635, 7
      %v2638 = vshll.u32 %v2542, 16
      %v2640 = vor.u32 %v2637, %v2638
      %v2641 = vsel %vm1452, %v2629, %v2640
      %v2643 = vshrl.u32 %v2543, 16
      %v2645 = vrot.slane %v2643, 7
      %v2646 = vshll.u32 %v2543, 16
      %v2648 = vor.u32 %v2645, %v2646
      %v2649 = vsel %vm1452, %v2637, %v2648
      %v2651 = vshrl.u32 %v2544, 16
      %v2653 = vrot.slane %v2651, 7
      %v2654 = vshll.u32 %v2544, 16
      %v2656 = vor.u32 %v2653, %v2654
      %v2657 = vsel %vm1452, %v2645, %v2656
      %v2659 = vshrl.u32 %v2545, 16
      %v2661 = vrot.slane %v2659, 7
      %v2662 = vshll.u32 %v2545, 16
      %v2664 = vor.u32 %v2661, %v2662
      %v2665 = vsel %vm1452, %v2653, %v2664
      %v2667 = vshrl.u32 %v2546, 16
      %v2669 = vrot.slane %v2667, 7
      %v2670 = vshll.u32 %v2546, 16
      %v2672 = vor.u32 %v2669, %v2670
      %v2673 = vsel %vm1452, %v2661, %v2672
      %v2675 = vshrl.u32 %v2547, 16
      %v2677 = vrot.slane %v2675, 7
      %v2678 = vshll.u32 %v2547, 16
      %v2680 = vor.u32 %v2677, %v2678
      %v2681 = vsel %vm1452, %v2669, %v2680
      %v2683 = vsel %vm1235, %v2561, 0
      %v2686 = vsel %vm1235, %v2569, 0
      %v2689 = vsel %vm1235, %v2577, 0
      %v2692 = vsel %vm1235, %v2585, 0
      %v2695 = vsel %vm1235, %v2593, 0
      %v2698 = vsel %vm1235, %v2601, 0
      %v2701 = vsel %vm1235, %v2609, 0
      %v2704 = vsel %vm1235, %v2617, 0
      %v2707 = vsel %vm1235, %v2625, 0
      %v2710 = vsel %vm1235, %v2633, 0
      %v2713 = vsel %vm1235, %v2641, 0
      %v2716 = vsel %vm1235, %v2649, 0
      %v2719 = vsel %vm1235, %v2657, 0
      %v2722 = vsel %vm1235, %v2665, 0
      %v2725 = vsel %vm1235, %v2673, 0
      %v2728 = vsel %vm1235, %v2681, 0
      %v2731 = vand.u32 %v2549, %v1287
      %2733 = vmatprep.subr.bf16.mxu0 0
      %2734 = vmatpush1.bf16.msra.mxu0 %v2731
      %2735 = vmatprep.subr.bf16.mxu0 0
      %2736 = vmatpush1.bf16.msra.mxu0 0
      %2737 = vmatprep.subr.bf16.mxu0 0
      %2738 = vmatpush1.bf16.msra.mxu0 0
      %2739 = vmatprep.subr.bf16.mxu0 0
      %2740 = vmatpush1.bf16.msra.mxu0 0
      %2741 = vmatprep.subr.bf16.mxu0 0
      %2742 = vmatpush1.bf16.msra.mxu0 0
      %2743 = vmatprep.subr.bf16.mxu0 0
      %2744 = vmatpush1.bf16.msra.mxu0 0
      %2745 = vmatprep.subr.bf16.mxu0 0
      %2746 = vmatpush1.bf16.msra.mxu0 0
      %2747 = vmatprep.subr.bf16.mxu0 0
      %2748 = vmatpush1.bf16.msra.mxu0 0
      %2749 = vmatprep.subr.bf16.mxu0 0
      %2750 = vmatpush1.bf16.msra.mxu0 0
      %2751 = vmatprep.subr.bf16.mxu0 0
      %2752 = vmatpush1.bf16.msra.mxu0 0
      %2753 = vmatprep.subr.bf16.mxu0 0
      %2754 = vmatpush1.bf16.msra.mxu0 0
      %2755 = vmatprep.subr.bf16.mxu0 0
      %2756 = vmatpush1.bf16.msra.mxu0 0
      %2757 = vmatprep.subr.bf16.mxu0 0
      %2758 = vmatpush1.bf16.msra.mxu0 0
      %2759 = vmatprep.subr.bf16.mxu0 0
      %2760 = vmatpush1.bf16.msra.mxu0 0
      %2761 = vmatprep.subr.bf16.mxu0 0
      %2762 = vmatpush1.bf16.msra.mxu0 0
      %2763 = vmatprep.subr.bf16.mxu0 0
      %2764 = vmatpush1.bf16.msra.mxu0 0
      %2765 = vmatprep.mubr.bf16.mxu0 0
      %2766 = vmatmul.mubr.bf16.gmra.mrb[0].mxu0 %v2683
      %v2767 = vpop.f32.mrb[0].mxu0
      %v2768 = vadd.f32 0.0, %v2767
      %v2769 = vpop.f32.mrb[0].mxu0
      %v2770 = vpop.f32.mrb[0].mxu0
      %v2771 = vadd.f32 0.0, %v2770
      %v2772 = vpop.f32.mrb[0].mxu0
      %2773 = vmatprep.mubr.bf16.mxu0 0
      %2774 = vmatmul.mubr.bf16.gmra.mrb[0].mxu0 %v2686
      %v2775 = vpop.f32.mrb[0].mxu0
      %v2776 = vadd.f32 0.0, %v2775
      %v2777 = vpop.f32.mrb[0].mxu0
      %v2778 = vpop.f32.mrb[0].mxu0
      %v2779 = vadd.f32 0.0, %v2778
      %v2780 = vpop.f32.mrb[0].mxu0
      %2781 = vmatprep.mubr.bf16.mxu0 0
      %2782 = vmatmul.mubr.bf16.gmra.mrb[0].mxu0 %v2689
      %v2783 = vpop.f32.mrb[0].mxu0
      %v2784 = vadd.f32 0.0, %v2783
      %v2785 = vpop.f32.mrb[0].mxu0
      %v2786 = vpop.f32.mrb[0].mxu0
      %v2787 = vadd.f32 0.0, %v2786
      %v2788 = vpop.f32.mrb[0].mxu0
      %2789 = vmatprep.mubr.bf16.mxu0 0
      %2790 = vmatmul.mubr.bf16.gmra.mrb[0].mxu0 %v2692
      %v2791 = vpop.f32.mrb[0].mxu0
      %v2792 = vadd.f32 0.0, %v2791
      %v2793 = vpop.f32.mrb[0].mxu0
      %v2794 = vpop.f32.mrb[0].mxu0
      %v2795 = vadd.f32 0.0, %v2794
      %v2796 = vpop.f32.mrb[0].mxu0
      %2797 = vmatprep.mubr.bf16.mxu0 0
      %2798 = vmatmul.mubr.bf16.gmra.mrb[0].mxu0 %v2695
      %v2799 = vpop.f32.mrb[0].mxu0
      %v2800 = vadd.f32 0.0, %v2799
      %v2801 = vpop.f32.mrb[0].mxu0
      %v2802 = vpop.f32.mrb[0].mxu0
      %v2803 = vadd.f32 0.0, %v2802
      %v2804 = vpop.f32.mrb[0].mxu0
      %2805 = vmatprep.mubr.bf16.mxu0 0
      %2806 = vmatmul.mubr.bf16.gmra.mrb[0].mxu0 %v2698
      %v2807 = vpop.f32.mrb[0].mxu0
      %v2808 = vadd.f32 0.0, %v2807
      %v2809 = vpop.f32.mrb[0].mxu0
      %v2810 = vpop.f32.mrb[0].mxu0
      %v2811 = vadd.f32 0.0, %v2810
      %v2812 = vpop.f32.mrb[0].mxu0
      %2813 = vmatprep.mubr.bf16.mxu0 0
      %2814 = vmatmul.mubr.bf16.gmra.mrb[0].mxu0 %v2701
      %v2815 = vpop.f32.mrb[0].mxu0
      %v2816 = vadd.f32 0.0, %v2815
      %v2817 = vpop.f32.mrb[0].mxu0
      %v2818 = vpop.f32.mrb[0].mxu0
      %v2819 = vadd.f32 0.0, %v2818
      %v2820 = vpop.f32.mrb[0].mxu0
      %2821 = vmatprep.mubr.bf16.mxu0 0
      %2822 = vmatmul.mubr.bf16.gmra.mrb[0].mxu0 %v2704
      %v2823 = vpop.f32.mrb[0].mxu0
      %v2824 = vadd.f32 0.0, %v2823
      %v2825 = vpop.f32.mrb[0].mxu0
      %v2826 = vpop.f32.mrb[0].mxu0
      %v2827 = vadd.f32 0.0, %v2826
      %v2828 = vpop.f32.mrb[0].mxu0
      %2829 = vmatprep.mubr.bf16.mxu0 0
      %2830 = vmatmul.mubr.bf16.gmra.mrb[0].mxu0 %v2707
      %v2831 = vpop.f32.mrb[0].mxu0
      %v2832 = vadd.f32 0.0, %v2831
      %v2833 = vpop.f32.mrb[0].mxu0
      %v2834 = vpop.f32.mrb[0].mxu0
      %v2835 = vadd.f32 0.0, %v2834
      %v2836 = vpop.f32.mrb[0].mxu0
      %2837 = vmatprep.mubr.bf16.mxu0 0
      %2838 = vmatmul.mubr.bf16.gmra.mrb[0].mxu0 %v2710
      %v2839 = vpop.f32.mrb[0].mxu0
      %v2840 = vadd.f32 0.0, %v2839
      %v2841 = vpop.f32.mrb[0].mxu0
      %v2842 = vpop.f32.mrb[0].mxu0
      %v2843 = vadd.f32 0.0, %v2842
      %v2844 = vpop.f32.mrb[0].mxu0
      %2845 = vmatprep.mubr.bf16.mxu0 0
      %2846 = vmatmul.mubr.bf16.gmra.mrb[0].mxu0 %v2713
      %v2847 = vpop.f32.mrb[0].mxu0
      %v2848 = vadd.f32 0.0, %v2847
      %v2849 = vpop.f32.mrb[0].mxu0
      %v2850 = vpop.f32.mrb[0].mxu0
      %v2851 = vadd.f32 0.0, %v2850
      %v2852 = vpop.f32.mrb[0].mxu0
      %2853 = vmatprep.mubr.bf16.mxu0 0
      %2854 = vmatmul.mubr.bf16.gmra.mrb[0].mxu0 %v2716
      %v2855 = vpop.f32.mrb[0].mxu0
      %v2856 = vadd.f32 0.0, %v2855
      %v2857 = vpop.f32.mrb[0].mxu0
      %v2858 = vpop.f32.mrb[0].mxu0
      %v2859 = vadd.f32 0.0, %v2858
      %v2860 = vpop.f32.mrb[0].mxu0
      %2861 = vmatprep.mubr.bf16.mxu0 0
      %2862 = vmatmul.mubr.bf16.gmra.mrb[0].mxu0 %v2719
      %v2863 = vpop.f32.mrb[0].mxu0
      %v2864 = vadd.f32 0.0, %v2863
      %v2865 = vpop.f32.mrb[0].mxu0
      %v2866 = vpop.f32.mrb[0].mxu0
      %v2867 = vadd.f32 0.0, %v2866
      %v2868 = vpop.f32.mrb[0].mxu0
      %2869 = vmatprep.mubr.bf16.mxu0 0
      %2870 = vmatmul.mubr.bf16.gmra.mrb[0].mxu0 %v2722
      %v2871 = vpop.f32.mrb[0].mxu0
      %v2872 = vadd.f32 0.0, %v2871
      %v2873 = vpop.f32.mrb[0].mxu0
      %v2874 = vpop.f32.mrb[0].mxu0
      %v2875 = vadd.f32 0.0, %v2874
      %v2876 = vpop.f32.mrb[0].mxu0
      %2877 = vmatprep.mubr.bf16.mxu0 0
      %2878 = vmatmul.mubr.bf16.gmra.mrb[0].mxu0 %v2725
      %v2879 = vpop.f32.mrb[0].mxu0
      %v2880 = vadd.f32 0.0, %v2879
      %v2881 = vpop.f32.mrb[0].mxu0
      %v2882 = vpop.f32.mrb[0].mxu0
      %v2883 = vadd.f32 0.0, %v2882
      %v2884 = vpop.f32.mrb[0].mxu0
      %2885 = vmatprep.mubr.bf16.mxu0 0
      %2886 = vmatmul.mubr.bf16.gmra.mrb[0].mxu0 %v2728
      %v2887 = vpop.f32.mrb[0].mxu0
      %v2888 = vadd.f32 0.0, %v2887
      %v2889 = vpop.f32.mrb[0].mxu0
      %v2890 = vpop.f32.mrb[0].mxu0
      %v2891 = vadd.f32 0.0, %v2890
      %v2892 = vpop.f32.mrb[0].mxu0
      %2893 = vdwg.mxu0
      %v2894 = vadd.f32 %v2497, %v2768
      %v2895 = vadd.f32 %v2498, %v2771
      %v2896 = vadd.f32 %v2499, %v2776
      %v2897 = vadd.f32 %v2500, %v2779
      %v2898 = vadd.f32 %v2501, %v2784
      %v2899 = vadd.f32 %v2502, %v2787
      %v2900 = vadd.f32 %v2503, %v2792
      %v2901 = vadd.f32 %v2504, %v2795
      %v2902 = vadd.f32 %v2505, %v2800
      %v2903 = vadd.f32 %v2506, %v2803
      %v2904 = vadd.f32 %v2507, %v2808
      %v2905 = vadd.f32 %v2508, %v2811
      %v2906 = vadd.f32 %v2509, %v2816
      %v2907 = vadd.f32 %v2510, %v2819
      %v2908 = vadd.f32 %v2511, %v2824
      %v2909 = vadd.f32 %v2512, %v2827
      %v2910 = vadd.f32 %v2513, %v2832
      %v2911 = vadd.f32 %v2514, %v2835
      %v2912 = vadd.f32 %v2515, %v2840
      %v2913 = vadd.f32 %v2516, %v2843
      %v2914 = vadd.f32 %v2517, %v2848
      %v2915 = vadd.f32 %v2518, %v2851
      %v2916 = vadd.f32 %v2519, %v2856
      %v2917 = vadd.f32 %v2520, %v2859
      %v2918 = vadd.f32 %v2521, %v2864
      %v2919 = vadd.f32 %v2522, %v2867
      %v2920 = vadd.f32 %v2523, %v2872
      %v2921 = vadd.f32 %v2524, %v2875
      %v2922 = vadd.f32 %v2525, %v2880
      %v2923 = vadd.f32 %v2526, %v2883
      %v2924 = vadd.f32 %v2527, %v2888
      %v2925 = vadd.f32 %v2528, %v2891
      %s2926 = scalar_lea.vmem %s223, 8
      %v2927 = vld [vmem:[%s2926] sm:$0x3]
      %v2929 = vsel %vm1235, %v1798, 0
      %v2932 = vsel %vm1235, %v1799, 0
      %v2935 = vsel %vm1235, %v1800, 0
      %v2938 = vsel %vm1235, %v1801, 0
      %v2941 = vsel %vm1235, %v1802, 0
      %v2944 = vsel %vm1235, %v1803, 0
      %v2947 = vsel %vm1235, %v1804, 0
      %v2950 = vsel %vm1235, %v1805, 0
      %v2953 = vsel %vm1235, %v1806, 0
      %v2956 = vsel %vm1235, %v1807, 0
      %v2959 = vsel %vm1235, %v1808, 0
      %v2962 = vsel %vm1235, %v1809, 0
      %v2965 = vsel %vm1235, %v1810, 0
      %v2968 = vsel %vm1235, %v1811, 0
      %v2971 = vsel %vm1235, %v1812, 0
      %v2974 = vsel %vm1235, %v2530, 0
      %v2977 = vand.u32 %v2927, %v1287
      %2979 = vmatprep.subr.bf16.mxu0 0
      %2980 = vmatpush1.bf16.msra.mxu0 %v2977
      %2981 = vmatprep.subr.bf16.mxu0 0
      %2982 = vmatpush1.bf16.msra.mxu0 0
      %2983 = vmatprep.subr.bf16.mxu0 0
      %2984 = vmatpush1.bf16.msra.mxu0 0
      %2985 = vmatprep.subr.bf16.mxu0 0
      %2986 = vmatpush1.bf16.msra.mxu0 0
      %2987 = vmatprep.subr.bf16.mxu0 0
      %2988 = vmatpush1.bf16.msra.mxu0 0
      %2989 = vmatprep.subr.bf16.mxu0 0
      %2990 = vmatpush1.bf16.msra.mxu0 0
      %2991 = vmatprep.subr.bf16.mxu0 0
      %2992 = vmatpush1.bf16.msra.mxu0 0
      %2993 = vmatprep.subr.bf16.mxu0 0
      %2994 = vmatpush1.bf16.msra.mxu0 0
      %2995 = vmatprep.subr.bf16.mxu0 0
      %2996 = vmatpush1.bf16.msra.mxu0 0
      %2997 = vmatprep.subr.bf16.mxu0 0
      %2998 = vmatpush1.bf16.msra.mxu0 0
      %2999 = vmatprep.subr.bf16.mxu0 0
      %3000 = vmatpush1.bf16.msra.mxu0 0
      %3001 = vmatprep.subr.bf16.mxu0 0
      %3002 = vmatpush1.bf16.msra.mxu0 0
      %3003 = vmatprep.subr.bf16.mxu0 0
      %3004 = vmatpush1.bf16.msra.mxu0 0
      %3005 = vmatprep.subr.bf16.mxu0 0
      %3006 = vmatpush1.bf16.msra.mxu0 0
      %3007 = vmatprep.subr.bf16.mxu0 0
      %3008 = vmatpush1.bf16.msra.mxu0 0
      %3009 = vmatprep.subr.bf16.mxu0 0
      %3010 = vmatpush1.bf16.msra.mxu0 0
      %3011 = vmatprep.mubr.bf16.mxu0 0
      %3012 = vmatmul.mubr.bf16.gmra.mrb[0].mxu0 %v2929
      %v3013 = vpop.f32.mrb[0].mxu0
      %v3014 = vadd.f32 0.0, %v3013
      %v3015 = vpop.f32.mrb[0].mxu0
      %v3016 = vpop.f32.mrb[0].mxu0
      %v3017 = vadd.f32 0.0, %v3016
      %v3018 = vpop.f32.mrb[0].mxu0
      %3019 = vmatprep.mubr.bf16.mxu0 0
      %3020 = vmatmul.mubr.bf16.gmra.mrb[0].mxu0 %v2932
      %v3021 = vpop.f32.mrb[0].mxu0
      %v3022 = vadd.f32 0.0, %v3021
      %v3023 = vpop.f32.mrb[0].mxu0
      %v3024 = vpop.f32.mrb[0].mxu0
      %v3025 = vadd.f32 0.0, %v3024
      %v3026 = vpop.f32.mrb[0].mxu0
      %3027 = vmatprep.mubr.bf16.mxu0 0
      %3028 = vmatmul.mubr.bf16.gmra.mrb[0].mxu0 %v2935
      %v3029 = vpop.f32.mrb[0].mxu0
      %v3030 = vadd.f32 0.0, %v3029
      %v3031 = vpop.f32.mrb[0].mxu0
      %v3032 = vpop.f32.mrb[0].mxu0
      %v3033 = vadd.f32 0.0, %v3032
      %v3034 = vpop.f32.mrb[0].mxu0
      %3035 = vmatprep.mubr.bf16.mxu0 0
      %3036 = vmatmul.mubr.bf16.gmra.mrb[0].mxu0 %v2938
      %v3037 = vpop.f32.mrb[0].mxu0
      %v3038 = vadd.f32 0.0, %v3037
      %v3039 = vpop.f32.mrb[0].mxu0
      %v3040 = vpop.f32.mrb[0].mxu0
      %v3041 = vadd.f32 0.0, %v3040
      %v3042 = vpop.f32.mrb[0].mxu0
      %3043 = vmatprep.mubr.bf16.mxu0 0
      %3044 = vmatmul.mubr.bf16.gmra.mrb[0].mxu0 %v2941
      %v3045 = vpop.f32.mrb[0].mxu0
      %v3046 = vadd.f32 0.0, %v3045
      %v3047 = vpop.f32.mrb[0].mxu0
      %v3048 = vpop.f32.mrb[0].mxu0
      %v3049 = vadd.f32 0.0, %v3048
      %v3050 = vpop.f32.mrb[0].mxu0
      %3051 = vmatprep.mubr.bf16.mxu0 0
      %3052 = vmatmul.mubr.bf16.gmra.mrb[0].mxu0 %v2944
      %v3053 = vpop.f32.mrb[0].mxu0
      %v3054 = vadd.f32 0.0, %v3053
      %v3055 = vpop.f32.mrb[0].mxu0
      %v3056 = vpop.f32.mrb[0].mxu0
      %v3057 = vadd.f32 0.0, %v3056
      %v3058 = vpop.f32.mrb[0].mxu0
      %3059 = vmatprep.mubr.bf16.mxu0 0
      %3060 = vmatmul.mubr.bf16.gmra.mrb[0].mxu0 %v2947
      %v3061 = vpop.f32.mrb[0].mxu0
      %v3062 = vadd.f32 0.0, %v3061
      %v3063 = vpop.f32.mrb[0].mxu0
      %v3064 = vpop.f32.mrb[0].mxu0
      %v3065 = vadd.f32 0.0, %v3064
      %v3066 = vpop.f32.mrb[0].mxu0
      %3067 = vmatprep.mubr.bf16.mxu0 0
      %3068 = vmatmul.mubr.bf16.gmra.mrb[0].mxu0 %v2950
      %v3069 = vpop.f32.mrb[0].mxu0
      %v3070 = vadd.f32 0.0, %v3069
      %v3071 = vpop.f32.mrb[0].mxu0
      %v3072 = vpop.f32.mrb[0].mxu0
      %v3073 = vadd.f32 0.0, %v3072
      %v3074 = vpop.f32.mrb[0].mxu0
      %3075 = vmatprep.mubr.bf16.mxu0 0
      %3076 = vmatmul.mubr.bf16.gmra.mrb[0].mxu0 %v2953
      %v3077 = vpop.f32.mrb[0].mxu0
      %v3078 = vadd.f32 0.0, %v3077
      %v3079 = vpop.f32.mrb[0].mxu0
      %v3080 = vpop.f32.mrb[0].mxu0
      %v3081 = vadd.f32 0.0, %v3080
      %v3082 = vpop.f32.mrb[0].mxu0
      %3083 = vmatprep.mubr.bf16.mxu0 0
      %3084 = vmatmul.mubr.bf16.gmra.mrb[0].mxu0 %v2956
      %v3085 = vpop.f32.mrb[0].mxu0
      %v3086 = vadd.f32 0.0, %v3085
      %v3087 = vpop.f32.mrb[0].mxu0
      %v3088 = vpop.f32.mrb[0].mxu0
      %v3089 = vadd.f32 0.0, %v3088
      %v3090 = vpop.f32.mrb[0].mxu0
      %3091 = vmatprep.mubr.bf16.mxu0 0
      %3092 = vmatmul.mubr.bf16.gmra.mrb[0].mxu0 %v2959
      %v3093 = vpop.f32.mrb[0].mxu0
      %v3094 = vadd.f32 0.0, %v3093
      %v3095 = vpop.f32.mrb[0].mxu0
      %v3096 = vpop.f32.mrb[0].mxu0
      %v3097 = vadd.f32 0.0, %v3096
      %v3098 = vpop.f32.mrb[0].mxu0
      %3099 = vmatprep.mubr.bf16.mxu0 0
      %3100 = vmatmul.mubr.bf16.gmra.mrb[0].mxu0 %v2962
      %v3101 = vpop.f32.mrb[0].mxu0
      %v3102 = vadd.f32 0.0, %v3101
      %v3103 = vpop.f32.mrb[0].mxu0
      %v3104 = vpop.f32.mrb[0].mxu0
      %v3105 = vadd.f32 0.0, %v3104
      %v3106 = vpop.f32.mrb[0].mxu0
      %3107 = vmatprep.mubr.bf16.mxu0 0
      %3108 = vmatmul.mubr.bf16.gmra.mrb[0].mxu0 %v2965
      %v3109 = vpop.f32.mrb[0].mxu0
      %v3110 = vadd.f32 0.0, %v3109
      %v3111 = vpop.f32.mrb[0].mxu0
      %v3112 = vpop.f32.mrb[0].mxu0
      %v3113 = vadd.f32 0.0, %v3112
      %v3114 = vpop.f32.mrb[0].mxu0
      %3115 = vmatprep.mubr.bf16.mxu0 0
      %3116 = vmatmul.mubr.bf16.gmra.mrb[0].mxu0 %v2968
      %v3117 = vpop.f32.mrb[0].mxu0
      %v3118 = vadd.f32 0.0, %v3117
      %v3119 = vpop.f32.mrb[0].mxu0
      %v3120 = vpop.f32.mrb[0].mxu0
      %v3121 = vadd.f32 0.0, %v3120
      %v3122 = vpop.f32.mrb[0].mxu0
      %3123 = vmatprep.mubr.bf16.mxu0 0
      %3124 = vmatmul.mubr.bf16.gmra.mrb[0].mxu0 %v2971
      %v3125 = vpop.f32.mrb[0].mxu0
      %v3126 = vadd.f32 0.0, %v3125
      %v3127 = vpop.f32.mrb[0].mxu0
      %v3128 = vpop.f32.mrb[0].mxu0
      %v3129 = vadd.f32 0.0, %v3128
      %v3130 = vpop.f32.mrb[0].mxu0
      %3131 = vmatprep.mubr.bf16.mxu0 0
      %3132 = vmatmul.mubr.bf16.gmra.mrb[0].mxu0 %v2974
      %v3133 = vpop.f32.mrb[0].mxu0
      %v3134 = vadd.f32 0.0, %v3133
      %v3135 = vpop.f32.mrb[0].mxu0
      %v3136 = vpop.f32.mrb[0].mxu0
      %v3137 = vadd.f32 0.0, %v3136
      %v3138 = vpop.f32.mrb[0].mxu0
      %3139 = vdwg.mxu0
      %v3140 = vadd.f32 %v2894, %v3014
      %v3141 = vadd.f32 %v2895, %v3017
      %v3142 = vadd.f32 %v2896, %v3022
      %v3143 = vadd.f32 %v2897, %v3025
      %v3144 = vadd.f32 %v2898, %v3030
      %v3145 = vadd.f32 %v2899, %v3033
      %v3146 = vadd.f32 %v2900, %v3038
      %v3147 = vadd.f32 %v2901, %v3041
      %v3148 = vadd.f32 %v2902, %v3046
      %v3149 = vadd.f32 %v2903, %v3049
      %v3150 = vadd.f32 %v2904, %v3054
      %v3151 = vadd.f32 %v2905, %v3057
      %v3152 = vadd.f32 %v2906, %v3062
      %v3153 = vadd.f32 %v2907, %v3065
      %v3154 = vadd.f32 %v2908, %v3070
      %v3155 = vadd.f32 %v2909, %v3073
      %v3156 = vadd.f32 %v2910, %v3078
      %v3157 = vadd.f32 %v2911, %v3081
      %v3158 = vadd.f32 %v2912, %v3086
      %v3159 = vadd.f32 %v2913, %v3089
      %v3160 = vadd.f32 %v2914, %v3094
      %v3161 = vadd.f32 %v2915, %v3097
      %v3162 = vadd.f32 %v2916, %v3102
      %v3163 = vadd.f32 %v2917, %v3105
      %v3164 = vadd.f32 %v2918, %v3110
      %v3165 = vadd.f32 %v2919, %v3113
      %v3166 = vadd.f32 %v2920, %v3118
      %v3167 = vadd.f32 %v2921, %v3121
      %v3168 = vadd.f32 %v2922, %v3126
      %v3169 = vadd.f32 %v2923, %v3129
      %v3170 = vadd.f32 %v2924, %v3134
      %v3171 = vadd.f32 %v2925, %v3137
      %v3172 = vld [vmem:[#allocation2 + $0x10] sm:$0xff]
      %v3173 = vld [vmem:[#allocation2 + $0x18] sm:$0xff]
      %v3174 = vld [vmem:[#allocation2 + $0x20] sm:$0xff]
      %v3175 = vld [vmem:[#allocation2 + $0x28] sm:$0xff]
      %v3176 = vld [vmem:[#allocation2 + $0x30] sm:$0xff]
      %v3177 = vld [vmem:[#allocation2 + $0x38] sm:$0xff]
      %v3178 = vld [vmem:[#allocation2 + $0x40] sm:$0xff]
      %v3179 = vld [vmem:[#allocation2 + $0x48] sm:$0xff]
      %v3180 = vld [vmem:[#allocation2 + $0x50] sm:$0xff]
      %v3181 = vld [vmem:[#allocation2 + $0x58] sm:$0xff]
      %v3182 = vld [vmem:[#allocation2 + $0x60] sm:$0xff]
      %v3183 = vld [vmem:[#allocation2 + $0x68] sm:$0xff]
      %v3184 = vld [vmem:[#allocation2 + $0x70] sm:$0xff]
      %v3185 = vld [vmem:[#allocation2 + $0x78] sm:$0xff]
      %v3186 = vld [vmem:[#allocation2 + $0x80] sm:$0xff]
      %v3187 = vld [vmem:[#allocation2 + $0x88] sm:$0xff]
      %v3188 = vld [vmem:[#allocation2 + $0x90] sm:$0x1]
      %v3189 = vsel %vm2117, %v3172, 0
      %v3190 = vsel %vm2118, %v3173, 0
      %v3191 = vsel %vm2119, %v3174, 0
      %v3192 = vsel %vm2120, %v3175, 0
      %v3193 = vsel %vm2121, %v3176, 0
      %v3194 = vsel %vm2122, %v3177, 0
      %v3195 = vsel %vm2123, %v3178, 0
      %v3196 = vsel %vm2124, %v3179, 0
      %v3197 = vsel %vm2125, %v3180, 0
      %v3198 = vsel %vm2126, %v3181, 0
      %v3199 = vsel %vm2127, %v3182, 0
      %v3200 = vsel %vm2128, %v3183, 0
      %v3201 = vsel %vm2129, %v3184, 0
      %v3202 = vsel %vm2130, %v3185, 0
      %v3203 = vsel %vm2131, %v3186, 0
      %v3204 = vsel %vm2132, %v3187, 0
      %v3205 = vsel %vm2133, %v3188, 0
      %s3206 = scalar_lea.vmem %s223, 10
      %v3207 = vld [vmem:[%s3206] sm:$0x3]
      %v3209 = vshrl.u32 %v3189, 16
      %v3211 = vshll.u32 %v3189, 16
      %v3213 = vrot.slane %v3211, 1
      %v3214 = vor.u32 %v3209, %v3213
      %v3216 = vshll.u32 %v3190, 16
      %v3218 = vrot.slane %v3216, 1
      %v3219 = vsel %vm1070, %v3214, %v3218
      %v3220 = vshrl.u32 %v3190, 16
      %v3222 = vor.u32 %v3220, %v3218
      %v3224 = vshll.u32 %v3191, 16
      %v3226 = vrot.slane %v3224, 1
      %v3227 = vsel %vm1070, %v3222, %v3226
      %v3228 = vshrl.u32 %v3191, 16
      %v3230 = vor.u32 %v3228, %v3226
      %v3232 = vshll.u32 %v3192, 16
      %v3234 = vrot.slane %v3232, 1
      %v3235 = vsel %vm1070, %v3230, %v3234
      %v3236 = vshrl.u32 %v3192, 16
      %v3238 = vor.u32 %v3236, %v3234
      %v3240 = vshll.u32 %v3193, 16
      %v3242 = vrot.slane %v3240, 1
      %v3243 = vsel %vm1070, %v3238, %v3242
      %v3244 = vshrl.u32 %v3193, 16
      %v3246 = vor.u32 %v3244, %v3242
      %v3248 = vshll.u32 %v3194, 16
      %v3250 = vrot.slane %v3248, 1
      %v3251 = vsel %vm1070, %v3246, %v3250
      %v3252 = vshrl.u32 %v3194, 16
      %v3254 = vor.u32 %v3252, %v3250
      %v3256 = vshll.u32 %v3195, 16
      %v3258 = vrot.slane %v3256, 1
      %v3259 = vsel %vm1070, %v3254, %v3258
      %v3260 = vshrl.u32 %v3195, 16
      %v3262 = vor.u32 %v3260, %v3258
      %v3264 = vshll.u32 %v3196, 16
      %v3266 = vrot.slane %v3264, 1
      %v3267 = vsel %vm1070, %v3262, %v3266
      %v3268 = vshrl.u32 %v3196, 16
      %v3270 = vor.u32 %v3268, %v3266
      %v3272 = vshll.u32 %v3197, 16
      %v3274 = vrot.slane %v3272, 1
      %v3275 = vsel %vm1070, %v3270, %v3274
      %v3276 = vshrl.u32 %v3197, 16
      %v3278 = vor.u32 %v3276, %v3274
      %v3280 = vshll.u32 %v3198, 16
      %v3282 = vrot.slane %v3280, 1
      %v3283 = vsel %vm1070, %v3278, %v3282
      %v3284 = vshrl.u32 %v3198, 16
      %v3286 = vor.u32 %v3284, %v3282
      %v3288 = vshll.u32 %v3199, 16
      %v3290 = vrot.slane %v3288, 1
      %v3291 = vsel %vm1070, %v3286, %v3290
      %v3292 = vshrl.u32 %v3199, 16
      %v3294 = vor.u32 %v3292, %v3290
      %v3296 = vshll.u32 %v3200, 16
      %v3298 = vrot.slane %v3296, 1
      %v3299 = vsel %vm1070, %v3294, %v3298
      %v3300 = vshrl.u32 %v3200, 16
      %v3302 = vor.u32 %v3300, %v3298
      %v3304 = vshll.u32 %v3201, 16
      %v3306 = vrot.slane %v3304, 1
      %v3307 = vsel %vm1070, %v3302, %v3306
      %v3308 = vshrl.u32 %v3201, 16
      %v3310 = vor.u32 %v3308, %v3306
      %v3312 = vshll.u32 %v3202, 16
      %v3314 = vrot.slane %v3312, 1
      %v3315 = vsel %vm1070, %v3310, %v3314
      %v3316 = vshrl.u32 %v3202, 16
      %v3318 = vor.u32 %v3316, %v3314
      %v3320 = vshll.u32 %v3203, 16
      %v3322 = vrot.slane %v3320, 1
      %v3323 = vsel %vm1070, %v3318, %v3322
      %v3324 = vshrl.u32 %v3203, 16
      %v3326 = vor.u32 %v3324, %v3322
      %v3328 = vshll.u32 %v3204, 16
      %v3330 = vrot.slane %v3328, 1
      %v3331 = vsel %vm1070, %v3326, %v3330
      %v3332 = vshrl.u32 %v3204, 16
      %v3334 = vor.u32 %v3332, %v3330
      %v3336 = vshll.u32 %v3205, 16
      %v3338 = vrot.slane %v3336, 1
      %v3339 = vsel %vm1070, %v3334, %v3338
      %v3341 = vsel %vm1235, %v3219, 0
      %v3344 = vsel %vm1235, %v3227, 0
      %v3347 = vsel %vm1235, %v3235, 0
      %v3350 = vsel %vm1235, %v3243, 0
      %v3353 = vsel %vm1235, %v3251, 0
      %v3356 = vsel %vm1235, %v3259, 0
      %v3359 = vsel %vm1235, %v3267, 0
      %v3362 = vsel %vm1235, %v3275, 0
      %v3365 = vsel %vm1235, %v3283, 0
      %v3368 = vsel %vm1235, %v3291, 0
      %v3371 = vsel %vm1235, %v3299, 0
      %v3374 = vsel %vm1235, %v3307, 0
      %v3377 = vsel %vm1235, %v3315, 0
      %v3380 = vsel %vm1235, %v3323, 0
      %v3383 = vsel %vm1235, %v3331, 0
      %v3386 = vsel %vm1235, %v3339, 0
      %v3389 = vand.u32 %v3207, %v1287
      %3391 = vmatprep.subr.bf16.mxu0 0
      %3392 = vmatpush1.bf16.msra.mxu0 %v3389
      %3393 = vmatprep.subr.bf16.mxu0 0
      %3394 = vmatpush1.bf16.msra.mxu0 0
      %3395 = vmatprep.subr.bf16.mxu0 0
      %3396 = vmatpush1.bf16.msra.mxu0 0
      %3397 = vmatprep.subr.bf16.mxu0 0
      %3398 = vmatpush1.bf16.msra.mxu0 0
      %3399 = vmatprep.subr.bf16.mxu0 0
      %3400 = vmatpush1.bf16.msra.mxu0 0
      %3401 = vmatprep.subr.bf16.mxu0 0
      %3402 = vmatpush1.bf16.msra.mxu0 0
      %3403 = vmatprep.subr.bf16.mxu0 0
      %3404 = vmatpush1.bf16.msra.mxu0 0
      %3405 = vmatprep.subr.bf16.mxu0 0
      %3406 = vmatpush1.bf16.msra.mxu0 0
      %3407 = vmatprep.subr.bf16.mxu0 0
      %3408 = vmatpush1.bf16.msra.mxu0 0
      %3409 = vmatprep.subr.bf16.mxu0 0
      %3410 = vmatpush1.bf16.msra.mxu0 0
      %3411 = vmatprep.subr.bf16.mxu0 0
      %3412 = vmatpush1.bf16.msra.mxu0 0
      %3413 = vmatprep.subr.bf16.mxu0 0
      %3414 = vmatpush1.bf16.msra.mxu0 0
      %3415 = vmatprep.subr.bf16.mxu0 0
      %3416 = vmatpush1.bf16.msra.mxu0 0
      %3417 = vmatprep.subr.bf16.mxu0 0
      %3418 = vmatpush1.bf16.msra.mxu0 0
      %3419 = vmatprep.subr.bf16.mxu0 0
      %3420 = vmatpush1.bf16.msra.mxu0 0
      %3421 = vmatprep.subr.bf16.mxu0 0
      %3422 = vmatpush1.bf16.msra.mxu0 0
      %3423 = vmatprep.mubr.bf16.mxu0 0
      %3424 = vmatmul.mubr.bf16.gmra.mrb[0].mxu0 %v3341
      %v3425 = vpop.f32.mrb[0].mxu0
      %v3426 = vadd.f32 0.0, %v3425
      %v3427 = vpop.f32.mrb[0].mxu0
      %v3428 = vpop.f32.mrb[0].mxu0
      %v3429 = vadd.f32 0.0, %v3428
      %v3430 = vpop.f32.mrb[0].mxu0
      %3431 = vmatprep.mubr.bf16.mxu0 0
      %3432 = vmatmul.mubr.bf16.gmra.mrb[0].mxu0 %v3344
      %v3433 = vpop.f32.mrb[0].mxu0
      %v3434 = vadd.f32 0.0, %v3433
      %v3435 = vpop.f32.mrb[0].mxu0
      %v3436 = vpop.f32.mrb[0].mxu0
      %v3437 = vadd.f32 0.0, %v3436
      %v3438 = vpop.f32.mrb[0].mxu0
      %3439 = vmatprep.mubr.bf16.mxu0 0
      %3440 = vmatmul.mubr.bf16.gmra.mrb[0].mxu0 %v3347
      %v3441 = vpop.f32.mrb[0].mxu0
      %v3442 = vadd.f32 0.0, %v3441
      %v3443 = vpop.f32.mrb[0].mxu0
      %v3444 = vpop.f32.mrb[0].mxu0
      %v3445 = vadd.f32 0.0, %v3444
      %v3446 = vpop.f32.mrb[0].mxu0
      %3447 = vmatprep.mubr.bf16.mxu0 0
      %3448 = vmatmul.mubr.bf16.gmra.mrb[0].mxu0 %v3350
      %v3449 = vpop.f32.mrb[0].mxu0
      %v3450 = vadd.f32 0.0, %v3449
      %v3451 = vpop.f32.mrb[0].mxu0
      %v3452 = vpop.f32.mrb[0].mxu0
      %v3453 = vadd.f32 0.0, %v3452
      %v3454 = vpop.f32.mrb[0].mxu0
      %3455 = vmatprep.mubr.bf16.mxu0 0
      %3456 = vmatmul.mubr.bf16.gmra.mrb[0].mxu0 %v3353
      %v3457 = vpop.f32.mrb[0].mxu0
      %v3458 = vadd.f32 0.0, %v3457
      %v3459 = vpop.f32.mrb[0].mxu0
      %v3460 = vpop.f32.mrb[0].mxu0
      %v3461 = vadd.f32 0.0, %v3460
      %v3462 = vpop.f32.mrb[0].mxu0
      %3463 = vmatprep.mubr.bf16.mxu0 0
      %3464 = vmatmul.mubr.bf16.gmra.mrb[0].mxu0 %v3356
      %v3465 = vpop.f32.mrb[0].mxu0
      %v3466 = vadd.f32 0.0, %v3465
      %v3467 = vpop.f32.mrb[0].mxu0
      %v3468 = vpop.f32.mrb[0].mxu0
      %v3469 = vadd.f32 0.0, %v3468
      %v3470 = vpop.f32.mrb[0].mxu0
      %3471 = vmatprep.mubr.bf16.mxu0 0
      %3472 = vmatmul.mubr.bf16.gmra.mrb[0].mxu0 %v3359
      %v3473 = vpop.f32.mrb[0].mxu0
      %v3474 = vadd.f32 0.0, %v3473
      %v3475 = vpop.f32.mrb[0].mxu0
      %v3476 = vpop.f32.mrb[0].mxu0
      %v3477 = vadd.f32 0.0, %v3476
      %v3478 = vpop.f32.mrb[0].mxu0
      %3479 = vmatprep.mubr.bf16.mxu0 0
      %3480 = vmatmul.mubr.bf16.gmra.mrb[0].mxu0 %v3362
      %v3481 = vpop.f32.mrb[0].mxu0
      %v3482 = vadd.f32 0.0, %v3481
      %v3483 = vpop.f32.mrb[0].mxu0
      %v3484 = vpop.f32.mrb[0].mxu0
      %v3485 = vadd.f32 0.0, %v3484
      %v3486 = vpop.f32.mrb[0].mxu0
      %3487 = vmatprep.mubr.bf16.mxu0 0
      %3488 = vmatmul.mubr.bf16.gmra.mrb[0].mxu0 %v3365
      %v3489 = vpop.f32.mrb[0].mxu0
      %v3490 = vadd.f32 0.0, %v3489
      %v3491 = vpop.f32.mrb[0].mxu0
      %v3492 = vpop.f32.mrb[0].mxu0
      %v3493 = vadd.f32 0.0, %v3492
      %v3494 = vpop.f32.mrb[0].mxu0
      %3495 = vmatprep.mubr.bf16.mxu0 0
      %3496 = vmatmul.mubr.bf16.gmra.mrb[0].mxu0 %v3368
      %v3497 = vpop.f32.mrb[0].mxu0
      %v3498 = vadd.f32 0.0, %v3497
      %v3499 = vpop.f32.mrb[0].mxu0
      %v3500 = vpop.f32.mrb[0].mxu0
      %v3501 = vadd.f32 0.0, %v3500
      %v3502 = vpop.f32.mrb[0].mxu0
      %3503 = vmatprep.mubr.bf16.mxu0 0
      %3504 = vmatmul.mubr.bf16.gmra.mrb[0].mxu0 %v3371
      %v3505 = vpop.f32.mrb[0].mxu0
      %v3506 = vadd.f32 0.0, %v3505
      %v3507 = vpop.f32.mrb[0].mxu0
      %v3508 = vpop.f32.mrb[0].mxu0
      %v3509 = vadd.f32 0.0, %v3508
      %v3510 = vpop.f32.mrb[0].mxu0
      %3511 = vmatprep.mubr.bf16.mxu0 0
      %3512 = vmatmul.mubr.bf16.gmra.mrb[0].mxu0 %v3374
      %v3513 = vpop.f32.mrb[0].mxu0
      %v3514 = vadd.f32 0.0, %v3513
      %v3515 = vpop.f32.mrb[0].mxu0
      %v3516 = vpop.f32.mrb[0].mxu0
      %v3517 = vadd.f32 0.0, %v3516
      %v3518 = vpop.f32.mrb[0].mxu0
      %3519 = vmatprep.mubr.bf16.mxu0 0
      %3520 = vmatmul.mubr.bf16.gmra.mrb[0].mxu0 %v3377
      %v3521 = vpop.f32.mrb[0].mxu0
      %v3522 = vadd.f32 0.0, %v3521
      %v3523 = vpop.f32.mrb[0].mxu0
      %v3524 = vpop.f32.mrb[0].mxu0
      %v3525 = vadd.f32 0.0, %v3524
      %v3526 = vpop.f32.mrb[0].mxu0
      %3527 = vmatprep.mubr.bf16.mxu0 0
      %3528 = vmatmul.mubr.bf16.gmra.mrb[0].mxu0 %v3380
      %v3529 = vpop.f32.mrb[0].mxu0
      %v3530 = vadd.f32 0.0, %v3529
      %v3531 = vpop.f32.mrb[0].mxu0
      %v3532 = vpop.f32.mrb[0].mxu0
      %v3533 = vadd.f32 0.0, %v3532
      %v3534 = vpop.f32.mrb[0].mxu0
      %3535 = vmatprep.mubr.bf16.mxu0 0
      %3536 = vmatmul.mubr.bf16.gmra.mrb[0].mxu0 %v3383
      %v3537 = vpop.f32.mrb[0].mxu0
      %v3538 = vadd.f32 0.0, %v3537
      %v3539 = vpop.f32.mrb[0].mxu0
      %v3540 = vpop.f32.mrb[0].mxu0
      %v3541 = vadd.f32 0.0, %v3540
      %v3542 = vpop.f32.mrb[0].mxu0
      %3543 = vmatprep.mubr.bf16.mxu0 0
      %3544 = vmatmul.mubr.bf16.gmra.mrb[0].mxu0 %v3386
      %v3545 = vpop.f32.mrb[0].mxu0
      %v3546 = vadd.f32 0.0, %v3545
      %v3547 = vpop.f32.mrb[0].mxu0
      %v3548 = vpop.f32.mrb[0].mxu0
      %v3549 = vadd.f32 0.0, %v3548
      %v3550 = vpop.f32.mrb[0].mxu0
      %3551 = vdwg.mxu0
      %v3552 = vadd.f32 %v3140, %v3426
      %v3553 = vadd.f32 %v3141, %v3429
      %v3554 = vadd.f32 %v3142, %v3434
      %v3555 = vadd.f32 %v3143, %v3437
      %v3556 = vadd.f32 %v3144, %v3442
      %v3557 = vadd.f32 %v3145, %v3445
      %v3558 = vadd.f32 %v3146, %v3450
      %v3559 = vadd.f32 %v3147, %v3453
      %v3560 = vadd.f32 %v3148, %v3458
      %v3561 = vadd.f32 %v3149, %v3461
      %v3562 = vadd.f32 %v3150, %v3466
      %v3563 = vadd.f32 %v3151, %v3469
      %v3564 = vadd.f32 %v3152, %v3474
      %v3565 = vadd.f32 %v3153, %v3477
      %v3566 = vadd.f32 %v3154, %v3482
      %v3567 = vadd.f32 %v3155, %v3485
      %v3568 = vadd.f32 %v3156, %v3490
      %v3569 = vadd.f32 %v3157, %v3493
      %v3570 = vadd.f32 %v3158, %v3498
      %v3571 = vadd.f32 %v3159, %v3501
      %v3572 = vadd.f32 %v3160, %v3506
      %v3573 = vadd.f32 %v3161, %v3509
      %v3574 = vadd.f32 %v3162, %v3514
      %v3575 = vadd.f32 %v3163, %v3517
      %v3576 = vadd.f32 %v3164, %v3522
      %v3577 = vadd.f32 %v3165, %v3525
      %v3578 = vadd.f32 %v3166, %v3530
      %v3579 = vadd.f32 %v3167, %v3533
      %v3580 = vadd.f32 %v3168, %v3538
      %v3581 = vadd.f32 %v3169, %v3541
      %v3582 = vadd.f32 %v3170, %v3546
      %v3583 = vadd.f32 %v3171, %v3549
      %v3584 = vld [vmem:[#allocation2 + $0x10] sm:$0x80]
      %v3585 = vld [vmem:[#allocation2 + $0x90] sm:$0xff]
      %v3586 = vsel %vm1198, %v3584, 0
      %v3587 = vsel %vm1199, %v3173, 0
      %v3588 = vsel %vm1200, %v3174, 0
      %v3589 = vsel %vm1201, %v3175, 0
      %v3590 = vsel %vm1202, %v3176, 0
      %v3591 = vsel %vm1203, %v3177, 0
      %v3592 = vsel %vm1204, %v3178, 0
      %v3593 = vsel %vm1205, %v3179, 0
      %v3594 = vsel %vm1206, %v3180, 0
      %v3595 = vsel %vm1207, %v3181, 0
      %v3596 = vsel %vm1208, %v3182, 0
      %v3597 = vsel %vm1209, %v3183, 0
      %v3598 = vsel %vm1210, %v3184, 0
      %v3599 = vsel %vm1211, %v3185, 0
      %v3600 = vsel %vm1212, %v3186, 0
      %v3601 = vsel %vm1213, %v3187, 0
      %v3602 = vsel %vm1214, %v3585, 0
      %s3603 = scalar_lea.vmem %s223, 12
      %v3604 = vld [vmem:[%s3603] sm:$0x3]
      %v3606 = vshrl.u32 %v3586, 16
      %v3608 = vrot.slane %v3606, 7
      %v3610 = vshrl.u32 %v3587, 16
      %v3612 = vrot.slane %v3610, 7
      %v3613 = vshll.u32 %v3587, 16
      %v3615 = vor.u32 %v3612, %v3613
      %v3616 = vsel %vm1452, %v3608, %v3615
      %v3618 = vshrl.u32 %v3588, 16
      %v3620 = vrot.slane %v3618, 7
      %v3621 = vshll.u32 %v3588, 16
      %v3623 = vor.u32 %v3620, %v3621
      %v3624 = vsel %vm1452, %v3612, %v3623
      %v3626 = vshrl.u32 %v3589, 16
      %v3628 = vrot.slane %v3626, 7
      %v3629 = vshll.u32 %v3589, 16
      %v3631 = vor.u32 %v3628, %v3629
      %v3632 = vsel %vm1452, %v3620, %v3631
      %v3634 = vshrl.u32 %v3590, 16
      %v3636 = vrot.slane %v3634, 7
      %v3637 = vshll.u32 %v3590, 16
      %v3639 = vor.u32 %v3636, %v3637
      %v3640 = vsel %vm1452, %v3628, %v3639
      %v3642 = vshrl.u32 %v3591, 16
      %v3644 = vrot.slane %v3642, 7
      %v3645 = vshll.u32 %v3591, 16
      %v3647 = vor.u32 %v3644, %v3645
      %v3648 = vsel %vm1452, %v3636, %v3647
      %v3650 = vshrl.u32 %v3592, 16
      %v3652 = vrot.slane %v3650, 7
      %v3653 = vshll.u32 %v3592, 16
      %v3655 = vor.u32 %v3652, %v3653
      %v3656 = vsel %vm1452, %v3644, %v3655
      %v3658 = vshrl.u32 %v3593, 16
      %v3660 = vrot.slane %v3658, 7
      %v3661 = vshll.u32 %v3593, 16
      %v3663 = vor.u32 %v3660, %v3661
      %v3664 = vsel %vm1452, %v3652, %v3663
      %v3666 = vshrl.u32 %v3594, 16
      %v3668 = vrot.slane %v3666, 7
      %v3669 = vshll.u32 %v3594, 16
      %v3671 = vor.u32 %v3668, %v3669
      %v3672 = vsel %vm1452, %v3660, %v3671
      %v3674 = vshrl.u32 %v3595, 16
      %v3676 = vrot.slane %v3674, 7
      %v3677 = vshll.u32 %v3595, 16
      %v3679 = vor.u32 %v3676, %v3677
      %v3680 = vsel %vm1452, %v3668, %v3679
      %v3682 = vshrl.u32 %v3596, 16
      %v3684 = vrot.slane %v3682, 7
      %v3685 = vshll.u32 %v3596, 16
      %v3687 = vor.u32 %v3684, %v3685
      %v3688 = vsel %vm1452, %v3676, %v3687
      %v3690 = vshrl.u32 %v3597, 16
      %v3692 = vrot.slane %v3690, 7
      %v3693 = vshll.u32 %v3597, 16
      %v3695 = vor.u32 %v3692, %v3693
      %v3696 = vsel %vm1452, %v3684, %v3695
      %v3698 = vshrl.u32 %v3598, 16
      %v3700 = vrot.slane %v3698, 7
      %v3701 = vshll.u32 %v3598, 16
      %v3703 = vor.u32 %v3700, %v3701
      %v3704 = vsel %vm1452, %v3692, %v3703
      %v3706 = vshrl.u32 %v3599, 16
      %v3708 = vrot.slane %v3706, 7
      %v3709 = vshll.u32 %v3599, 16
      %v3711 = vor.u32 %v3708, %v3709
      %v3712 = vsel %vm1452, %v3700, %v3711
      %v3714 = vshrl.u32 %v3600, 16
      %v3716 = vrot.slane %v3714, 7
      %v3717 = vshll.u32 %v3600, 16
      %v3719 = vor.u32 %v3716, %v3717
      %v3720 = vsel %vm1452, %v3708, %v3719
      %v3722 = vshrl.u32 %v3601, 16
      %v3724 = vrot.slane %v3722, 7
      %v3725 = vshll.u32 %v3601, 16
      %v3727 = vor.u32 %v3724, %v3725
      %v3728 = vsel %vm1452, %v3716, %v3727
      %v3730 = vshrl.u32 %v3602, 16
      %v3732 = vrot.slane %v3730, 7
      %v3733 = vshll.u32 %v3602, 16
      %v3735 = vor.u32 %v3732, %v3733
      %v3736 = vsel %vm1452, %v3724, %v3735
      %v3738 = vsel %vm1235, %v3616, 0
      %v3741 = vsel %vm1235, %v3624, 0
      %v3744 = vsel %vm1235, %v3632, 0
      %v3747 = vsel %vm1235, %v3640, 0
      %v3750 = vsel %vm1235, %v3648, 0
      %v3753 = vsel %vm1235, %v3656, 0
      %v3756 = vsel %vm1235, %v3664, 0
      %v3759 = vsel %vm1235, %v3672, 0
      %v3762 = vsel %vm1235, %v3680, 0
      %v3765 = vsel %vm1235, %v3688, 0
      %v3768 = vsel %vm1235, %v3696, 0
      %v3771 = vsel %vm1235, %v3704, 0
      %v3774 = vsel %vm1235, %v3712, 0
      %v3777 = vsel %vm1235, %v3720, 0
      %v3780 = vsel %vm1235, %v3728, 0
      %v3783 = vsel %vm1235, %v3736, 0
      %v3786 = vand.u32 %v3604, %v1287
      %3788 = vmatprep.subr.bf16.mxu0 0
      %3789 = vmatpush1.bf16.msra.mxu0 %v3786
      %3790 = vmatprep.subr.bf16.mxu0 0
      %3791 = vmatpush1.bf16.msra.mxu0 0
      %3792 = vmatprep.subr.bf16.mxu0 0
      %3793 = vmatpush1.bf16.msra.mxu0 0
      %3794 = vmatprep.subr.bf16.mxu0 0
      %3795 = vmatpush1.bf16.msra.mxu0 0
      %3796 = vmatprep.subr.bf16.mxu0 0
      %3797 = vmatpush1.bf16.msra.mxu0 0
      %3798 = vmatprep.subr.bf16.mxu0 0
      %3799 = vmatpush1.bf16.msra.mxu0 0
      %3800 = vmatprep.subr.bf16.mxu0 0
      %3801 = vmatpush1.bf16.msra.mxu0 0
      %3802 = vmatprep.subr.bf16.mxu0 0
      %3803 = vmatpush1.bf16.msra.mxu0 0
      %3804 = vmatprep.subr.bf16.mxu0 0
      %3805 = vmatpush1.bf16.msra.mxu0 0
      %3806 = vmatprep.subr.bf16.mxu0 0
      %3807 = vmatpush1.bf16.msra.mxu0 0
      %3808 = vmatprep.subr.bf16.mxu0 0
      %3809 = vmatpush1.bf16.msra.mxu0 0
      %3810 = vmatprep.subr.bf16.mxu0 0
      %3811 = vmatpush1.bf16.msra.mxu0 0
      %3812 = vmatprep.subr.bf16.mxu0 0
      %3813 = vmatpush1.bf16.msra.mxu0 0
      %3814 = vmatprep.subr.bf16.mxu0 0
      %3815 = vmatpush1.bf16.msra.mxu0 0
      %3816 = vmatprep.subr.bf16.mxu0 0
      %3817 = vmatpush1.bf16.msra.mxu0 0
      %3818 = vmatprep.subr.bf16.mxu0 0
      %3819 = vmatpush1.bf16.msra.mxu0 0
      %3820 = vmatprep.mubr.bf16.mxu0 0
      %3821 = vmatmul.mubr.bf16.gmra.mrb[0].mxu0 %v3738
      %v3822 = vpop.f32.mrb[0].mxu0
      %v3823 = vadd.f32 0.0, %v3822
      %v3824 = vpop.f32.mrb[0].mxu0
      %v3825 = vpop.f32.mrb[0].mxu0
      %v3826 = vadd.f32 0.0, %v3825
      %v3827 = vpop.f32.mrb[0].mxu0
      %3828 = vmatprep.mubr.bf16.mxu0 0
      %3829 = vmatmul.mubr.bf16.gmra.mrb[0].mxu0 %v3741
      %v3830 = vpop.f32.mrb[0].mxu0
      %v3831 = vadd.f32 0.0, %v3830
      %v3832 = vpop.f32.mrb[0].mxu0
      %v3833 = vpop.f32.mrb[0].mxu0
      %v3834 = vadd.f32 0.0, %v3833
      %v3835 = vpop.f32.mrb[0].mxu0
      %3836 = vmatprep.mubr.bf16.mxu0 0
      %3837 = vmatmul.mubr.bf16.gmra.mrb[0].mxu0 %v3744
      %v3838 = vpop.f32.mrb[0].mxu0
      %v3839 = vadd.f32 0.0, %v3838
      %v3840 = vpop.f32.mrb[0].mxu0
      %v3841 = vpop.f32.mrb[0].mxu0
      %v3842 = vadd.f32 0.0, %v3841
      %v3843 = vpop.f32.mrb[0].mxu0
      %3844 = vmatprep.mubr.bf16.mxu0 0
      %3845 = vmatmul.mubr.bf16.gmra.mrb[0].mxu0 %v3747
      %v3846 = vpop.f32.mrb[0].mxu0
      %v3847 = vadd.f32 0.0, %v3846
      %v3848 = vpop.f32.mrb[0].mxu0
      %v3849 = vpop.f32.mrb[0].mxu0
      %v3850 = vadd.f32 0.0, %v3849
      %v3851 = vpop.f32.mrb[0].mxu0
      %3852 = vmatprep.mubr.bf16.mxu0 0
      %3853 = vmatmul.mubr.bf16.gmra.mrb[0].mxu0 %v3750
      %v3854 = vpop.f32.mrb[0].mxu0
      %v3855 = vadd.f32 0.0, %v3854
      %v3856 = vpop.f32.mrb[0].mxu0
      %v3857 = vpop.f32.mrb[0].mxu0
      %v3858 = vadd.f32 0.0, %v3857
      %v3859 = vpop.f32.mrb[0].mxu0
      %3860 = vmatprep.mubr.bf16.mxu0 0
      %3861 = vmatmul.mubr.bf16.gmra.mrb[0].mxu0 %v3753
      %v3862 = vpop.f32.mrb[0].mxu0
      %v3863 = vadd.f32 0.0, %v3862
      %v3864 = vpop.f32.mrb[0].mxu0
      %v3865 = vpop.f32.mrb[0].mxu0
      %v3866 = vadd.f32 0.0, %v3865
      %v3867 = vpop.f32.mrb[0].mxu0
      %3868 = vmatprep.mubr.bf16.mxu0 0
      %3869 = vmatmul.mubr.bf16.gmra.mrb[0].mxu0 %v3756
      %v3870 = vpop.f32.mrb[0].mxu0
      %v3871 = vadd.f32 0.0, %v3870
      %v3872 = vpop.f32.mrb[0].mxu0
      %v3873 = vpop.f32.mrb[0].mxu0
      %v3874 = vadd.f32 0.0, %v3873
      %v3875 = vpop.f32.mrb[0].mxu0
      %3876 = vmatprep.mubr.bf16.mxu0 0
      %3877 = vmatmul.mubr.bf16.gmra.mrb[0].mxu0 %v3759
      %v3878 = vpop.f32.mrb[0].mxu0
      %v3879 = vadd.f32 0.0, %v3878
      %v3880 = vpop.f32.mrb[0].mxu0
      %v3881 = vpop.f32.mrb[0].mxu0
      %v3882 = vadd.f32 0.0, %v3881
      %v3883 = vpop.f32.mrb[0].mxu0
      %3884 = vmatprep.mubr.bf16.mxu0 0
      %3885 = vmatmul.mubr.bf16.gmra.mrb[0].mxu0 %v3762
      %v3886 = vpop.f32.mrb[0].mxu0
      %v3887 = vadd.f32 0.0, %v3886
      %v3888 = vpop.f32.mrb[0].mxu0
      %v3889 = vpop.f32.mrb[0].mxu0
      %v3890 = vadd.f32 0.0, %v3889
      %v3891 = vpop.f32.mrb[0].mxu0
      %3892 = vmatprep.mubr.bf16.mxu0 0
      %3893 = vmatmul.mubr.bf16.gmra.mrb[0].mxu0 %v3765
      %v3894 = vpop.f32.mrb[0].mxu0
      %v3895 = vadd.f32 0.0, %v3894
      %v3896 = vpop.f32.mrb[0].mxu0
      %v3897 = vpop.f32.mrb[0].mxu0
      %v3898 = vadd.f32 0.0, %v3897
      %v3899 = vpop.f32.mrb[0].mxu0
      %3900 = vmatprep.mubr.bf16.mxu0 0
      %3901 = vmatmul.mubr.bf16.gmra.mrb[0].mxu0 %v3768
      %v3902 = vpop.f32.mrb[0].mxu0
      %v3903 = vadd.f32 0.0, %v3902
      %v3904 = vpop.f32.mrb[0].mxu0
      %v3905 = vpop.f32.mrb[0].mxu0
      %v3906 = vadd.f32 0.0, %v3905
      %v3907 = vpop.f32.mrb[0].mxu0
      %3908 = vmatprep.mubr.bf16.mxu0 0
      %3909 = vmatmul.mubr.bf16.gmra.mrb[0].mxu0 %v3771
      %v3910 = vpop.f32.mrb[0].mxu0
      %v3911 = vadd.f32 0.0, %v3910
      %v3912 = vpop.f32.mrb[0].mxu0
      %v3913 = vpop.f32.mrb[0].mxu0
      %v3914 = vadd.f32 0.0, %v3913
      %v3915 = vpop.f32.mrb[0].mxu0
      %3916 = vmatprep.mubr.bf16.mxu0 0
      %3917 = vmatmul.mubr.bf16.gmra.mrb[0].mxu0 %v3774
      %v3918 = vpop.f32.mrb[0].mxu0
      %v3919 = vadd.f32 0.0, %v3918
      %v3920 = vpop.f32.mrb[0].mxu0
      %v3921 = vpop.f32.mrb[0].mxu0
      %v3922 = vadd.f32 0.0, %v3921
      %v3923 = vpop.f32.mrb[0].mxu0
      %3924 = vmatprep.mubr.bf16.mxu0 0
      %3925 = vmatmul.mubr.bf16.gmra.mrb[0].mxu0 %v3777
      %v3926 = vpop.f32.mrb[0].mxu0
      %v3927 = vadd.f32 0.0, %v3926
      %v3928 = vpop.f32.mrb[0].mxu0
      %v3929 = vpop.f32.mrb[0].mxu0
      %v3930 = vadd.f32 0.0, %v3929
      %v3931 = vpop.f32.mrb[0].mxu0
      %3932 = vmatprep.mubr.bf16.mxu0 0
      %3933 = vmatmul.mubr.bf16.gmra.mrb[0].mxu0 %v3780
      %v3934 = vpop.f32.mrb[0].mxu0
      %v3935 = vadd.f32 0.0, %v3934
      %v3936 = vpop.f32.mrb[0].mxu0
      %v3937 = vpop.f32.mrb[0].mxu0
      %v3938 = vadd.f32 0.0, %v3937
      %v3939 = vpop.f32.mrb[0].mxu0
      %3940 = vmatprep.mubr.bf16.mxu0 0
      %3941 = vmatmul.mubr.bf16.gmra.mrb[0].mxu0 %v3783
      %v3942 = vpop.f32.mrb[0].mxu0
      %v3943 = vadd.f32 0.0, %v3942
      %v3944 = vpop.f32.mrb[0].mxu0
      %v3945 = vpop.f32.mrb[0].mxu0
      %v3946 = vadd.f32 0.0, %v3945
      %v3947 = vpop.f32.mrb[0].mxu0
      %3948 = vdwg.mxu0
      %v3949 = vadd.f32 %v3552, %v3823
      %v3950 = vadd.f32 %v3553, %v3826
      %v3951 = vadd.f32 %v3554, %v3831
      %v3952 = vadd.f32 %v3555, %v3834
      %v3953 = vadd.f32 %v3556, %v3839
      %v3954 = vadd.f32 %v3557, %v3842
      %v3955 = vadd.f32 %v3558, %v3847
      %v3956 = vadd.f32 %v3559, %v3850
      %v3957 = vadd.f32 %v3560, %v3855
      %v3958 = vadd.f32 %v3561, %v3858
      %v3959 = vadd.f32 %v3562, %v3863
      %v3960 = vadd.f32 %v3563, %v3866
      %v3961 = vadd.f32 %v3564, %v3871
      %v3962 = vadd.f32 %v3565, %v3874
      %v3963 = vadd.f32 %v3566, %v3879
      %v3964 = vadd.f32 %v3567, %v3882
      %v3965 = vadd.f32 %v3568, %v3887
      %v3966 = vadd.f32 %v3569, %v3890
      %v3967 = vadd.f32 %v3570, %v3895
      %v3968 = vadd.f32 %v3571, %v3898
      %v3969 = vadd.f32 %v3572, %v3903
      %v3970 = vadd.f32 %v3573, %v3906
      %v3971 = vadd.f32 %v3574, %v3911
      %v3972 = vadd.f32 %v3575, %v3914
      %v3973 = vadd.f32 %v3576, %v3919
      %v3974 = vadd.f32 %v3577, %v3922
      %v3975 = vadd.f32 %v3578, %v3927
      %v3976 = vadd.f32 %v3579, %v3930
      %v3977 = vadd.f32 %v3580, %v3935
      %v3978 = vadd.f32 %v3581, %v3938
      %v3979 = vadd.f32 %v3582, %v3943
      %v3980 = vadd.f32 %v3583, %v3946
      %s3981 = scalar_lea.vmem %s223, 14
      %v3982 = vld [vmem:[%s3981] sm:$0x3]
      %v3984 = vsel %vm1235, %v3173, 0
      %v3987 = vsel %vm1235, %v3174, 0
      %v3990 = vsel %vm1235, %v3175, 0
      %v3993 = vsel %vm1235, %v3176, 0
      %v3996 = vsel %vm1235, %v3177, 0
      %v3999 = vsel %vm1235, %v3178, 0
      %v4002 = vsel %vm1235, %v3179, 0
      %v4005 = vsel %vm1235, %v3180, 0
      %v4008 = vsel %vm1235, %v3181, 0
      %v4011 = vsel %vm1235, %v3182, 0
      %v4014 = vsel %vm1235, %v3183, 0
      %v4017 = vsel %vm1235, %v3184, 0
      %v4020 = vsel %vm1235, %v3185, 0
      %v4023 = vsel %vm1235, %v3186, 0
      %v4026 = vsel %vm1235, %v3187, 0
      %v4029 = vsel %vm1235, %v3585, 0
      %v4032 = vand.u32 %v3982, %v1287
      %4034 = vmatprep.subr.bf16.mxu0 0
      %4035 = vmatpush1.bf16.msra.mxu0 %v4032
      %4036 = vmatprep.subr.bf16.mxu0 0
      %4037 = vmatpush1.bf16.msra.mxu0 0
      %4038 = vmatprep.subr.bf16.mxu0 0
      %4039 = vmatpush1.bf16.msra.mxu0 0
      %4040 = vmatprep.subr.bf16.mxu0 0
      %4041 = vmatpush1.bf16.msra.mxu0 0
      %4042 = vmatprep.subr.bf16.mxu0 0
      %4043 = vmatpush1.bf16.msra.mxu0 0
      %4044 = vmatprep.subr.bf16.mxu0 0
      %4045 = vmatpush1.bf16.msra.mxu0 0
      %4046 = vmatprep.subr.bf16.mxu0 0
      %4047 = vmatpush1.bf16.msra.mxu0 0
      %4048 = vmatprep.subr.bf16.mxu0 0
      %4049 = vmatpush1.bf16.msra.mxu0 0
      %4050 = vmatprep.subr.bf16.mxu0 0
      %4051 = vmatpush1.bf16.msra.mxu0 0
      %4052 = vmatprep.subr.bf16.mxu0 0
      %4053 = vmatpush1.bf16.msra.mxu0 0
      %4054 = vmatprep.subr.bf16.mxu0 0
      %4055 = vmatpush1.bf16.msra.mxu0 0
      %4056 = vmatprep.subr.bf16.mxu0 0
      %4057 = vmatpush1.bf16.msra.mxu0 0
      %4058 = vmatprep.subr.bf16.mxu0 0
      %4059 = vmatpush1.bf16.msra.mxu0 0
      %4060 = vmatprep.subr.bf16.mxu0 0
      %4061 = vmatpush1.bf16.msra.mxu0 0
      %4062 = vmatprep.subr.bf16.mxu0 0
      %4063 = vmatpush1.bf16.msra.mxu0 0
      %4064 = vmatprep.subr.bf16.mxu0 0
      %4065 = vmatpush1.bf16.msra.mxu0 0
      %4066 = vmatprep.mubr.bf16.mxu0 0
      %4067 = vmatmul.mubr.bf16.gmra.mrb[0].mxu0 %v3984
      %v4068 = vpop.f32.mrb[0].mxu0
      %v4069 = vadd.f32 0.0, %v4068
      %v4070 = vpop.f32.mrb[0].mxu0
      %v4071 = vpop.f32.mrb[0].mxu0
      %v4072 = vadd.f32 0.0, %v4071
      %v4073 = vpop.f32.mrb[0].mxu0
      %4074 = vmatprep.mubr.bf16.mxu0 0
      %4075 = vmatmul.mubr.bf16.gmra.mrb[0].mxu0 %v3987
      %v4076 = vpop.f32.mrb[0].mxu0
      %v4077 = vadd.f32 0.0, %v4076
      %v4078 = vpop.f32.mrb[0].mxu0
      %v4079 = vpop.f32.mrb[0].mxu0
      %v4080 = vadd.f32 0.0, %v4079
      %v4081 = vpop.f32.mrb[0].mxu0
      %4082 = vmatprep.mubr.bf16.mxu0 0
      %4083 = vmatmul.mubr.bf16.gmra.mrb[0].mxu0 %v3990
      %v4084 = vpop.f32.mrb[0].mxu0
      %v4085 = vadd.f32 0.0, %v4084
      %v4086 = vpop.f32.mrb[0].mxu0
      %v4087 = vpop.f32.mrb[0].mxu0
      %v4088 = vadd.f32 0.0, %v4087
      %v4089 = vpop.f32.mrb[0].mxu0
      %4090 = vmatprep.mubr.bf16.mxu0 0
      %4091 = vmatmul.mubr.bf16.gmra.mrb[0].mxu0 %v3993
      %v4092 = vpop.f32.mrb[0].mxu0
      %v4093 = vadd.f32 0.0, %v4092
      %v4094 = vpop.f32.mrb[0].mxu0
      %v4095 = vpop.f32.mrb[0].mxu0
      %v4096 = vadd.f32 0.0, %v4095
      %v4097 = vpop.f32.mrb[0].mxu0
      %4098 = vmatprep.mubr.bf16.mxu0 0
      %4099 = vmatmul.mubr.bf16.gmra.mrb[0].mxu0 %v3996
      %v4100 = vpop.f32.mrb[0].mxu0
      %v4101 = vadd.f32 0.0, %v4100
      %v4102 = vpop.f32.mrb[0].mxu0
      %v4103 = vpop.f32.mrb[0].mxu0
      %v4104 = vadd.f32 0.0, %v4103
      %v4105 = vpop.f32.mrb[0].mxu0
      %4106 = vmatprep.mubr.bf16.mxu0 0
      %4107 = vmatmul.mubr.bf16.gmra.mrb[0].mxu0 %v3999
      %v4108 = vpop.f32.mrb[0].mxu0
      %v4109 = vadd.f32 0.0, %v4108
      %v4110 = vpop.f32.mrb[0].mxu0
      %v4111 = vpop.f32.mrb[0].mxu0
      %v4112 = vadd.f32 0.0, %v4111
      %v4113 = vpop.f32.mrb[0].mxu0
      %4114 = vmatprep.mubr.bf16.mxu0 0
      %4115 = vmatmul.mubr.bf16.gmra.mrb[0].mxu0 %v4002
      %v4116 = vpop.f32.mrb[0].mxu0
      %v4117 = vadd.f32 0.0, %v4116
      %v4118 = vpop.f32.mrb[0].mxu0
      %v4119 = vpop.f32.mrb[0].mxu0
      %v4120 = vadd.f32 0.0, %v4119
      %v4121 = vpop.f32.mrb[0].mxu0
      %4122 = vmatprep.mubr.bf16.mxu0 0
      %4123 = vmatmul.mubr.bf16.gmra.mrb[0].mxu0 %v4005
      %v4124 = vpop.f32.mrb[0].mxu0
      %v4125 = vadd.f32 0.0, %v4124
      %v4126 = vpop.f32.mrb[0].mxu0
      %v4127 = vpop.f32.mrb[0].mxu0
      %v4128 = vadd.f32 0.0, %v4127
      %v4129 = vpop.f32.mrb[0].mxu0
      %4130 = vmatprep.mubr.bf16.mxu0 0
      %4131 = vmatmul.mubr.bf16.gmra.mrb[0].mxu0 %v4008
      %v4132 = vpop.f32.mrb[0].mxu0
      %v4133 = vadd.f32 0.0, %v4132
      %v4134 = vpop.f32.mrb[0].mxu0
      %v4135 = vpop.f32.mrb[0].mxu0
      %v4136 = vadd.f32 0.0, %v4135
      %v4137 = vpop.f32.mrb[0].mxu0
      %4138 = vmatprep.mubr.bf16.mxu0 0
      %4139 = vmatmul.mubr.bf16.gmra.mrb[0].mxu0 %v4011
      %v4140 = vpop.f32.mrb[0].mxu0
      %v4141 = vadd.f32 0.0, %v4140
      %v4142 = vpop.f32.mrb[0].mxu0
      %v4143 = vpop.f32.mrb[0].mxu0
      %v4144 = vadd.f32 0.0, %v4143
      %v4145 = vpop.f32.mrb[0].mxu0
      %4146 = vmatprep.mubr.bf16.mxu0 0
      %4147 = vmatmul.mubr.bf16.gmra.mrb[0].mxu0 %v4014
      %v4148 = vpop.f32.mrb[0].mxu0
      %v4149 = vadd.f32 0.0, %v4148
      %v4150 = vpop.f32.mrb[0].mxu0
      %v4151 = vpop.f32.mrb[0].mxu0
      %v4152 = vadd.f32 0.0, %v4151
      %v4153 = vpop.f32.mrb[0].mxu0
      %4154 = vmatprep.mubr.bf16.mxu0 0
      %4155 = vmatmul.mubr.bf16.gmra.mrb[0].mxu0 %v4017
      %v4156 = vpop.f32.mrb[0].mxu0
      %v4157 = vadd.f32 0.0, %v4156
      %v4158 = vpop.f32.mrb[0].mxu0
      %v4159 = vpop.f32.mrb[0].mxu0
      %v4160 = vadd.f32 0.0, %v4159
      %v4161 = vpop.f32.mrb[0].mxu0
      %4162 = vmatprep.mubr.bf16.mxu0 0
      %4163 = vmatmul.mubr.bf16.gmra.mrb[0].mxu0 %v4020
      %v4164 = vpop.f32.mrb[0].mxu0
      %v4165 = vadd.f32 0.0, %v4164
      %v4166 = vpop.f32.mrb[0].mxu0
      %v4167 = vpop.f32.mrb[0].mxu0
      %v4168 = vadd.f32 0.0, %v4167
      %v4169 = vpop.f32.mrb[0].mxu0
      %4170 = vmatprep.mubr.bf16.mxu0 0
      %4171 = vmatmul.mubr.bf16.gmra.mrb[0].mxu0 %v4023
      %v4172 = vpop.f32.mrb[0].mxu0
      %v4173 = vadd.f32 0.0, %v4172
      %v4174 = vpop.f32.mrb[0].mxu0
      %v4175 = vpop.f32.mrb[0].mxu0
      %v4176 = vadd.f32 0.0, %v4175
      %v4177 = vpop.f32.mrb[0].mxu0
      %4178 = vmatprep.mubr.bf16.mxu0 0
      %4179 = vmatmul.mubr.bf16.gmra.mrb[0].mxu0 %v4026
      %v4180 = vpop.f32.mrb[0].mxu0
      %v4181 = vadd.f32 0.0, %v4180
      %v4182 = vpop.f32.mrb[0].mxu0
      %v4183 = vpop.f32.mrb[0].mxu0
      %v4184 = vadd.f32 0.0, %v4183
      %v4185 = vpop.f32.mrb[0].mxu0
      %4186 = vmatprep.mubr.bf16.mxu0 0
      %4187 = vmatmul.mubr.bf16.gmra.mrb[0].mxu0 %v4029
      %v4188 = vpop.f32.mrb[0].mxu0
      %v4189 = vadd.f32 0.0, %v4188
      %v4190 = vpop.f32.mrb[0].mxu0
      %v4191 = vpop.f32.mrb[0].mxu0
      %v4192 = vadd.f32 0.0, %v4191
      %v4193 = vpop.f32.mrb[0].mxu0
      %4194 = vdwg.mxu0
      %v4195 = vadd.f32 %v3949, %v4069
      %v4196 = vadd.f32 %v3950, %v4072
      %v4197 = vadd.f32 %v3951, %v4077
      %v4198 = vadd.f32 %v3952, %v4080
      %v4199 = vadd.f32 %v3953, %v4085
      %v4200 = vadd.f32 %v3954, %v4088
      %v4201 = vadd.f32 %v3955, %v4093
      %v4202 = vadd.f32 %v3956, %v4096
      %v4203 = vadd.f32 %v3957, %v4101
      %v4204 = vadd.f32 %v3958, %v4104
      %v4205 = vadd.f32 %v3959, %v4109
      %v4206 = vadd.f32 %v3960, %v4112
      %v4207 = vadd.f32 %v3961, %v4117
      %v4208 = vadd.f32 %v3962, %v4120
      %v4209 = vadd.f32 %v3963, %v4125
      %v4210 = vadd.f32 %v3964, %v4128
      %v4211 = vadd.f32 %v3965, %v4133
      %v4212 = vadd.f32 %v3966, %v4136
      %v4213 = vadd.f32 %v3967, %v4141
      %v4214 = vadd.f32 %v3968, %v4144
      %v4215 = vadd.f32 %v3969, %v4149
      %v4216 = vadd.f32 %v3970, %v4152
      %v4217 = vadd.f32 %v3971, %v4157
      %v4218 = vadd.f32 %v3972, %v4160
      %v4219 = vadd.f32 %v3973, %v4165
      %v4220 = vadd.f32 %v3974, %v4168
      %v4221 = vadd.f32 %v3975, %v4173
      %v4222 = vadd.f32 %v3976, %v4176
      %v4223 = vadd.f32 %v3977, %v4181
      %v4224 = vadd.f32 %v3978, %v4184
      %v4225 = vadd.f32 %v3979, %v4189
      %v4226 = vadd.f32 %v3980, %v4192
      %v4227 = vld [vmem:[#allocation2 + $0x18] sm:$0xff]
      %v4228 = vld [vmem:[#allocation2 + $0x20] sm:$0xff]
      %v4229 = vld [vmem:[#allocation2 + $0x28] sm:$0xff]
      %v4230 = vld [vmem:[#allocation2 + $0x30] sm:$0xff]
      %v4231 = vld [vmem:[#allocation2 + $0x38] sm:$0xff]
      %v4232 = vld [vmem:[#allocation2 + $0x40] sm:$0xff]
      %v4233 = vld [vmem:[#allocation2 + $0x48] sm:$0xff]
      %v4234 = vld [vmem:[#allocation2 + $0x50] sm:$0xff]
      %v4235 = vld [vmem:[#allocation2 + $0x58] sm:$0xff]
      %v4236 = vld [vmem:[#allocation2 + $0x60] sm:$0xff]
      %v4237 = vld [vmem:[#allocation2 + $0x68] sm:$0xff]
      %v4238 = vld [vmem:[#allocation2 + $0x70] sm:$0xff]
      %v4239 = vld [vmem:[#allocation2 + $0x78] sm:$0xff]
      %v4240 = vld [vmem:[#allocation2 + $0x80] sm:$0xff]
      %v4241 = vld [vmem:[#allocation2 + $0x88] sm:$0xff]
      %v4242 = vld [vmem:[#allocation2 + $0x90] sm:$0xff]
      %v4243 = vld [vmem:[#allocation2 + $0x98] sm:$0x1]
      %v4244 = vsel %vm2117, %v4227, 0
      %v4245 = vsel %vm2118, %v4228, 0
      %v4246 = vsel %vm2119, %v4229, 0
      %v4247 = vsel %vm2120, %v4230, 0
      %v4248 = vsel %vm2121, %v4231, 0
      %v4249 = vsel %vm2122, %v4232, 0
      %v4250 = vsel %vm2123, %v4233, 0
      %v4251 = vsel %vm2124, %v4234, 0
      %v4252 = vsel %vm2125, %v4235, 0
      %v4253 = vsel %vm2126, %v4236, 0
      %v4254 = vsel %vm2127, %v4237, 0
      %v4255 = vsel %vm2128, %v4238, 0
      %v4256 = vsel %vm2129, %v4239, 0
      %v4257 = vsel %vm2130, %v4240, 0
      %v4258 = vsel %vm2131, %v4241, 0
      %v4259 = vsel %vm2132, %v4242, 0
      %v4260 = vsel %vm2133, %v4243, 0
      %s4261 = scalar_lea.vmem %s223, 16
      %v4262 = vld [vmem:[%s4261] sm:$0x3]
      %v4264 = vshrl.u32 %v4244, 16
      %v4266 = vshll.u32 %v4244, 16
      %v4268 = vrot.slane %v4266, 1
      %v4269 = vor.u32 %v4264, %v4268
      %v4271 = vshll.u32 %v4245, 16
      %v4273 = vrot.slane %v4271, 1
      %v4274 = vsel %vm1070, %v4269, %v4273
      %v4275 = vshrl.u32 %v4245, 16
      %v4277 = vor.u32 %v4275, %v4273
      %v4279 = vshll.u32 %v4246, 16
      %v4281 = vrot.slane %v4279, 1
      %v4282 = vsel %vm1070, %v4277, %v4281
      %v4283 = vshrl.u32 %v4246, 16
      %v4285 = vor.u32 %v4283, %v4281
      %v4287 = vshll.u32 %v4247, 16
      %v4289 = vrot.slane %v4287, 1
      %v4290 = vsel %vm1070, %v4285, %v4289
      %v4291 = vshrl.u32 %v4247, 16
      %v4293 = vor.u32 %v4291, %v4289
      %v4295 = vshll.u32 %v4248, 16
      %v4297 = vrot.slane %v4295, 1
      %v4298 = vsel %vm1070, %v4293, %v4297
      %v4299 = vshrl.u32 %v4248, 16
      %v4301 = vor.u32 %v4299, %v4297
      %v4303 = vshll.u32 %v4249, 16
      %v4305 = vrot.slane %v4303, 1
      %v4306 = vsel %vm1070, %v4301, %v4305
      %v4307 = vshrl.u32 %v4249, 16
      %v4309 = vor.u32 %v4307, %v4305
      %v4311 = vshll.u32 %v4250, 16
      %v4313 = vrot.slane %v4311, 1
      %v4314 = vsel %vm1070, %v4309, %v4313
      %v4315 = vshrl.u32 %v4250, 16
      %v4317 = vor.u32 %v4315, %v4313
      %v4319 = vshll.u32 %v4251, 16
      %v4321 = vrot.slane %v4319, 1
      %v4322 = vsel %vm1070, %v4317, %v4321
      %v4323 = vshrl.u32 %v4251, 16
      %v4325 = vor.u32 %v4323, %v4321
      %v4327 = vshll.u32 %v4252, 16
      %v4329 = vrot.slane %v4327, 1
      %v4330 = vsel %vm1070, %v4325, %v4329
      %v4331 = vshrl.u32 %v4252, 16
      %v4333 = vor.u32 %v4331, %v4329
      %v4335 = vshll.u32 %v4253, 16
      %v4337 = vrot.slane %v4335, 1
      %v4338 = vsel %vm1070, %v4333, %v4337
      %v4339 = vshrl.u32 %v4253, 16
      %v4341 = vor.u32 %v4339, %v4337
      %v4343 = vshll.u32 %v4254, 16
      %v4345 = vrot.slane %v4343, 1
      %v4346 = vsel %vm1070, %v4341, %v4345
      %v4347 = vshrl.u32 %v4254, 16
      %v4349 = vor.u32 %v4347, %v4345
      %v4351 = vshll.u32 %v4255, 16
      %v4353 = vrot.slane %v4351, 1
      %v4354 = vsel %vm1070, %v4349, %v4353
      %v4355 = vshrl.u32 %v4255, 16
      %v4357 = vor.u32 %v4355, %v4353
      %v4359 = vshll.u32 %v4256, 16
      %v4361 = vrot.slane %v4359, 1
      %v4362 = vsel %vm1070, %v4357, %v4361
      %v4363 = vshrl.u32 %v4256, 16
      %v4365 = vor.u32 %v4363, %v4361
      %v4367 = vshll.u32 %v4257, 16
      %v4369 = vrot.slane %v4367, 1
      %v4370 = vsel %vm1070, %v4365, %v4369
      %v4371 = vshrl.u32 %v4257, 16
      %v4373 = vor.u32 %v4371, %v4369
      %v4375 = vshll.u32 %v4258, 16
      %v4377 = vrot.slane %v4375, 1
      %v4378 = vsel %vm1070, %v4373, %v4377
      %v4379 = vshrl.u32 %v4258, 16
      %v4381 = vor.u32 %v4379, %v4377
      %v4383 = vshll.u32 %v4259, 16
      %v4385 = vrot.slane %v4383, 1
      %v4386 = vsel %vm1070, %v4381, %v4385
      %v4387 = vshrl.u32 %v4259, 16
      %v4389 = vor.u32 %v4387, %v4385
      %v4391 = vshll.u32 %v4260, 16
      %v4393 = vrot.slane %v4391, 1
      %v4394 = vsel %vm1070, %v4389, %v4393
      %v4396 = vsel %vm1235, %v4274, 0
      %v4399 = vsel %vm1235, %v4282, 0
      %v4402 = vsel %vm1235, %v4290, 0
      %v4405 = vsel %vm1235, %v4298, 0
      %v4408 = vsel %vm1235, %v4306, 0
      %v4411 = vsel %vm1235, %v4314, 0
      %v4414 = vsel %vm1235, %v4322, 0
      %v4417 = vsel %vm1235, %v4330, 0
      %v4420 = vsel %vm1235, %v4338, 0
      %v4423 = vsel %vm1235, %v4346, 0
      %v4426 = vsel %vm1235, %v4354, 0
      %v4429 = vsel %vm1235, %v4362, 0
      %v4432 = vsel %vm1235, %v4370, 0
      %v4435 = vsel %vm1235, %v4378, 0
      %v4438 = vsel %vm1235, %v4386, 0
      %v4441 = vsel %vm1235, %v4394, 0
      %v4444 = vand.u32 %v4262, %v1287
      %4446 = vmatprep.subr.bf16.mxu0 0
      %4447 = vmatpush1.bf16.msra.mxu0 %v4444
      %4448 = vmatprep.subr.bf16.mxu0 0
      %4449 = vmatpush1.bf16.msra.mxu0 0
      %4450 = vmatprep.subr.bf16.mxu0 0
      %4451 = vmatpush1.bf16.msra.mxu0 0
      %4452 = vmatprep.subr.bf16.mxu0 0
      %4453 = vmatpush1.bf16.msra.mxu0 0
      %4454 = vmatprep.subr.bf16.mxu0 0
      %4455 = vmatpush1.bf16.msra.mxu0 0
      %4456 = vmatprep.subr.bf16.mxu0 0
      %4457 = vmatpush1.bf16.msra.mxu0 0
      %4458 = vmatprep.subr.bf16.mxu0 0
      %4459 = vmatpush1.bf16.msra.mxu0 0
      %4460 = vmatprep.subr.bf16.mxu0 0
      %4461 = vmatpush1.bf16.msra.mxu0 0
      %4462 = vmatprep.subr.bf16.mxu0 0
      %4463 = vmatpush1.bf16.msra.mxu0 0
      %4464 = vmatprep.subr.bf16.mxu0 0
      %4465 = vmatpush1.bf16.msra.mxu0 0
      %4466 = vmatprep.subr.bf16.mxu0 0
      %4467 = vmatpush1.bf16.msra.mxu0 0
      %4468 = vmatprep.subr.bf16.mxu0 0
      %4469 = vmatpush1.bf16.msra.mxu0 0
      %4470 = vmatprep.subr.bf16.mxu0 0
      %4471 = vmatpush1.bf16.msra.mxu0 0
      %4472 = vmatprep.subr.bf16.mxu0 0
      %4473 = vmatpush1.bf16.msra.mxu0 0
      %4474 = vmatprep.subr.bf16.mxu0 0
      %4475 = vmatpush1.bf16.msra.mxu0 0
      %4476 = vmatprep.subr.bf16.mxu0 0
      %4477 = vmatpush1.bf16.msra.mxu0 0
      %4478 = vmatprep.mubr.bf16.mxu0 0
      %4479 = vmatmul.mubr.bf16.gmra.mrb[0].mxu0 %v4396
      %v4480 = vpop.f32.mrb[0].mxu0
      %v4481 = vadd.f32 0.0, %v4480
      %v4482 = vpop.f32.mrb[0].mxu0
      %v4483 = vpop.f32.mrb[0].mxu0
      %v4484 = vadd.f32 0.0, %v4483
      %v4485 = vpop.f32.mrb[0].mxu0
      %4486 = vmatprep.mubr.bf16.mxu0 0
      %4487 = vmatmul.mubr.bf16.gmra.mrb[0].mxu0 %v4399
      %v4488 = vpop.f32.mrb[0].mxu0
      %v4489 = vadd.f32 0.0, %v4488
      %v4490 = vpop.f32.mrb[0].mxu0
      %v4491 = vpop.f32.mrb[0].mxu0
      %v4492 = vadd.f32 0.0, %v4491
      %v4493 = vpop.f32.mrb[0].mxu0
      %4494 = vmatprep.mubr.bf16.mxu0 0
      %4495 = vmatmul.mubr.bf16.gmra.mrb[0].mxu0 %v4402
      %v4496 = vpop.f32.mrb[0].mxu0
      %v4497 = vadd.f32 0.0, %v4496
      %v4498 = vpop.f32.mrb[0].mxu0
      %v4499 = vpop.f32.mrb[0].mxu0
      %v4500 = vadd.f32 0.0, %v4499
      %v4501 = vpop.f32.mrb[0].mxu0
      %4502 = vmatprep.mubr.bf16.mxu0 0
      %4503 = vmatmul.mubr.bf16.gmra.mrb[0].mxu0 %v4405
      %v4504 = vpop.f32.mrb[0].mxu0
      %v4505 = vadd.f32 0.0, %v4504
      %v4506 = vpop.f32.mrb[0].mxu0
      %v4507 = vpop.f32.mrb[0].mxu0
      %v4508 = vadd.f32 0.0, %v4507
      %v4509 = vpop.f32.mrb[0].mxu0
      %4510 = vmatprep.mubr.bf16.mxu0 0
      %4511 = vmatmul.mubr.bf16.gmra.mrb[0].mxu0 %v4408
      %v4512 = vpop.f32.mrb[0].mxu0
      %v4513 = vadd.f32 0.0, %v4512
      %v4514 = vpop.f32.mrb[0].mxu0
      %v4515 = vpop.f32.mrb[0].mxu0
      %v4516 = vadd.f32 0.0, %v4515
      %v4517 = vpop.f32.mrb[0].mxu0
      %4518 = vmatprep.mubr.bf16.mxu0 0
      %4519 = vmatmul.mubr.bf16.gmra.mrb[0].mxu0 %v4411
      %v4520 = vpop.f32.mrb[0].mxu0
      %v4521 = vadd.f32 0.0, %v4520
      %v4522 = vpop.f32.mrb[0].mxu0
      %v4523 = vpop.f32.mrb[0].mxu0
      %v4524 = vadd.f32 0.0, %v4523
      %v4525 = vpop.f32.mrb[0].mxu0
      %4526 = vmatprep.mubr.bf16.mxu0 0
      %4527 = vmatmul.mubr.bf16.gmra.mrb[0].mxu0 %v4414
      %v4528 = vpop.f32.mrb[0].mxu0
      %v4529 = vadd.f32 0.0, %v4528
      %v4530 = vpop.f32.mrb[0].mxu0
      %v4531 = vpop.f32.mrb[0].mxu0
      %v4532 = vadd.f32 0.0, %v4531
      %v4533 = vpop.f32.mrb[0].mxu0
      %4534 = vmatprep.mubr.bf16.mxu0 0
      %4535 = vmatmul.mubr.bf16.gmra.mrb[0].mxu0 %v4417
      %v4536 = vpop.f32.mrb[0].mxu0
      %v4537 = vadd.f32 0.0, %v4536
      %v4538 = vpop.f32.mrb[0].mxu0
      %v4539 = vpop.f32.mrb[0].mxu0
      %v4540 = vadd.f32 0.0, %v4539
      %v4541 = vpop.f32.mrb[0].mxu0
      %4542 = vmatprep.mubr.bf16.mxu0 0
      %4543 = vmatmul.mubr.bf16.gmra.mrb[0].mxu0 %v4420
      %v4544 = vpop.f32.mrb[0].mxu0
      %v4545 = vadd.f32 0.0, %v4544
      %v4546 = vpop.f32.mrb[0].mxu0
      %v4547 = vpop.f32.mrb[0].mxu0
      %v4548 = vadd.f32 0.0, %v4547
      %v4549 = vpop.f32.mrb[0].mxu0
      %4550 = vmatprep.mubr.bf16.mxu0 0
      %4551 = vmatmul.mubr.bf16.gmra.mrb[0].mxu0 %v4423
      %v4552 = vpop.f32.mrb[0].mxu0
      %v4553 = vadd.f32 0.0, %v4552
      %v4554 = vpop.f32.mrb[0].mxu0
      %v4555 = vpop.f32.mrb[0].mxu0
      %v4556 = vadd.f32 0.0, %v4555
      %v4557 = vpop.f32.mrb[0].mxu0
      %4558 = vmatprep.mubr.bf16.mxu0 0
      %4559 = vmatmul.mubr.bf16.gmra.mrb[0].mxu0 %v4426
      %v4560 = vpop.f32.mrb[0].mxu0
      %v4561 = vadd.f32 0.0, %v4560
      %v4562 = vpop.f32.mrb[0].mxu0
      %v4563 = vpop.f32.mrb[0].mxu0
      %v4564 = vadd.f32 0.0, %v4563
      %v4565 = vpop.f32.mrb[0].mxu0
      %4566 = vmatprep.mubr.bf16.mxu0 0
      %4567 = vmatmul.mubr.bf16.gmra.mrb[0].mxu0 %v4429
      %v4568 = vpop.f32.mrb[0].mxu0
      %v4569 = vadd.f32 0.0, %v4568
      %v4570 = vpop.f32.mrb[0].mxu0
      %v4571 = vpop.f32.mrb[0].mxu0
      %v4572 = vadd.f32 0.0, %v4571
      %v4573 = vpop.f32.mrb[0].mxu0
      %4574 = vmatprep.mubr.bf16.mxu0 0
      %4575 = vmatmul.mubr.bf16.gmra.mrb[0].mxu0 %v4432
      %v4576 = vpop.f32.mrb[0].mxu0
      %v4577 = vadd.f32 0.0, %v4576
      %v4578 = vpop.f32.mrb[0].mxu0
      %v4579 = vpop.f32.mrb[0].mxu0
      %v4580 = vadd.f32 0.0, %v4579
      %v4581 = vpop.f32.mrb[0].mxu0
      %4582 = vmatprep.mubr.bf16.mxu0 0
      %4583 = vmatmul.mubr.bf16.gmra.mrb[0].mxu0 %v4435
      %v4584 = vpop.f32.mrb[0].mxu0
      %v4585 = vadd.f32 0.0, %v4584
      %v4586 = vpop.f32.mrb[0].mxu0
      %v4587 = vpop.f32.mrb[0].mxu0
      %v4588 = vadd.f32 0.0, %v4587
      %v4589 = vpop.f32.mrb[0].mxu0
      %4590 = vmatprep.mubr.bf16.mxu0 0
      %4591 = vmatmul.mubr.bf16.gmra.mrb[0].mxu0 %v4438
      %v4592 = vpop.f32.mrb[0].mxu0
      %v4593 = vadd.f32 0.0, %v4592
      %v4594 = vpop.f32.mrb[0].mxu0
      %v4595 = vpop.f32.mrb[0].mxu0
      %v4596 = vadd.f32 0.0, %v4595
      %v4597 = vpop.f32.mrb[0].mxu0
      %4598 = vmatprep.mubr.bf16.mxu0 0
      %4599 = vmatmul.mubr.bf16.gmra.mrb[0].mxu0 %v4441
      %v4600 = vpop.f32.mrb[0].mxu0
      %v4601 = vadd.f32 0.0, %v4600
      %v4602 = vpop.f32.mrb[0].mxu0
      %v4603 = vpop.f32.mrb[0].mxu0
      %v4604 = vadd.f32 0.0, %v4603
      %v4605 = vpop.f32.mrb[0].mxu0
      %4606 = vdwg.mxu0
      %v4607 = vadd.f32 %v4195, %v4481
      %v4608 = vadd.f32 %v4196, %v4484
      %v4609 = vadd.f32 %v4197, %v4489
      %v4610 = vadd.f32 %v4198, %v4492
      %v4611 = vadd.f32 %v4199, %v4497
      %v4612 = vadd.f32 %v4200, %v4500
      %v4613 = vadd.f32 %v4201, %v4505
      %v4614 = vadd.f32 %v4202, %v4508
      %v4615 = vadd.f32 %v4203, %v4513
      %v4616 = vadd.f32 %v4204, %v4516
      %v4617 = vadd.f32 %v4205, %v4521
      %v4618 = vadd.f32 %v4206, %v4524
      %v4619 = vadd.f32 %v4207, %v4529
      %v4620 = vadd.f32 %v4208, %v4532
      %v4621 = vadd.f32 %v4209, %v4537
      %v4622 = vadd.f32 %v4210, %v4540
      %v4623 = vadd.f32 %v4211, %v4545
      %v4624 = vadd.f32 %v4212, %v4548
      %v4625 = vadd.f32 %v4213, %v4553
      %v4626 = vadd.f32 %v4214, %v4556
      %v4627 = vadd.f32 %v4215, %v4561
      %v4628 = vadd.f32 %v4216, %v4564
      %v4629 = vadd.f32 %v4217, %v4569
      %v4630 = vadd.f32 %v4218, %v4572
      %v4631 = vadd.f32 %v4219, %v4577
      %v4632 = vadd.f32 %v4220, %v4580
      %v4633 = vadd.f32 %v4221, %v4585
      %v4634 = vadd.f32 %v4222, %v4588
      %v4635 = vadd.f32 %v4223, %v4593
      %v4636 = vadd.f32 %v4224, %v4596
      %v4637 = vadd.f32 %v4225, %v4601
      %v4638 = vadd.f32 %v4226, %v4604
      %v4639 = vld [vmem:[%s226] sm:$0x1]
      %v4641 = vlaneseq
      %v4642 = vshrl.u32 %v4641, 7
      %v4643 = vsub.s32 0, %v4642
      %v4644 = vrot.slane %v4639, %v4643
      %v4646 = vadd.f32 %v4607, %v4644
      %v4647 = vadd.f32 %v4608, %v4644
      %v4648 = vadd.f32 %v4609, %v4644
      %v4649 = vadd.f32 %v4610, %v4644
      %v4650 = vadd.f32 %v4611, %v4644
      %v4651 = vadd.f32 %v4612, %v4644
      %v4652 = vadd.f32 %v4613, %v4644
      %v4653 = vadd.f32 %v4614, %v4644
      %v4654 = vadd.f32 %v4615, %v4644
      %v4655 = vadd.f32 %v4616, %v4644
      %v4656 = vadd.f32 %v4617, %v4644
      %v4657 = vadd.f32 %v4618, %v4644
      %v4658 = vadd.f32 %v4619, %v4644
      %v4659 = vadd.f32 %v4620, %v4644
      %v4660 = vadd.f32 %v4621, %v4644
      %v4661 = vadd.f32 %v4622, %v4644
      %v4662 = vadd.f32 %v4623, %v4644
      %v4663 = vadd.f32 %v4624, %v4644
      %v4664 = vadd.f32 %v4625, %v4644
      %v4665 = vadd.f32 %v4626, %v4644
      %v4666 = vadd.f32 %v4627, %v4644
      %v4667 = vadd.f32 %v4628, %v4644
      %v4668 = vadd.f32 %v4629, %v4644
      %v4669 = vadd.f32 %v4630, %v4644
      %v4670 = vadd.f32 %v4631, %v4644
      %v4671 = vadd.f32 %v4632, %v4644
      %v4672 = vadd.f32 %v4633, %v4644
      %v4673 = vadd.f32 %v4634, %v4644
      %v4674 = vadd.f32 %v4635, %v4644
      %v4675 = vadd.f32 %v4636, %v4644
      %v4676 = vadd.f32 %v4637, %v4644
      %v4677 = vadd.f32 %v4638, %v4644
      %v4678 = vmax.f32 %v4646, 0.0
      %v4679 = vmax.f32 %v4647, 0.0
      %v4680 = vmax.f32 %v4648, 0.0
      %v4681 = vmax.f32 %v4649, 0.0
      %v4682 = vmax.f32 %v4650, 0.0
      %v4683 = vmax.f32 %v4651, 0.0
      %v4684 = vmax.f32 %v4652, 0.0
      %v4685 = vmax.f32 %v4653, 0.0
      %v4686 = vmax.f32 %v4654, 0.0
      %v4687 = vmax.f32 %v4655, 0.0
      %v4688 = vmax.f32 %v4656, 0.0
      %v4689 = vmax.f32 %v4657, 0.0
      %v4690 = vmax.f32 %v4658, 0.0
      %v4691 = vmax.f32 %v4659, 0.0
      %v4692 = vmax.f32 %v4660, 0.0
      %v4693 = vmax.f32 %v4661, 0.0
      %v4694 = vmax.f32 %v4662, 0.0
      %v4695 = vmax.f32 %v4663, 0.0
      %v4696 = vmax.f32 %v4664, 0.0
      %v4697 = vmax.f32 %v4665, 0.0
      %v4698 = vmax.f32 %v4666, 0.0
      %v4699 = vmax.f32 %v4667, 0.0
      %v4700 = vmax.f32 %v4668, 0.0
      %v4701 = vmax.f32 %v4669, 0.0
      %v4702 = vmax.f32 %v4670, 0.0
      %v4703 = vmax.f32 %v4671, 0.0
      %v4704 = vmax.f32 %v4672, 0.0
      %v4705 = vmax.f32 %v4673, 0.0
      %v4706 = vmax.f32 %v4674, 0.0
      %v4707 = vmax.f32 %v4675, 0.0
      %v4708 = vmax.f32 %v4676, 0.0
      %v4709 = vmax.f32 %v4677, 0.0
      %v4710 = vpack.c.bf16 %v4679, %v4678
      %v4711 = vpack.c.bf16 %v4681, %v4680
      %v4712 = vpack.c.bf16 %v4683, %v4682
      %v4713 = vpack.c.bf16 %v4685, %v4684
      %v4714 = vpack.c.bf16 %v4687, %v4686
      %v4715 = vpack.c.bf16 %v4689, %v4688
      %v4716 = vpack.c.bf16 %v4691, %v4690
      %v4717 = vpack.c.bf16 %v4693, %v4692
      %v4718 = vpack.c.bf16 %v4695, %v4694
      %v4719 = vpack.c.bf16 %v4697, %v4696
      %v4720 = vpack.c.bf16 %v4699, %v4698
      %v4721 = vpack.c.bf16 %v4701, %v4700
      %v4722 = vpack.c.bf16 %v4703, %v4702
      %v4723 = vpack.c.bf16 %v4705, %v4704
      %v4724 = vpack.c.bf16 %v4707, %v4706
      %v4725 = vpack.c.bf16 %v4709, %v4708
      %v4742 = vunpack.c.l.b16 %v4710
      %v4743 = vunpack.c.h.b16 %v4710
      %v4744 = vunpack.c.l.b16 %v4711
      %v4745 = vunpack.c.h.b16 %v4711
      %v4746 = vunpack.c.l.b16 %v4712
      %v4747 = vunpack.c.h.b16 %v4712
      %v4748 = vunpack.c.l.b16 %v4713
      %v4749 = vunpack.c.h.b16 %v4713
      %v4750 = vunpack.c.l.b16 %v4714
      %v4751 = vunpack.c.h.b16 %v4714
      %v4752 = vunpack.c.l.b16 %v4715
      %v4753 = vunpack.c.h.b16 %v4715
      %v4754 = vunpack.c.l.b16 %v4716
      %v4755 = vunpack.c.h.b16 %v4716
      %v4756 = vunpack.c.l.b16 %v4717
      %v4757 = vunpack.c.h.b16 %v4717
      %v4758 = vunpack.c.l.b16 %v4718
      %v4759 = vunpack.c.h.b16 %v4718
      %v4760 = vunpack.c.l.b16 %v4719
      %v4761 = vunpack.c.h.b16 %v4719
      %v4762 = vunpack.c.l.b16 %v4720
      %v4763 = vunpack.c.h.b16 %v4720
      %v4764 = vunpack.c.l.b16 %v4721
      %v4765 = vunpack.c.h.b16 %v4721
      %v4766 = vunpack.c.l.b16 %v4722
      %v4767 = vunpack.c.h.b16 %v4722
      %v4768 = vunpack.c.l.b16 %v4723
      %v4769 = vunpack.c.h.b16 %v4723
      %v4770 = vunpack.c.l.b16 %v4724
      %v4771 = vunpack.c.h.b16 %v4724
      %v4772 = vunpack.c.l.b16 %v4725
      %v4773 = vunpack.c.h.b16 %v4725
      %v4774 = vpack.c.b16 %v4742, %v4742
      %v4775 = vpack.c.b16 %v4743, %v4743
      %v4776 = vpack.c.b16 %v4744, %v4744
      %v4777 = vpack.c.b16 %v4745, %v4745
      %v4778 = vpack.c.b16 %v4746, %v4746
      %v4779 = vpack.c.b16 %v4747, %v4747
      %v4780 = vpack.c.b16 %v4748, %v4748
      %v4781 = vpack.c.b16 %v4749, %v4749
      %v4782 = vpack.c.b16 %v4750, %v4750
      %v4783 = vpack.c.b16 %v4751, %v4751
      %v4784 = vpack.c.b16 %v4752, %v4752
      %v4785 = vpack.c.b16 %v4753, %v4753
      %v4786 = vpack.c.b16 %v4754, %v4754
      %v4787 = vpack.c.b16 %v4755, %v4755
      %v4788 = vpack.c.b16 %v4756, %v4756
      %v4789 = vpack.c.b16 %v4757, %v4757
      %v4790 = vpack.c.b16 %v4758, %v4758
      %v4791 = vpack.c.b16 %v4759, %v4759
      %v4792 = vpack.c.b16 %v4760, %v4760
      %v4793 = vpack.c.b16 %v4761, %v4761
      %v4794 = vpack.c.b16 %v4762, %v4762
      %v4795 = vpack.c.b16 %v4763, %v4763
      %v4796 = vpack.c.b16 %v4764, %v4764
      %v4797 = vpack.c.b16 %v4765, %v4765
      %v4798 = vpack.c.b16 %v4766, %v4766
      %v4799 = vpack.c.b16 %v4767, %v4767
      %v4800 = vpack.c.b16 %v4768, %v4768
      %v4801 = vpack.c.b16 %v4769, %v4769
      %v4802 = vpack.c.b16 %v4770, %v4770
      %v4803 = vpack.c.b16 %v4771, %v4771
      %v4804 = vpack.c.b16 %v4772, %v4772
      %v4805 = vpack.c.b16 %v4773, %v4773
      %vm4838 = vcmask 519168
      %4839 = vst.msk [vmem:[%s238] sm:$0xf] %vm4838, %v4774
      %4840 = vst.msk [vmem:[%s238 + $0x4] sm:$0xf] %vm4838, %v4775
      %4841 = vst.msk [vmem:[%s238 + $0x8] sm:$0xf] %vm4838, %v4776
      %4842 = vst.msk [vmem:[%s238 + $0xc] sm:$0xf] %vm4838, %v4777
      %4843 = vst.msk [vmem:[%s238 + $0x10] sm:$0xf] %vm4838, %v4778
      %4844 = vst.msk [vmem:[%s238 + $0x14] sm:$0xf] %vm4838, %v4779
      %4845 = vst.msk [vmem:[%s238 + $0x18] sm:$0xf] %vm4838, %v4780
      %4846 = vst.msk [vmem:[%s238 + $0x1c] sm:$0xf] %vm4838, %v4781
      %4847 = vst.msk [vmem:[%s238 + $0x20] sm:$0xf] %vm4838, %v4782
      %4848 = vst.msk [vmem:[%s238 + $0x24] sm:$0xf] %vm4838, %v4783
      %4849 = vst.msk [vmem:[%s238 + $0x28] sm:$0xf] %vm4838, %v4784
      %4850 = vst.msk [vmem:[%s238 + $0x2c] sm:$0xf] %vm4838, %v4785
      %4851 = vst.msk [vmem:[%s238 + $0x30] sm:$0xf] %vm4838, %v4786
      %4852 = vst.msk [vmem:[%s238 + $0x34] sm:$0xf] %vm4838, %v4787
      %4853 = vst.msk [vmem:[%s238 + $0x38] sm:$0xf] %vm4838, %v4788
      %4854 = vst.msk [vmem:[%s238 + $0x3c] sm:$0xf] %vm4838, %v4789
      %4855 = vst.msk [vmem:[%s238 + $0x40] sm:$0xf] %vm4838, %v4790
      %4856 = vst.msk [vmem:[%s238 + $0x44] sm:$0xf] %vm4838, %v4791
      %4857 = vst.msk [vmem:[%s238 + $0x48] sm:$0xf] %vm4838, %v4792
      %4858 = vst.msk [vmem:[%s238 + $0x4c] sm:$0xf] %vm4838, %v4793
      %4859 = vst.msk [vmem:[%s238 + $0x50] sm:$0xf] %vm4838, %v4794
      %4860 = vst.msk [vmem:[%s238 + $0x54] sm:$0xf] %vm4838, %v4795
      %4861 = vst.msk [vmem:[%s238 + $0x58] sm:$0xf] %vm4838, %v4796
      %4862 = vst.msk [vmem:[%s238 + $0x5c] sm:$0xf] %vm4838, %v4797
      %4863 = vst.msk [vmem:[%s238 + $0x60] sm:$0xf] %vm4838, %v4798
      %4864 = vst.msk [vmem:[%s238 + $0x64] sm:$0xf] %vm4838, %v4799
      %4865 = vst.msk [vmem:[%s238 + $0x68] sm:$0xf] %vm4838, %v4800
      %4866 = vst.msk [vmem:[%s238 + $0x6c] sm:$0xf] %vm4838, %v4801
      %4867 = vst.msk [vmem:[%s238 + $0x70] sm:$0xf] %vm4838, %v4802
      %4868 = vst.msk [vmem:[%s238 + $0x74] sm:$0xf] %vm4838, %v4803
      %4869 = vst.msk [vmem:[%s238 + $0x78] sm:$0xf] %vm4838, %v4804
      %4870 = vst.msk [vmem:[%s238 + $0x7c] sm:$0xf] %vm4838, %v4805
      %s4871 = smul.u32 32, %s21
      %p4872 = scmp.lt.s32.totalorder %s19, 1
      %s4873 = scalar_select %p4872, %s19, 1
      %p4874 = scmp.lt.s32.totalorder %s4871, 31
      %s4875 = scalar_select %p4874, %s4871, 31
      %p4876 = scmp.lt.s32.totalorder %s20, 0
      %s4877 = scalar_select %p4876, %s20, 0
      %s4878 = sadd.s32 %s4877, %s4875
      %s4879 = smul.addr %s4873, 32
      %s4880 = sadd.s32 %s4878, %s4879
      %s4881 = smul.addr %s4880, 4
      %s4882 = scalar_lea.vmem %s3, %s4881
      // Predicated region
      $region37: #{tpu_custom_call.1} parent=31 // pred_check
        %p4883 = pneg %p133
      $region38: #{tpu_custom_call.1} parent=31 // pred_check_branch
        %4885 = sbr.rel (%p4883) target = $region40
      $region39: #{tpu_custom_call.1} parent=31 // pred_region
        %s4886 = smul.u32 32, %s21
      $region40: #{tpu_custom_call.1} parent=31 // pred_fallthru
        _
    $region32: #{tpu_custom_call.1} parent=5 // pred_fallthru
      _
    %p4887 = scmp.le.s32.totalorder 2, %s9
    // Predicated region
    $region41: #{tpu_custom_call.1} parent=5 // pred_check
      %p4888 = pneg %p4887
    $region42: #{tpu_custom_call.1} parent=5 // pred_check_branch
      %4890 = sbr.rel (%p4888) target = $region44
    $region43: #{tpu_custom_call.1} parent=5 // pred_region
      %s4891 = ssub.s32 %s9, 2
      // Predicated region
      $region45: #{tpu_custom_call.1} parent=43 // pred_check
        %p4892 = pneg %p139
      $region46: #{tpu_custom_call.1} parent=43 // pred_check_branch
        %4894 = sbr.rel (%p4892) target = $region48
      $region47: #{tpu_custom_call.1} parent=43 // pred_region
        %s4895 = smul.u32 32, %s24
        %p4896 = scmp.lt.s32.totalorder %s22, 1
        %s4897 = scalar_select %p4896, %s22, 1
        %p4898 = scmp.lt.s32.totalorder %s4895, 31
        %s4899 = scalar_select %p4898, %s4895, 31
        %p4900 = scmp.lt.s32.totalorder %s23, 0
        %s4901 = scalar_select %p4900, %s23, 0
        %s4902 = sadd.s32 %s4901, %s4899
        %s4903 = smul.addr %s4897, 32
        %s4904 = sadd.s32 %s4902, %s4903
        %s4905 = smul.addr %s4904, 4
        %s4906 = scalar_lea.vmem %s3, %s4905
      $region48: #{tpu_custom_call.1} parent=43 // pred_fallthru
        _
    $region44: #{tpu_custom_call.1} parent=5 // pred_fallthru
      _
  $region6: #{tpu_custom_call.1} parent=0 // loop_footer
    %s13 = sadd.s32 1, %s9
  $region7: #{tpu_custom_call.1} parent=0 // loop_footer_branch
    %8 = sbr.rel target = $region3
  $region8: #{tpu_custom_call.1} parent=0 // loop_exit
    _

</llo_original>
